<compile_context>
chip_gen: v7x
topology: tpu7x:2x2x1
jax: 0.10.0
libtpu: 0.0.40
codegen_flags: <defaults>
</compile_context>

<pallas_src>
import jax
import jax.numpy as jnp
from jax import lax
from jax.experimental import pallas as pl
from jax.experimental.pallas import tpu as pltpu

# Problem sizes (per bag): N instances, K features, C classes, H = DSMIL query dim (fixed 128).
BAGS, N, K, C, H = 16, 8, 32, 2, 128
BB = 8                      # bags per grid step -> grid=(2,): keeps both v7x TCs busy.
INV_SQRT_H = float(H) ** -0.5

# Column layout of the packed per-bag output slab (lane-dense, width 128).
OUT_W = 128
OFF_CLS = 0          # classes : rows 0..N-1, cols [0, C)
OFF_A = C            # A       : rows 0..N-1, cols [C, 2C)
OFF_PRED = 2 * C     # pred    : row 0,       cols [2C, 3C)
OFF_B = 8            # B       : rows 0..C-1, cols [8, 8+K)

# Layout sanity (review correctness concern): no overlap, everything fits.
assert 3 * C <= OFF_B, "pred columns would overlap B columns"
assert OFF_B + K <= OUT_W, "B columns exceed slab width"
assert C <= N, "B rows must fit inside the N-row slab"
assert BAGS % BB == 0, "bag axis must tile evenly"


def milnet_kernel(x_ref, w1big_ref, wq2_ref, wflat_ref, bpack_ref, out_ref):
    feats3 = x_ref[...]                                   # [BB, N, K]
    feats2 = feats3.reshape(BB * N, K)                    # [BB*N, K]

    # Packed biases (static lane slices).
    b1big = bpack_ref[0:1, :]                             # [1, 2H]  = [bq1 | bi pad]
    bq1 = bpack_ref[0:1, 0:H]                             # [1, H]
    bq2 = bpack_ref[1:2, 0:H]                             # [1, H]
    bfcc = bpack_ref[1:2, H:H + C]                        # [1, C]

    # ---- Fused pass: q-net layer-1 pre-activation (lanes 0:H) + instance classes (lanes H:H+C) ----
    big1 = jnp.dot(feats2, w1big_ref[...],
                   preferred_element_type=jnp.float32) + b1big          # [BB*N, 2H]
    h_feats = jnp.maximum(big1[:, 0:H], 0.0)                            # [BB*N, H]
    classes3 = big1[:, H:H + C].reshape(BB, N, C)                       # [BB, N, C]

    # ---- Critical-instance selection (first argmax per class column, per bag) ----
    row_idx = lax.broadcasted_iota(jnp.int32, (BB, N, C), 1)            # [BB, N, C]
    col_max = jnp.max(classes3, axis=1, keepdims=True)                  # [BB, 1, C]
    sel_idx = jnp.min(jnp.where(classes3 >= col_max, row_idx, N),
                      axis=1, keepdims=True)                            # [BB, 1, C]
    onehot = (row_idx == sel_idx).astype(jnp.float32)                   # [BB, N, C]
    m_feats = jnp.einsum('bnc,bnk->bck', onehot, feats3,
                         preferred_element_type=jnp.float32)            # [BB, C, K]

    # ---- q-net layer 1 for critical instances only (tiny), then shared layer 2 ----
    h_m = jnp.maximum(
        jnp.dot(m_feats.reshape(BB * C, K), w1big_ref[:, 0:H],
                preferred_element_type=jnp.float32) + bq1, 0.0)         # [BB*C, H]
    stacked = jnp.concatenate([h_feats, h_m], axis=0)                   # [BB*(N+C), H] (rows 8-aligned)
    qq = jnp.tanh(jnp.dot(stacked, wq2_ref[...],
                          preferred_element_type=jnp.float32) + bq2)    # [BB*(N+C), H]
    Q = qq[0:BB * N, :].reshape(BB, N, H)                               # [BB, N, H]
    q_max = qq[BB * N:BB * (N + C), :].reshape(BB, C, H)                # [BB, C, H]

    # ---- Attention: A = softmax(Q @ q_max^T / sqrt(H), over instances) ----
    logits = jnp.einsum('bnh,bch->bnc', Q, q_max,
                        preferred_element_type=jnp.float32) * INV_SQRT_H  # [BB, N, C]
    logits = logits - jnp.max(logits, axis=1, keepdims=True)
    e = jnp.exp(logits)
    A = e / jnp.sum(e, axis=1, keepdims=True)                           # exact divide (correctness fix)

    # ---- Bag representation B = A^T @ V (V = feats, passing_v=False) ----
    Bmat = jnp.einsum('bnc,bnk->bck', A, feats3,
                      preferred_element_type=jnp.float32)               # [BB, C, K]

    # ---- Conv1d(C, C, kernel=K): one [BB, C*K] x [C*K, C] matmul ----
    pred = jnp.dot(Bmat.reshape(BB, C * K), wflat_ref[...],
                   preferred_element_type=jnp.float32) + bfcc           # [BB, C]

    # ---- Assemble the lane-dense slab in registers; single unmasked full-width store ----
    row0 = lax.broadcasted_iota(jnp.int32, (BB, N, 1), 1) == 0
    pred_rows = jnp.where(row0, pred[:, None, :], 0.0)                  # [BB, N, C] (pred on row 0)
    b_rows = jnp.concatenate(
        [Bmat, jnp.zeros((BB, N - C, K), jnp.float32)], axis=1)         # [BB, N, K] (B on rows 0..C-1)
    pad_mid = jnp.zeros((BB, N, OFF_B - 3 * C), jnp.float32)
    pad_tail = jnp.zeros((BB, N, OUT_W - OFF_B - K), jnp.float32)
    slab = jnp.concatenate(
        [classes3, A, pred_rows, pad_mid, b_rows, pad_tail], axis=-1)   # [BB, N, OUT_W]
    out_ref[...] = slab


def milnet_forward(x, packed_params):
    """x: [BAGS, N, K]. Returns (classes [BAGS,N,C], pred [BAGS,1,C], A [BAGS,N,C], B [BAGS,C,K])."""
    w1big, wq2, wflat, bpack = packed_params
    slab = pl.pallas_call(
        milnet_kernel,
        grid=(BAGS // BB,),
        in_specs=[
            pl.BlockSpec((BB, N, K), lambda b: (b, 0, 0)),        # BB bags of features per step
            pl.BlockSpec((K, 2 * H), lambda b: (0, 0)),           # [wq1 | wi padded] (shared)
            pl.BlockSpec((H, H), lambda b: (0, 0)),               # wq2
            pl.BlockSpec((C * K, C), lambda b: (0, 0)),           # flattened Conv1d weight
            pl.BlockSpec((2, 2 * H), lambda b: (0, 0)),           # packed biases
        ],
        out_specs=pl.BlockSpec((BB, N, OUT_W), lambda b: (b, 0, 0)),
        out_shape=jax.ShapeDtypeStruct((BAGS, N, OUT_W), jnp.float32),
        compiler_params=pltpu.CompilerParams(
            dimension_semantics=("parallel",)),                   # v7x: one 8-bag step per TC
    )(x, w1big, wq2, wflat, bpack)

    classes = slab[:, :, OFF_CLS:OFF_CLS + C]
    A = slab[:, :, OFF_A:OFF_A + C]
    pred = slab[:, 0:1, OFF_PRED:OFF_PRED + C]
    Bmat = slab[:, 0:C, OFF_B:OFF_B + K]
    return classes, pred, A, Bmat


def make_params(key):
    ks = jax.random.split(key, 8)
    wi = jax.random.normal(ks[0], (K, C), jnp.float32) / jnp.sqrt(K)
    bi = jax.random.normal(ks[1], (1, C), jnp.float32) * 0.01
    wq1 = jax.random.normal(ks[2], (K, H), jnp.float32) / jnp.sqrt(K)
    bq1 = jax.random.normal(ks[3], (1, H), jnp.float32) * 0.01
    wq2 = jax.random.normal(ks[4], (H, H), jnp.float32) / jnp.sqrt(H)
    bq2 = jax.random.normal(ks[5], (1, H), jnp.float32) * 0.01
    wfcc = jax.random.normal(ks[6], (C, C, K), jnp.float32) / jnp.sqrt(C * K)  # Conv1d weight [out, in, k]
    bfcc = jax.random.normal(ks[7], (1, C), jnp.float32) * 0.01
    return (wi, bi, wq1, bq1, wq2, bq2, wfcc, bfcc)


def pack_params(raw):
    """Pack the 8 raw tensors into 4 lane-friendly buffers (wi folded into the q-net layer-1 RHS)."""
    wi, bi, wq1, bq1, wq2, bq2, wfcc, bfcc = raw
    # Fused layer-1 weight: feats @ [wq1 | wi_pad] -> lanes 0:H = q-net preact, lanes H:H+C = classes.
    wi_pad = jnp.pad(wi, ((0, 0), (0, H - C)))
    w1big = jnp.concatenate([wq1, wi_pad], axis=1)                     # [K, 2H]
    # Packed biases: row 0 = [bq1 | bi pad], row 1 = [bq2 | bfcc pad].
    pad = lambda b: jnp.pad(b, ((0, 0), (0, H - b.shape[1])))
    bpack = jnp.concatenate([jnp.concatenate([bq1, pad(bi)], axis=1),
                             jnp.concatenate([bq2, pad(bfcc)], axis=1)], axis=0)  # [2, 2H]
    # Conv1d weight flattened so pred = Bmat.reshape(C*K) @ wflat: wflat[c*K+k, o] = wfcc[o, c, k].
    wflat = jnp.transpose(wfcc, (1, 2, 0)).reshape(C * K, C)           # [C*K, C]
    return w1big, wq2, wflat, bpack


def reference_forward_single(x, raw):
    """Pure-JAX reference for ONE bag (x: [N, K])."""
    wi, bi, wq1, bq1, wq2, bq2, wfcc, bfcc = raw
    feats = x
    classes = feats @ wi + bi
    q = lambda z: jnp.tanh(jnp.maximum(z @ wq1 + bq1, 0.0) @ wq2 + bq2)
    Q = q(feats)
    idx = jnp.argmax(classes, axis=0)                 # m_indices[0, :]
    m_feats = feats[idx]                              # [C, K]
    q_max = q(m_feats)
    A = jax.nn.softmax((Q @ q_max.T) / jnp.sqrt(jnp.float32(H)), axis=0)
    Bm = A.T @ feats
    pred = jnp.einsum("ock,ck->o", wfcc, Bm)[None, :] + bfcc
    return classes, pred, A, Bm


if __name__ == "__main__":
    key = jax.random.PRNGKey(0)
    kx, kp = jax.random.split(key)
    x = jax.random.normal(kx, (BAGS, N, K), jnp.float32)   # BAGS bags of N instances, K features
    raw = make_params(kp)
    packed = pack_params(raw)

    fwd = jax.jit(milnet_forward)
    outs = jax.block_until_ready(fwd(x, packed))

    refs = jax.vmap(lambda xb: reference_forward_single(xb, raw))(x)
    for o, r in zip(outs, refs):
        assert o.shape == r.shape, (o.shape, r.shape)
        assert jnp.allclose(o, r, atol=1e-3, rtol=1e-3), (jnp.max(jnp.abs(o - r)), o, r)

    print("KERNEL_OK")
</pallas_src>

<mosaic_0001>
module attributes {stable_mosaic.version = 11 : i64} {
  func.func @milnet_kernel(%arg0: i32, %arg1: memref<8x8x32xf32, #tpu.memory_space<vmem>>, %arg2: memref<32x256xf32, #tpu.memory_space<vmem>>, %arg3: memref<128x128xf32, #tpu.memory_space<vmem>>, %arg4: memref<64x2xf32, #tpu.memory_space<vmem>>, %arg5: memref<2x256xf32, #tpu.memory_space<vmem>>, %arg6: memref<8x8x128xf32, #tpu.memory_space<vmem>>) attributes {dimension_semantics = [#tpu.dimension_semantics<parallel>], iteration_bounds = array<i64: 2>, scalar_prefetch = 0 : i64, scratch_operands = 0 : i64, tpu.core_type = #tpu.core_type<tc>, window_params = [{transform_indices = @transform_0, window_bounds = array<i64: 8, 8, 32>}, {pipeline_mode = #tpu.pipeline_mode<synchronous>, transform_indices = @transform_1, window_bounds = array<i64: 32, 256>}, {pipeline_mode = #tpu.pipeline_mode<synchronous>, transform_indices = @transform_2, window_bounds = array<i64: 128, 128>}, {pipeline_mode = #tpu.pipeline_mode<synchronous>, transform_indices = @transform_3, window_bounds = array<i64: 64, 2>}, {pipeline_mode = #tpu.pipeline_mode<synchronous>, transform_indices = @transform_4, window_bounds = array<i64: 2, 256>}, {transform_indices = @transform_5, window_bounds = array<i64: 8, 8, 128>}]} {
    %c0 = arith.constant 0 : index
    %c0_0 = arith.constant 0 : index
    %c0_1 = arith.constant 0 : index
    %0 = vector.load %arg1[%c0, %c0_0, %c0_1] : memref<8x8x32xf32, #tpu.memory_space<vmem>>, vector<8x8x32xf32>
    %1 = vector.shape_cast %0 : vector<8x8x32xf32> to vector<64x32xf32>
    %c0_2 = arith.constant 0 : index
    %c0_3 = arith.constant 0 : index
    %2 = vector.load %arg5[%c0_2, %c0_3] : memref<2x256xf32, #tpu.memory_space<vmem>>, vector<1x256xf32>
    %c0_4 = arith.constant 0 : index
    %c0_5 = arith.constant 0 : index
    %3 = vector.load %arg5[%c0_4, %c0_5] : memref<2x256xf32, #tpu.memory_space<vmem>>, vector<1x128xf32>
    %c1 = arith.constant 1 : index
    %c0_6 = arith.constant 0 : index
    %4 = vector.load %arg5[%c1, %c0_6] : memref<2x256xf32, #tpu.memory_space<vmem>>, vector<1x128xf32>
    %c1_7 = arith.constant 1 : index
    %c128 = arith.constant 128 : index
    %5 = vector.load %arg5[%c1_7, %c128] : memref<2x256xf32, #tpu.memory_space<vmem>>, vector<1x2xf32>
    %c0_8 = arith.constant 0 : index
    %c0_9 = arith.constant 0 : index
    %6 = vector.load %arg2[%c0_8, %c0_9] : memref<32x256xf32, #tpu.memory_space<vmem>>, vector<32x256xf32>
    %cst = arith.constant dense<0.000000e+00> : vector<64x256xf32>
    %7 = tpu.matmul %1, %6, %cst {dimension_numbers = #tpu.dot_dimension_numbers<[1], [0], [0], [1], [0, 0, 1, 1], [], []>} : vector<64x32xf32>, vector<32x256xf32>, vector<64x256xf32> -> vector<64x256xf32>
    %8 = vector.broadcast %2 : vector<1x256xf32> to vector<64x256xf32>
    %9 = arith.addf %7, %8 : vector<64x256xf32>
    %10 = vector.extract_strided_slice %9 {offsets = [0, 0], sizes = [64, 128], strides = [1, 1]} : vector<64x256xf32> to vector<64x128xf32>
    %cst_10 = arith.constant 0.000000e+00 : f32
    %11 = vector.broadcast %cst_10 : f32 to vector<64x128xf32>
    %12 = arith.maximumf %10, %11 : vector<64x128xf32>
    %13 = vector.extract_strided_slice %9 {offsets = [0, 128], sizes = [64, 2], strides = [1, 1]} : vector<64x256xf32> to vector<64x2xf32>
    %14 = vector.shape_cast %13 : vector<64x2xf32> to vector<8x8x2xf32>
    %15 = tpu.iota {dimensions = array<i32: 1>} : vector<8x8x2xi32>
    %cst_11 = arith.constant dense<0xFF800000> : vector<8x2xf32>
    %16 = vector.multi_reduction <maximumf>, %14, %cst_11 [1] : vector<8x8x2xf32> to vector<8x2xf32>
    %17 = vector.shape_cast %16 : vector<8x2xf32> to vector<8x1x2xf32>
    %18 = vector.broadcast %17 : vector<8x1x2xf32> to vector<8x8x2xf32>
    %19 = arith.cmpf oge, %14, %18 : vector<8x8x2xf32>
    %c8_i32 = arith.constant 8 : i32
    %20 = vector.broadcast %c8_i32 : i32 to vector<8x8x2xi32>
    %21 = arith.select %19, %15, %20 : vector<8x8x2xi1>, vector<8x8x2xi32>
    %cst_12 = arith.constant dense<2147483647> : vector<8x2xi32>
    %22 = vector.multi_reduction <minsi>, %21, %cst_12 [1] : vector<8x8x2xi32> to vector<8x2xi32>
    %23 = vector.shape_cast %22 : vector<8x2xi32> to vector<8x1x2xi32>
    %24 = vector.broadcast %23 : vector<8x1x2xi32> to vector<8x8x2xi32>
    %25 = arith.cmpi eq, %15, %24 : vector<8x8x2xi32>
    %26 = arith.extui %25 : vector<8x8x2xi1> to vector<8x8x2xi32>
    %27 = arith.sitofp %26 : vector<8x8x2xi32> to vector<8x8x2xf32>
    "tpu.trace_start"() <{level = 10 : i32, message = "bnc,bnk->bck"}> : () -> ()
    %cst_13 = arith.constant dense<0.000000e+00> : vector<8x2x32xf32>
    %28 = tpu.matmul %27, %0, %cst_13 {dimension_numbers = #tpu.dot_dimension_numbers<[1], [1], [2], [2], [0, 0, 0, 2, 1, 2], [0], [0]>} : vector<8x8x2xf32>, vector<8x8x32xf32>, vector<8x2x32xf32> -> vector<8x2x32xf32>
    "tpu.trace_stop"() : () -> ()
    %29 = vector.shape_cast %28 : vector<8x2x32xf32> to vector<16x32xf32>
    %c0_14 = arith.constant 0 : index
    %c0_15 = arith.constant 0 : index
    %30 = vector.load %arg2[%c0_14, %c0_15] : memref<32x256xf32, #tpu.memory_space<vmem>>, vector<32x128xf32>
    %cst_16 = arith.constant dense<0.000000e+00> : vector<16x128xf32>
    %31 = tpu.matmul %29, %30, %cst_16 {dimension_numbers = #tpu.dot_dimension_numbers<[1], [0], [0], [1], [0, 0, 1, 1], [], []>} : vector<16x32xf32>, vector<32x128xf32>, vector<16x128xf32> -> vector<16x128xf32>
    %32 = vector.broadcast %3 : vector<1x128xf32> to vector<16x128xf32>
    %33 = arith.addf %31, %32 : vector<16x128xf32>
    %cst_17 = arith.constant 0.000000e+00 : f32
    %34 = vector.broadcast %cst_17 : f32 to vector<16x128xf32>
    %35 = arith.maximumf %33, %34 : vector<16x128xf32>
    %36 = tpu.concatenate %12, %35 in 0 : vector<64x128xf32>, vector<16x128xf32> -> vector<80x128xf32>
    %c0_18 = arith.constant 0 : index
    %c0_19 = arith.constant 0 : index
    %37 = vector.load %arg3[%c0_18, %c0_19] : memref<128x128xf32, #tpu.memory_space<vmem>>, vector<128x128xf32>
    %cst_20 = arith.constant dense<0.000000e+00> : vector<80x128xf32>
    %38 = tpu.matmul %36, %37, %cst_20 {dimension_numbers = #tpu.dot_dimension_numbers<[1], [0], [0], [1], [0, 0, 1, 1], [], []>} : vector<80x128xf32>, vector<128x128xf32>, vector<80x128xf32> -> vector<80x128xf32>
    %39 = vector.broadcast %4 : vector<1x128xf32> to vector<80x128xf32>
    %40 = arith.addf %38, %39 : vector<80x128xf32>
    %41 = math.tanh %40 : vector<80x128xf32>
    %42 = vector.extract_strided_slice %41 {offsets = [0, 0], sizes = [64, 128], strides = [1, 1]} : vector<80x128xf32> to vector<64x128xf32>
    %43 = vector.shape_cast %42 : vector<64x128xf32> to vector<8x8x128xf32>
    %44 = vector.extract_strided_slice %41 {offsets = [64, 0], sizes = [16, 128], strides = [1, 1]} : vector<80x128xf32> to vector<16x128xf32>
    %45 = vector.shape_cast %44 : vector<16x128xf32> to vector<8x2x128xf32>
    "tpu.trace_start"() <{level = 10 : i32, message = "bnh,bch->bnc"}> : () -> ()
    %cst_21 = arith.constant dense<0.000000e+00> : vector<8x8x2xf32>
    %46 = tpu.matmul %43, %45, %cst_21 {dimension_numbers = #tpu.dot_dimension_numbers<[2], [2], [1], [1], [0, 0, 0, 1, 1, 1], [0], [0]>} : vector<8x8x128xf32>, vector<8x2x128xf32>, vector<8x8x2xf32> -> vector<8x8x2xf32>
    "tpu.trace_stop"() : () -> ()
    %cst_22 = arith.constant 0.0883883461 : f32
    %47 = vector.broadcast %cst_22 : f32 to vector<8x8x2xf32>
    %48 = arith.mulf %46, %47 : vector<8x8x2xf32>
    %cst_23 = arith.constant dense<0xFF800000> : vector<8x2xf32>
    %49 = vector.multi_reduction <maximumf>, %48, %cst_23 [1] : vector<8x8x2xf32> to vector<8x2xf32>
    %50 = vector.shape_cast %49 : vector<8x2xf32> to vector<8x1x2xf32>
    %51 = vector.broadcast %50 : vector<8x1x2xf32> to vector<8x8x2xf32>
    %52 = arith.subf %48, %51 : vector<8x8x2xf32>
    %53 = math.exp %52 : vector<8x8x2xf32>
    %cst_24 = arith.constant dense<0.000000e+00> : vector<8x2xf32>
    %54 = vector.multi_reduction <add>, %53, %cst_24 [1] : vector<8x8x2xf32> to vector<8x2xf32>
    %55 = vector.shape_cast %54 : vector<8x2xf32> to vector<8x1x2xf32>
    %56 = vector.broadcast %55 : vector<8x1x2xf32> to vector<8x8x2xf32>
    %57 = arith.divf %53, %56 : vector<8x8x2xf32>
    "tpu.trace_start"() <{level = 10 : i32, message = "bnc,bnk->bck"}> : () -> ()
    %cst_25 = arith.constant dense<0.000000e+00> : vector<8x2x32xf32>
    %58 = tpu.matmul %57, %0, %cst_25 {dimension_numbers = #tpu.dot_dimension_numbers<[1], [1], [2], [2], [0, 0, 0, 2, 1, 2], [0], [0]>} : vector<8x8x2xf32>, vector<8x8x32xf32>, vector<8x2x32xf32> -> vector<8x2x32xf32>
    "tpu.trace_stop"() : () -> ()
    %59 = vector.shape_cast %58 : vector<8x2x32xf32> to vector<8x64xf32>
    %c0_26 = arith.constant 0 : index
    %c0_27 = arith.constant 0 : index
    %60 = vector.load %arg4[%c0_26, %c0_27] : memref<64x2xf32, #tpu.memory_space<vmem>>, vector<64x2xf32>
    %cst_28 = arith.constant dense<0.000000e+00> : vector<8x2xf32>
    %61 = tpu.matmul %59, %60, %cst_28 {dimension_numbers = #tpu.dot_dimension_numbers<[1], [0], [0], [1], [0, 0, 1, 1], [], []>} : vector<8x64xf32>, vector<64x2xf32>, vector<8x2xf32> -> vector<8x2xf32>
    %62 = vector.broadcast %5 : vector<1x2xf32> to vector<8x2xf32>
    %63 = arith.addf %61, %62 : vector<8x2xf32>
    %64 = tpu.iota {dimensions = array<i32: 1>} : vector<8x8x1xi32>
    %c0_i32 = arith.constant 0 : i32
    %65 = vector.broadcast %c0_i32 : i32 to vector<8x8x1xi32>
    %66 = arith.cmpi eq, %64, %65 : vector<8x8x1xi32>
    %67 = vector.shape_cast %63 : vector<8x2xf32> to vector<8x1x2xf32>
    %cst_29 = arith.constant 0.000000e+00 : f32
    %68 = vector.shape_cast %66 : vector<8x8x1xi1> to vector<8x8x1xi1>
    %69 = vector.broadcast %68 : vector<8x8x1xi1> to vector<8x8x2xi1>
    %70 = vector.shape_cast %67 : vector<8x1x2xf32> to vector<8x1x2xf32>
    %71 = vector.broadcast %70 : vector<8x1x2xf32> to vector<8x8x2xf32>
    %72 = vector.broadcast %cst_29 : f32 to vector<8x8x2xf32>
    %73 = arith.select %69, %71, %72 : vector<8x8x2xi1>, vector<8x8x2xf32>
    %cst_30 = arith.constant 0.000000e+00 : f32
    %74 = vector.broadcast %cst_30 : f32 to vector<8x6x32xf32>
    %75 = tpu.concatenate %58, %74 in 1 : vector<8x2x32xf32>, vector<8x6x32xf32> -> vector<8x8x32xf32>
    %cst_31 = arith.constant 0.000000e+00 : f32
    %76 = vector.broadcast %cst_31 : f32 to vector<8x8x2xf32>
    %cst_32 = arith.constant 0.000000e+00 : f32
    %77 = vector.broadcast %cst_32 : f32 to vector<8x8x88xf32>
    %78 = tpu.concatenate %14, %57, %73, %76, %75, %77 in 2 : vector<8x8x2xf32>, vector<8x8x2xf32>, vector<8x8x2xf32>, vector<8x8x2xf32>, vector<8x8x32xf32>, vector<8x8x88xf32> -> vector<8x8x128xf32>
    %c0_33 = arith.constant 0 : index
    %c0_34 = arith.constant 0 : index
    %c0_35 = arith.constant 0 : index
    %79 = vector.load %arg6[%c0_33, %c0_34, %c0_35] : memref<8x8x128xf32, #tpu.memory_space<vmem>>, vector<8x8x128xf32>
    tpu.vector_store %arg6[%c0_33, %c0_34, %c0_35], %78 {strides = array<i32>} : memref<8x8x128xf32, #tpu.memory_space<vmem>>, vector<8x8x128xf32>,
    return
  }
  func.func @transform_0(%arg0: i32) -> (i32, i32, i32) {
    %c0_i32 = arith.constant 0 : i32
    %c0_i32_0 = arith.constant 0 : i32
    %c0_i32_1 = arith.constant 0 : i32
    return %arg0, %c0_i32, %c0_i32_0 : i32, i32, i32
  }
  func.func @transform_1(%arg0: i32) -> (i32, i32) {
    %c0_i32 = arith.constant 0 : i32
    %c0_i32_0 = arith.constant 0 : i32
    %c0_i32_1 = arith.constant 0 : i32
    return %c0_i32, %c0_i32_0 : i32, i32
  }
  func.func @transform_2(%arg0: i32) -> (i32, i32) {
    %c0_i32 = arith.constant 0 : i32
    %c0_i32_0 = arith.constant 0 : i32
    %c0_i32_1 = arith.constant 0 : i32
    return %c0_i32, %c0_i32_0 : i32, i32
  }
  func.func @transform_3(%arg0: i32) -> (i32, i32) {
    %c0_i32 = arith.constant 0 : i32
    %c0_i32_0 = arith.constant 0 : i32
    %c0_i32_1 = arith.constant 0 : i32
    return %c0_i32, %c0_i32_0 : i32, i32
  }
  func.func @transform_4(%arg0: i32) -> (i32, i32) {
    %c0_i32 = arith.constant 0 : i32
    %c0_i32_0 = arith.constant 0 : i32
    %c0_i32_1 = arith.constant 0 : i32
    return %c0_i32, %c0_i32_0 : i32, i32
  }
  func.func @transform_5(%arg0: i32) -> (i32, i32, i32) {
    %c0_i32 = arith.constant 0 : i32
    %c0_i32_0 = arith.constant 0 : i32
    %c0_i32_1 = arith.constant 0 : i32
    return %arg0, %c0_i32, %c0_i32_0 : i32, i32, i32
  }
}

</mosaic_0001>

<llo_original>
// kernel: milnet_forward.1
$region0: #{milnet_forward.1}
  #allocation0 [shape = 'u32[]', space=smem, size = 0x4, offset = 0x4, fixed_abs, tag = 'smem constant byte address 0x4 - core index']
  #allocation1 [shape = 'u32[144,128]{1,0:T(1,128)}', space=vmem, size = 0x12000, scoped, tag = 'internal scratch']
  %s0 = inlined_call_operand.hbm [shape: f32[16,8,32], index: 0, kind: input, shape index: {}]
  %s1 = inlined_call_operand.vmem [shape: f32[32,256], index: 1, kind: input, shape index: {}]
  %s2 = inlined_call_operand.hbm [shape: f32[128,128], index: 2, kind: input, shape index: {}]
  %s3 = inlined_call_operand.vmem [shape: f32[64,2], index: 3, kind: input, shape index: {}]
  %s4 = inlined_call_operand.vmem [shape: f32[2,256], index: 4, kind: input, shape index: {}]
  %s5 = inlined_call_operand.vmem [shape: f32[16,8,128], index: 5, kind: output, shape index: {}]
  %s6 = sld [smem:[#allocation0]]
  $region61: #{milnet_forward.1} parent=0
    _
  %s8 = ssub.s32 1, %s6
  %s9 = scalar_select 0, %s8, %s6
  $region1: #{milnet_forward.1} parent=0
    #allocation2 [shape = 'u8[65536]{0}', space=vmem, size = 0x10000, scoped, tag = 'input window, operand 0']
    #allocation3 [shape = 's32[2]{0}', space=sflag, size = 0x8, scoped, tag = 'scoped memory for milnet_forward.1']
    #allocation4 [shape = 'u8[65536]{0}', space=vmem, size = 0x10000, scoped, tag = 'input window, operand 2, single buffered']
    #allocation5 [shape = 's32[1]{0}', space=sflag, size = 0x4, scoped, tag = 'scoped memory for milnet_forward.1']
    %10 = vsyncpa [#allocation3], 0
    %s11 = scalar_lea.sflag [#allocation3], 1
    %12 = vsyncpa %s11, 0
    %13 = vsyncpa [#allocation5], 0
    loop: start=0, step=1, limit=4
    $region2: #{milnet_forward.1} parent=1 // loop_pre_header
      _
    $region3: #{milnet_forward.1} parent=1 // loop_header
      %s15 = sphi 0, %s19
      %p16 = scmp.ge.s32.totalorder %s15, 4
      %s25 = sphi 0, %s27
      %s28 = sphi 0, %s25
      %s29 = sphi 0, %s28
      %s45 = sphi 0, %s29
      %s49 = sphi 0, %s49
      %s51 = sphi 0, %s49
      %s52 = sphi 0, %s51
      %s66 = sphi 0, %s52
      %s70 = sphi 0, %s70
      %s72 = sphi 0, %s70
      %s73 = sphi 0, %s72
      %s87 = sphi 0, %s73
      %s91 = sphi 0, %s91
      %s93 = sphi 0, %s91
      %s94 = sphi 0, %s93
      %s108 = sphi 0, %s94
      %s112 = sphi 0, %s112
      %s114 = sphi 0, %s112
      %s115 = sphi 0, %s114
      %s129 = sphi 0, %s115
      %s135 = sphi 0, %s137
      %s138 = sphi 0, %s135
      %s139 = sphi 0, %s138
      %s155 = sphi 0, %s139
    $region4: #{milnet_forward.1} parent=1 // loop_header_branch
      %18 = sbr.rel (%p16) target = $region8
    $region5: #{milnet_forward.1} parent=1 // loop_body
      %s20 = ssub.s32 %s15, 1
      %s21 = ssub.s32 %s15, 2
      %s22 = sadd.s32 %s15, 1
      %s23 = ssub.s32 %s15, %s22
      %p24 = scmp.eq.s32.totalorder %s23, 0
      %s26 = sadd.s32 %s25, 1
      %s27 = scalar_select %p24, %s25, %s26
      %p30 = pneg %p24
      %p31 = scmp.eq.s32.totalorder %s15, 1
      %p32 = por %p30, %p31
      %p33 = scmp.ne.s32.totalorder %s25, %s28
      %p34 = scmp.eq.s32.totalorder %s15, 0
      %p35 = por %p33, %p34
      %p36 = scmp.ne.s32.totalorder %s25, %s28
      %p37 = scmp.eq.s32.totalorder %s20, 1
      %p38 = por %p36, %p37
      %p39 = scmp.ne.s32.totalorder %s28, %s29
      %p40 = scmp.eq.s32.totalorder %s20, 0
      %p41 = por %p39, %p40
      %p42 = scmp.ne.s32.totalorder %s28, %s29
      %p43 = scmp.eq.s32.totalorder %s21, 1
      %p44 = por %p42, %p43
      %p46 = scmp.ne.s32.totalorder %s29, %s45
      %p47 = scmp.eq.s32.totalorder %s21, 0
      %p48 = por %p46, %p47
      %s50 = sadd.s32 %s49, 1
      %p53 = scmp.eq.s32.totalorder %s15, 1
      %p54 = scmp.ne.s32.totalorder %s49, %s51
      %p55 = scmp.eq.s32.totalorder %s15, 0
      %p56 = por %p54, %p55
      %p57 = scmp.ne.s32.totalorder %s49, %s51
      %p58 = scmp.eq.s32.totalorder %s20, 1
      %p59 = por %p57, %p58
      %p60 = scmp.ne.s32.totalorder %s51, %s52
      %p61 = scmp.eq.s32.totalorder %s20, 0
      %p62 = por %p60, %p61
      %p63 = scmp.ne.s32.totalorder %s51, %s52
      %p64 = scmp.eq.s32.totalorder %s21, 1
      %p65 = por %p63, %p64
      %p67 = scmp.ne.s32.totalorder %s52, %s66
      %p68 = scmp.eq.s32.totalorder %s21, 0
      %p69 = por %p67, %p68
      %s71 = sadd.s32 %s70, 1
      %p74 = scmp.eq.s32.totalorder %s15, 1
      %p75 = scmp.ne.s32.totalorder %s70, %s72
      %p76 = scmp.eq.s32.totalorder %s15, 0
      %p77 = por %p75, %p76
      %p78 = scmp.ne.s32.totalorder %s70, %s72
      %p79 = scmp.eq.s32.totalorder %s20, 1
      %p80 = por %p78, %p79
      %p81 = scmp.ne.s32.totalorder %s72, %s73
      %p82 = scmp.eq.s32.totalorder %s20, 0
      %p83 = por %p81, %p82
      %p84 = scmp.ne.s32.totalorder %s72, %s73
      %p85 = scmp.eq.s32.totalorder %s21, 1
      %p86 = por %p84, %p85
      %p88 = scmp.ne.s32.totalorder %s73, %s87
      %p89 = scmp.eq.s32.totalorder %s21, 0
      %p90 = por %p88, %p89
      %s92 = sadd.s32 %s91, 1
      %p95 = scmp.eq.s32.totalorder %s15, 1
      %p96 = scmp.ne.s32.totalorder %s91, %s93
      %p97 = scmp.eq.s32.totalorder %s15, 0
      %p98 = por %p96, %p97
      %p99 = scmp.ne.s32.totalorder %s91, %s93
      %p100 = scmp.eq.s32.totalorder %s20, 1
      %p101 = por %p99, %p100
      %p102 = scmp.ne.s32.totalorder %s93, %s94
      %p103 = scmp.eq.s32.totalorder %s20, 0
      %p104 = por %p102, %p103
      %p105 = scmp.ne.s32.totalorder %s93, %s94
      %p106 = scmp.eq.s32.totalorder %s21, 1
      %p107 = por %p105, %p106
      %p109 = scmp.ne.s32.totalorder %s94, %s108
      %p110 = scmp.eq.s32.totalorder %s21, 0
      %p111 = por %p109, %p110
      %s113 = sadd.s32 %s112, 1
      %p116 = scmp.eq.s32.totalorder %s15, 1
      %p117 = scmp.ne.s32.totalorder %s112, %s114
      %p118 = scmp.eq.s32.totalorder %s15, 0
      %p119 = por %p117, %p118
      %p120 = scmp.ne.s32.totalorder %s112, %s114
      %p121 = scmp.eq.s32.totalorder %s20, 1
      %p122 = por %p120, %p121
      %p123 = scmp.ne.s32.totalorder %s114, %s115
      %p124 = scmp.eq.s32.totalorder %s20, 0
      %p125 = por %p123, %p124
      %p126 = scmp.ne.s32.totalorder %s114, %s115
      %p127 = scmp.eq.s32.totalorder %s21, 1
      %p128 = por %p126, %p127
      %p130 = scmp.ne.s32.totalorder %s115, %s129
      %p131 = scmp.eq.s32.totalorder %s21, 0
      %p132 = por %p130, %p131
      %s133 = ssub.s32 %s15, %s22
      %p134 = scmp.eq.s32.totalorder %s133, 0
      %s136 = sadd.s32 %s135, 1
      %s137 = scalar_select %p134, %s135, %s136
      %p140 = pneg %p134
      %p141 = scmp.eq.s32.totalorder %s15, 1
      %p142 = por %p140, %p141
      %p143 = scmp.ne.s32.totalorder %s135, %s138
      %p144 = scmp.eq.s32.totalorder %s15, 0
      %p145 = por %p143, %p144
      %p146 = scmp.ne.s32.totalorder %s135, %s138
      %p147 = scmp.eq.s32.totalorder %s20, 1
      %p148 = por %p146, %p147
      %p149 = scmp.ne.s32.totalorder %s138, %s139
      %p150 = scmp.eq.s32.totalorder %s20, 0
      %p151 = por %p149, %p150
      %p152 = scmp.ne.s32.totalorder %s138, %s139
      %p153 = scmp.eq.s32.totalorder %s21, 1
      %p154 = por %p152, %p153
      %p156 = scmp.ne.s32.totalorder %s139, %s155
      %p157 = scmp.eq.s32.totalorder %s21, 0
      %p158 = por %p156, %p157
      %p159 = scmp.le.s32.totalorder 1, %s15
      %p160 = scmp.lt.s32.totalorder %s15, 3
      %p161 = pnand %p159, %p160
      %p162 = pneg %p161
      // Predicated region
      $region9: #{milnet_forward.1} parent=5 // pred_check
        _
      $region10: #{milnet_forward.1} parent=5 // pred_check_branch
        %164 = sbr.rel (%p161) target = $region12
      $region11: #{milnet_forward.1} parent=5 // pred_region
        %s165 = ssub.s32 %s15, 1
        // Predicated region
        $region13: #{milnet_forward.1} parent=11 // pred_check
          %p166 = pneg %p62
        $region14: #{milnet_forward.1} parent=11 // pred_check_branch
          %168 = sbr.rel (%p166) target = $region16
        $region15: #{milnet_forward.1} parent=11 // pred_region
          _
        $region16: #{milnet_forward.1} parent=11 // pred_fallthru
          _
        // Predicated region
        $region17: #{milnet_forward.1} parent=11 // pred_check
          %p169 = pneg %p83
        $region18: #{milnet_forward.1} parent=11 // pred_check_branch
          %171 = sbr.rel (%p169) target = $region20
        $region19: #{milnet_forward.1} parent=11 // pred_region
          %s173 = ssub.s32 2048, 2048
          %174 = vsyncadd [#allocation5], %s173
          %s175 = sshll.u32 [#allocation4], 4
          %s176 = int_to_ptr.vmem [resolvable:$true] %s175
          %181 = dma.hbm_to_vmem [thread:$0]  %s2, 2048, %s176, [#allocation5], 128, 128, 8
        $region20: #{milnet_forward.1} parent=11 // pred_fallthru
          _
        // Predicated region
        $region21: #{milnet_forward.1} parent=11 // pred_check
          %p182 = pneg %p104
        $region22: #{milnet_forward.1} parent=11 // pred_check_branch
          %184 = sbr.rel (%p182) target = $region24
        $region23: #{milnet_forward.1} parent=11 // pred_region
          _
        $region24: #{milnet_forward.1} parent=11 // pred_fallthru
          _
        // Predicated region
        $region25: #{milnet_forward.1} parent=11 // pred_check
          %p185 = pneg %p125
        $region26: #{milnet_forward.1} parent=11 // pred_check_branch
          %187 = sbr.rel (%p185) target = $region28
        $region27: #{milnet_forward.1} parent=11 // pred_region
          _
        $region28: #{milnet_forward.1} parent=11 // pred_fallthru
          _
      $region12: #{milnet_forward.1} parent=5 // pred_fallthru
        _
      %p188 = scmp.lt.s32.totalorder %s15, 2
      // Predicated region
      $region29: #{milnet_forward.1} parent=5 // pred_check
        %p189 = pneg %p188
      $region30: #{milnet_forward.1} parent=5 // pred_check_branch
        %191 = sbr.rel (%p189) target = $region32
      $region31: #{milnet_forward.1} parent=5 // pred_region
        // Predicated region
        $region33: #{milnet_forward.1} parent=31 // pred_check
          %p192 = pneg %p35
        $region34: #{milnet_forward.1} parent=31 // pred_check_branch
          %194 = sbr.rel (%p192) target = $region36
        $region35: #{milnet_forward.1} parent=31 // pred_region
          %s195 = sand.u32 %s25, 1
          %s196 = scalar_lea.sflag [#allocation3], %s195
          %s197 = sand.u32 %s25, 1
          %s198 = smul.addr %s197, 64
          %s199 = scalar_lea.vmem [#allocation2], %s198
          %s200 = smul.u32 8, %s15
          %s202 = ssub.s32 1024, 1024
          %203 = vsyncadd %s196, %s202
          %s204 = smul.addr %s200, 128
          %s205 = scalar_lea.hbm %s0, %s204
          %s206 = sshll.u32 %s199, 4
          %s207 = int_to_ptr.vmem [resolvable:$true] %s206
          %212 = dma.hbm_to_vmem [thread:$0]  %s205, 1024, %s207, %s196, 128, 128, 8
        $region36: #{milnet_forward.1} parent=31 // pred_fallthru
          _
      $region32: #{milnet_forward.1} parent=5 // pred_fallthru
        _
      %p213 = scmp.le.s32.totalorder 1, %s15
      %p214 = scmp.lt.s32.totalorder %s15, 3
      %p215 = pnand %p213, %p214
      %p216 = pneg %p215
      // Predicated region
      $region37: #{milnet_forward.1} parent=5 // pred_check
        _
      $region38: #{milnet_forward.1} parent=5 // pred_check_branch
        %218 = sbr.rel (%p215) target = $region40
      $region39: #{milnet_forward.1} parent=5 // pred_region
        %s219 = ssub.s32 %s15, 1
        %s220 = sand.u32 %s28, 1
        %s221 = scalar_lea.sflag [#allocation3], %s220
        %s222 = sand.u32 %s28, 1
        %s223 = smul.addr %s222, 64
        %s224 = scalar_lea.vmem [#allocation2], %s223
        // Predicated region
        $region41: #{milnet_forward.1} parent=39 // pred_check
          %p225 = pneg %p41
        $region42: #{milnet_forward.1} parent=39 // pred_check_branch
          %227 = sbr.rel (%p225) target = $region44
        $region43: #{milnet_forward.1} parent=39 // pred_region
          %228 = dma.done %s221, 1024
        $region44: #{milnet_forward.1} parent=39 // pred_fallthru
          _
        // Predicated region
        $region45: #{milnet_forward.1} parent=39 // pred_check
          %p229 = pneg %p83
        $region46: #{milnet_forward.1} parent=39 // pred_check_branch
          %231 = sbr.rel (%p229) target = $region48
        $region47: #{milnet_forward.1} parent=39 // pred_region
          %232 = dma.done [#allocation5], 2048
        $region48: #{milnet_forward.1} parent=39 // pred_fallthru
          _
        %s233 = sand.u32 %s28, 1
        %s234 = scalar_lea.sflag [#allocation3], %s233
        %s235 = sand.u32 %s28, 1
        %s236 = smul.addr %s235, 64
        %s237 = scalar_lea.vmem [#allocation2], %s236
        %p238 = pneg %p41
        %p239 = pneg %p38
        %p240 = pneg %p62
        %p241 = pneg %p59
        %p242 = pneg %p83
        %p243 = pneg %p80
        %p244 = pneg %p104
        %p245 = pneg %p101
        %p246 = pneg %p125
        %p247 = pneg %p122
        %p248 = pneg %p151
        %p249 = pneg %p148
        %s250 = smul.u32 8, %s20
        %p251 = scmp.lt.s32.totalorder %s250, 15
        %s252 = scalar_select %p251, %s250, 15
        %s253 = smul.addr %s252, 8
        %s254 = scalar_lea.vmem %s5, %s253
        %s255 = smul.u32 8, %s20
        %s256 = smul.u32 8, %s20
        %p257 = scmp.lt.s32.totalorder %s256, 15
        %s258 = scalar_select %p257, %s256, 15
        %s259 = smul.addr %s258, 8
        %s260 = scalar_lea.vmem %s5, %s259
        %s261 = smul.u32 8, %s20
        %v262 = vld [vmem:[%s224] sm:$0xff]
        %v263 = vld [vmem:[%s224 + $0x8] sm:$0xff]
        %v264 = vld [vmem:[%s224 + $0x10] sm:$0xff]
        %v265 = vld [vmem:[%s224 + $0x18] sm:$0xff]
        %v266 = vld [vmem:[%s224 + $0x20] sm:$0xff]
        %v267 = vld [vmem:[%s224 + $0x28] sm:$0xff]
        %v268 = vld [vmem:[%s224 + $0x30] sm:$0xff]
        %v269 = vld [vmem:[%s224 + $0x38] sm:$0xff]
        %v270 = vld [vmem:[%s4] ss:$2 sm:$0x3]
        %v271 = vld [vmem:[%s4] sm:$0x1]
        %v272 = vld [vmem:[%s4 + $0x1] sm:$0x1]
        %v273 = vld [vmem:[%s4 + $0x3] sm:$0x1]
        %v274 = vld [vmem:[%s1] sm:$0xff]
        %v275 = vld [vmem:[%s1 + $0x8] sm:$0xff]
        %v276 = vld [vmem:[%s1 + $0x10] sm:$0xff]
        %v277 = vld [vmem:[%s1 + $0x18] sm:$0xff]
        %v278 = vld [vmem:[%s1 + $0x20] sm:$0xff]
        %v279 = vld [vmem:[%s1 + $0x28] sm:$0xff]
        %v280 = vld [vmem:[%s1 + $0x30] sm:$0xff]
        %v281 = vld [vmem:[%s1 + $0x38] sm:$0xff]
        %v283 = vlaneseq
        %v284 = vshrl.u32 %v283, 7
        %v285 = vsub.s32 0, %v284
        %v286 = vrot.slane %v270, %v285
        %v287 = vlaneseq
        %v288 = vshrl.u32 %v287, 7
        %v289 = vsub.s32 1, %v288
        %v290 = vrot.slane %v270, %v289
        %vm293 = vcmask 261120
        %v295 = vsel %vm293, %v262, 0
        %v298 = vsel %vm293, %v263, 0
        %v301 = vsel %vm293, %v264, 0
        %v304 = vsel %vm293, %v265, 0
        %v307 = vsel %vm293, %v266, 0
        %v310 = vsel %vm293, %v267, 0
        %v313 = vsel %vm293, %v268, 0
        %v316 = vsel %vm293, %v269, 0
        %318 = vmatprep.subr.mxu0 %v275
        %319 = vmatpush1.msra.mxu0 %v274
        %320 = vmatprep.subr.mxu0 %v277
        %321 = vmatpush1.msra.mxu0 %v276
        %322 = vmatprep.subr.mxu0 %v279
        %323 = vmatpush1.msra.mxu0 %v278
        %324 = vmatprep.subr.mxu0 %v281
        %325 = vmatpush1.msra.mxu0 %v280
        %326 = vmatprep.subr.mxu0 0.0
        %327 = vmatpush1.msra.mxu0 0.0
        %328 = vmatprep.subr.mxu0 0.0
        %329 = vmatpush1.msra.mxu0 0.0
        %330 = vmatprep.subr.mxu0 0.0
        %331 = vmatpush1.msra.mxu0 0.0
        %332 = vmatprep.subr.mxu0 0.0
        %333 = vmatpush1.msra.mxu0 0.0
        %334 = vmatprep.subr.mxu0 0.0
        %335 = vmatpush1.msra.mxu0 0.0
        %336 = vmatprep.subr.mxu0 0.0
        %337 = vmatpush1.msra.mxu0 0.0
        %338 = vmatprep.subr.mxu0 0.0
        %339 = vmatpush1.msra.mxu0 0.0
        %340 = vmatprep.subr.mxu0 0.0
        %341 = vmatpush1.msra.mxu0 0.0
        %342 = vmatprep.subr.mxu0 0.0
        %343 = vmatpush1.msra.mxu0 0.0
        %344 = vmatprep.subr.mxu0 0.0
        %345 = vmatpush1.msra.mxu0 0.0
        %346 = vmatprep.subr.mxu0 0.0
        %347 = vmatpush1.msra.mxu0 0.0
        %348 = vmatprep.subr.mxu0 0.0
        %349 = vmatpush1.msra.mxu0 0.0
        %350 = vmatprep.subr.mxu0 0.0
        %351 = vmatpush1.msra.mxu0 0.0
        %352 = vmatprep.subr.mxu0 0.0
        %353 = vmatpush1.msra.mxu0 0.0
        %354 = vmatprep.subr.mxu0 0.0
        %355 = vmatpush1.msra.mxu0 0.0
        %356 = vmatprep.subr.mxu0 0.0
        %357 = vmatpush1.msra.mxu0 0.0
        %358 = vmatprep.subr.mxu0 0.0
        %359 = vmatpush1.msra.mxu0 0.0
        %360 = vmatprep.subr.mxu0 0.0
        %361 = vmatpush1.msra.mxu0 0.0
        %362 = vmatprep.subr.mxu0 0.0
        %363 = vmatpush1.msra.mxu0 0.0
        %364 = vmatprep.subr.mxu0 0.0
        %365 = vmatpush1.msra.mxu0 0.0
        %366 = vmatprep.subr.mxu0 0.0
        %367 = vmatpush1.msra.mxu0 0.0
        %368 = vmatprep.subr.mxu0 0.0
        %369 = vmatpush1.msra.mxu0 0.0
        %370 = vmatprep.subr.mxu0 0.0
        %371 = vmatpush1.msra.mxu0 0.0
        %372 = vmatprep.subr.mxu0 0.0
        %373 = vmatpush1.msra.mxu0 0.0
        %374 = vmatprep.subr.mxu0 0.0
        %375 = vmatpush1.msra.mxu0 0.0
        %376 = vmatprep.subr.mxu0 0.0
        %377 = vmatpush1.msra.mxu0 0.0
        %378 = vmatprep.subr.mxu0 0.0
        %379 = vmatpush1.msra.mxu0 0.0
        %380 = vmatprep.subr.mxu0 0.0
        %381 = vmatpush1.msra.mxu0 0.0
        %382 = vmatprep.mubr.f32.mxu0 0.0
        %383 = vmatmul.mubr.f32.gmra.mrb[0].mxu0 %v295
        %v384 = vpop.f32.mrb[0].mxu0
        %v385 = vadd.f32 %v286, %v384
        %v386 = vpop.f32.mrb[0].mxu0
        %v387 = vadd.f32 %v290, %v386
        %388 = vmatprep.mubr.f32.mxu0 0.0
        %389 = vmatmul.mubr.f32.gmra.mrb[0].mxu0 %v298
        %v390 = vpop.f32.mrb[0].mxu0
        %v391 = vadd.f32 %v286, %v390
        %v392 = vpop.f32.mrb[0].mxu0
        %v393 = vadd.f32 %v290, %v392
        %394 = vmatprep.mubr.f32.mxu0 0.0
        %395 = vmatmul.mubr.f32.gmra.mrb[0].mxu0 %v301
        %v396 = vpop.f32.mrb[0].mxu0
        %v397 = vadd.f32 %v286, %v396
        %v398 = vpop.f32.mrb[0].mxu0
        %v399 = vadd.f32 %v290, %v398
        %400 = vmatprep.mubr.f32.mxu0 0.0
        %401 = vmatmul.mubr.f32.gmra.mrb[0].mxu0 %v304
        %v402 = vpop.f32.mrb[0].mxu0
        %v403 = vadd.f32 %v286, %v402
        %v404 = vpop.f32.mrb[0].mxu0
        %v405 = vadd.f32 %v290, %v404
        %406 = vmatprep.mubr.f32.mxu0 0.0
        %407 = vmatmul.mubr.f32.gmra.mrb[0].mxu0 %v307
        %v408 = vpop.f32.mrb[0].mxu0
        %v409 = vadd.f32 %v286, %v408
        %v410 = vpop.f32.mrb[0].mxu0
        %v411 = vadd.f32 %v290, %v410
        %412 = vmatprep.mubr.f32.mxu0 0.0
        %413 = vmatmul.mubr.f32.gmra.mrb[0].mxu0 %v310
        %v414 = vpop.f32.mrb[0].mxu0
        %v415 = vadd.f32 %v286, %v414
        %v416 = vpop.f32.mrb[0].mxu0
        %v417 = vadd.f32 %v290, %v416
        %418 = vmatprep.mubr.f32.mxu0 0.0
        %419 = vmatmul.mubr.f32.gmra.mrb[0].mxu0 %v313
        %v420 = vpop.f32.mrb[0].mxu0
        %v421 = vadd.f32 %v286, %v420
        %v422 = vpop.f32.mrb[0].mxu0
        %v423 = vadd.f32 %v290, %v422
        %424 = vmatprep.mubr.f32.mxu0 0.0
        %425 = vmatmul.mubr.f32.gmra.mrb[0].mxu0 %v316
        %v426 = vpop.f32.mrb[0].mxu0
        %v427 = vadd.f32 %v286, %v426
        %v428 = vpop.f32.mrb[0].mxu0
        %v429 = vadd.f32 %v290, %v428
        %430 = vdwg.mxu0
        %v431 = vmax.f32 %v385, 0.0
        %v432 = vmax.f32 %v391, 0.0
        %v433 = vmax.f32 %v397, 0.0
        %v434 = vmax.f32 %v403, 0.0
        %v435 = vmax.f32 %v409, 0.0
        %v436 = vmax.f32 %v415, 0.0
        %v437 = vmax.f32 %v421, 0.0
        %v438 = vmax.f32 %v427, 0.0
        %v439 = vlaneseq
        %v440 = vshrl.u32 %v439, 7
        %vm441 = vcmask 15360
        %v442 = vsel %vm441, %v387, -inf
        %v443 = vrot.slane %v442, 4
        %v444 = vmax.f32 %v442, %v443
        %v445 = vrot.slane %v444, 2
        %v446 = vmax.f32 %v444, %v445
        %v447 = vrot.slane %v446, 1
        %v448 = vmax.f32 %v446, %v447
        %v449 = vsel %vm441, %v393, -inf
        %v450 = vrot.slane %v449, 4
        %v451 = vmax.f32 %v449, %v450
        %v452 = vrot.slane %v451, 2
        %v453 = vmax.f32 %v451, %v452
        %v454 = vrot.slane %v453, 1
        %v455 = vmax.f32 %v453, %v454
        %v456 = vsel %vm441, %v399, -inf
        %v457 = vrot.slane %v456, 4
        %v458 = vmax.f32 %v456, %v457
        %v459 = vrot.slane %v458, 2
        %v460 = vmax.f32 %v458, %v459
        %v461 = vrot.slane %v460, 1
        %v462 = vmax.f32 %v460, %v461
        %v463 = vsel %vm441, %v405, -inf
        %v464 = vrot.slane %v463, 4
        %v465 = vmax.f32 %v463, %v464
        %v466 = vrot.slane %v465, 2
        %v467 = vmax.f32 %v465, %v466
        %v468 = vrot.slane %v467, 1
        %v469 = vmax.f32 %v467, %v468
        %v470 = vsel %vm441, %v411, -inf
        %v471 = vrot.slane %v470, 4
        %v472 = vmax.f32 %v470, %v471
        %v473 = vrot.slane %v472, 2
        %v474 = vmax.f32 %v472, %v473
        %v475 = vrot.slane %v474, 1
        %v476 = vmax.f32 %v474, %v475
        %v477 = vsel %vm441, %v417, -inf
        %v478 = vrot.slane %v477, 4
        %v479 = vmax.f32 %v477, %v478
        %v480 = vrot.slane %v479, 2
        %v481 = vmax.f32 %v479, %v480
        %v482 = vrot.slane %v481, 1
        %v483 = vmax.f32 %v481, %v482
        %v484 = vsel %vm441, %v423, -inf
        %v485 = vrot.slane %v484, 4
        %v486 = vmax.f32 %v484, %v485
        %v487 = vrot.slane %v486, 2
        %v488 = vmax.f32 %v486, %v487
        %v489 = vrot.slane %v488, 1
        %v490 = vmax.f32 %v488, %v489
        %v491 = vsel %vm441, %v429, -inf
        %v492 = vrot.slane %v491, 4
        %v493 = vmax.f32 %v491, %v492
        %v494 = vrot.slane %v493, 2
        %v495 = vmax.f32 %v493, %v494
        %v496 = vrot.slane %v495, 1
        %v497 = vmax.f32 %v495, %v496
        %vm498 = vcmp.ge.f32.partialorder %v387, %v448
        %vm499 = vcmp.ge.f32.partialorder %v393, %v455
        %vm500 = vcmp.ge.f32.partialorder %v399, %v462
        %vm501 = vcmp.ge.f32.partialorder %v405, %v469
        %vm502 = vcmp.ge.f32.partialorder %v411, %v476
        %vm503 = vcmp.ge.f32.partialorder %v417, %v483
        %vm504 = vcmp.ge.f32.partialorder %v423, %v490
        %vm505 = vcmp.ge.f32.partialorder %v429, %v497
        %v506 = vsel %vm498, %v440, 8
        %v507 = vsel %vm499, %v440, 8
        %v508 = vsel %vm500, %v440, 8
        %v509 = vsel %vm501, %v440, 8
        %v510 = vsel %vm502, %v440, 8
        %v511 = vsel %vm503, %v440, 8
        %v512 = vsel %vm504, %v440, 8
        %v513 = vsel %vm505, %v440, 8
        %v514 = vsel %vm441, %v506, 2147483647
        %v515 = vrot.slane %v514, 4
        %vm516 = vcmp.lt.s32.totalorder %v514, %v515
        %v517 = vsel %vm516, %v514, %v515
        %v518 = vrot.slane %v517, 2
        %vm519 = vcmp.lt.s32.totalorder %v517, %v518
        %v520 = vsel %vm519, %v517, %v518
        %v521 = vrot.slane %v520, 1
        %vm522 = vcmp.lt.s32.totalorder %v520, %v521
        %v523 = vsel %vm522, %v520, %v521
        %v524 = vsel %vm441, %v507, 2147483647
        %v525 = vrot.slane %v524, 4
        %vm526 = vcmp.lt.s32.totalorder %v524, %v525
        %v527 = vsel %vm526, %v524, %v525
        %v528 = vrot.slane %v527, 2
        %vm529 = vcmp.lt.s32.totalorder %v527, %v528
        %v530 = vsel %vm529, %v527, %v528
        %v531 = vrot.slane %v530, 1
        %vm532 = vcmp.lt.s32.totalorder %v530, %v531
        %v533 = vsel %vm532, %v530, %v531
        %v534 = vsel %vm441, %v508, 2147483647
        %v535 = vrot.slane %v534, 4
        %vm536 = vcmp.lt.s32.totalorder %v534, %v535
        %v537 = vsel %vm536, %v534, %v535
        %v538 = vrot.slane %v537, 2
        %vm539 = vcmp.lt.s32.totalorder %v537, %v538
        %v540 = vsel %vm539, %v537, %v538
        %v541 = vrot.slane %v540, 1
        %vm542 = vcmp.lt.s32.totalorder %v540, %v541
        %v543 = vsel %vm542, %v540, %v541
        %v544 = vsel %vm441, %v509, 2147483647
        %v545 = vrot.slane %v544, 4
        %vm546 = vcmp.lt.s32.totalorder %v544, %v545
        %v547 = vsel %vm546, %v544, %v545
        %v548 = vrot.slane %v547, 2
        %vm549 = vcmp.lt.s32.totalorder %v547, %v548
        %v550 = vsel %vm549, %v547, %v548
        %v551 = vrot.slane %v550, 1
        %vm552 = vcmp.lt.s32.totalorder %v550, %v551
        %v553 = vsel %vm552, %v550, %v551
        %v554 = vsel %vm441, %v510, 2147483647
        %v555 = vrot.slane %v554, 4
        %vm556 = vcmp.lt.s32.totalorder %v554, %v555
        %v557 = vsel %vm556, %v554, %v555
        %v558 = vrot.slane %v557, 2
        %vm559 = vcmp.lt.s32.totalorder %v557, %v558
        %v560 = vsel %vm559, %v557, %v558
        %v561 = vrot.slane %v560, 1
        %vm562 = vcmp.lt.s32.totalorder %v560, %v561
        %v563 = vsel %vm562, %v560, %v561
        %v564 = vsel %vm441, %v511, 2147483647
        %v565 = vrot.slane %v564, 4
        %vm566 = vcmp.lt.s32.totalorder %v564, %v565
        %v567 = vsel %vm566, %v564, %v565
        %v568 = vrot.slane %v567, 2
        %vm569 = vcmp.lt.s32.totalorder %v567, %v568
        %v570 = vsel %vm569, %v567, %v568
        %v571 = vrot.slane %v570, 1
        %vm572 = vcmp.lt.s32.totalorder %v570, %v571
        %v573 = vsel %vm572, %v570, %v571
        %v574 = vsel %vm441, %v512, 2147483647
        %v575 = vrot.slane %v574, 4
        %vm576 = vcmp.lt.s32.totalorder %v574, %v575
        %v577 = vsel %vm576, %v574, %v575
        %v578 = vrot.slane %v577, 2
        %vm579 = vcmp.lt.s32.totalorder %v577, %v578
        %v580 = vsel %vm579, %v577, %v578
        %v581 = vrot.slane %v580, 1
        %vm582 = vcmp.lt.s32.totalorder %v580, %v581
        %v583 = vsel %vm582, %v580, %v581
        %v584 = vsel %vm441, %v513, 2147483647
        %v585 = vrot.slane %v584, 4
        %vm586 = vcmp.lt.s32.totalorder %v584, %v585
        %v587 = vsel %vm586, %v584, %v585
        %v588 = vrot.slane %v587, 2
        %vm589 = vcmp.lt.s32.totalorder %v587, %v588
        %v590 = vsel %vm589, %v587, %v588
        %v591 = vrot.slane %v590, 1
        %vm592 = vcmp.lt.s32.totalorder %v590, %v591
        %v593 = vsel %vm592, %v590, %v591
        %vm594 = vcmp.eq.s32.totalorder %v440, %v523
        %vm595 = vcmp.eq.s32.totalorder %v440, %v533
        %vm596 = vcmp.eq.s32.totalorder %v440, %v543
        %vm597 = vcmp.eq.s32.totalorder %v440, %v553
        %vm598 = vcmp.eq.s32.totalorder %v440, %v563
        %vm599 = vcmp.eq.s32.totalorder %v440, %v573
        %vm600 = vcmp.eq.s32.totalorder %v440, %v583
        %vm601 = vcmp.eq.s32.totalorder %v440, %v593
        %v602 = vsel %vm594, 1, 0
        %v603 = vsel %vm595, 1, 0
        %v604 = vsel %vm596, 1, 0
        %v605 = vsel %vm597, 1, 0
        %v606 = vsel %vm598, 1, 0
        %v607 = vsel %vm599, 1, 0
        %v608 = vsel %vm600, 1, 0
        %v609 = vsel %vm601, 1, 0
        %v610 = vcvt.s32.f32 %v602
        %v611 = vcvt.s32.f32 %v603
        %v612 = vcvt.s32.f32 %v604
        %v613 = vcvt.s32.f32 %v605
        %v614 = vcvt.s32.f32 %v606
        %v615 = vcvt.s32.f32 %v607
        %v616 = vcvt.s32.f32 %v608
        %v617 = vcvt.s32.f32 %v609
        %618 = vxpose.xlu0.b32.start [1/16] %v610, 128
        %619 = vxpose.xlu0.b32.cont [2/16] 0.0, 128
        %620 = vxpose.xlu0.b32.cont [3/16] 0.0, 128
        %621 = vxpose.xlu0.b32.cont [4/16] 0.0, 128
        %622 = vxpose.xlu0.b32.cont [5/16] 0.0, 128
        %623 = vxpose.xlu0.b32.cont [6/16] 0.0, 128
        %624 = vxpose.xlu0.b32.cont [7/16] 0.0, 128
        %625 = vxpose.xlu0.b32.cont [8/16] 0.0, 128
        %626 = vxpose.xlu0.b32.cont [9/16] 0.0, 128
        %627 = vxpose.xlu0.b32.cont [10/16] 0.0, 128
        %628 = vxpose.xlu0.b32.cont [11/16] 0.0, 128
        %629 = vxpose.xlu0.b32.cont [12/16] 0.0, 128
        %630 = vxpose.xlu0.b32.cont [13/16] 0.0, 128
        %631 = vxpose.xlu0.b32.cont [14/16] 0.0, 128
        %632 = vxpose.xlu0.b32.cont [15/16] 0.0, 128
        %633 = vxpose.xlu0.b32.end [16/16] 0.0, 128
        %v634 = vpop.trf.xlu0
        %v635 = vpop.trf.xlu0
        %v636 = vpop.trf.xlu0
        %v637 = vpop.trf.xlu0
        %v638 = vpop.trf.xlu0
        %v639 = vpop.trf.xlu0
        %v640 = vpop.trf.xlu0
        %v641 = vpop.trf.xlu0
        %v642 = vpop.trf.xlu0
        %v643 = vpop.trf.xlu0
        %v644 = vpop.trf.xlu0
        %v645 = vpop.trf.xlu0
        %v646 = vpop.trf.xlu0
        %v647 = vpop.trf.xlu0
        %v648 = vpop.trf.xlu0
        %v649 = vpop.trf.xlu0
        %vm650 = vcmask 64512
        %v652 = vsel %vm650, %v634, 0
        %654 = vmatprep.subr.mxu0 0.0
        %655 = vmatpush1.msra.mxu0 %v262
        %656 = vmatprep.subr.mxu0 0.0
        %657 = vmatpush1.msra.mxu0 0.0
        %658 = vmatprep.subr.mxu0 0.0
        %659 = vmatpush1.msra.mxu0 0.0
        %660 = vmatprep.subr.mxu0 0.0
        %661 = vmatpush1.msra.mxu0 0.0
        %662 = vmatprep.subr.mxu0 0.0
        %663 = vmatpush1.msra.mxu0 0.0
        %664 = vmatprep.subr.mxu0 0.0
        %665 = vmatpush1.msra.mxu0 0.0
        %666 = vmatprep.subr.mxu0 0.0
        %667 = vmatpush1.msra.mxu0 0.0
        %668 = vmatprep.subr.mxu0 0.0
        %669 = vmatpush1.msra.mxu0 0.0
        %670 = vmatprep.subr.mxu0 0.0
        %671 = vmatpush1.msra.mxu0 0.0
        %672 = vmatprep.subr.mxu0 0.0
        %673 = vmatpush1.msra.mxu0 0.0
        %674 = vmatprep.subr.mxu0 0.0
        %675 = vmatpush1.msra.mxu0 0.0
        %676 = vmatprep.subr.mxu0 0.0
        %677 = vmatpush1.msra.mxu0 0.0
        %678 = vmatprep.subr.mxu0 0.0
        %679 = vmatpush1.msra.mxu0 0.0
        %680 = vmatprep.subr.mxu0 0.0
        %681 = vmatpush1.msra.mxu0 0.0
        %682 = vmatprep.subr.mxu0 0.0
        %683 = vmatpush1.msra.mxu0 0.0
        %684 = vmatprep.subr.mxu0 0.0
        %685 = vmatpush1.msra.mxu0 0.0
        %686 = vmatprep.subr.mxu0 0.0
        %687 = vmatpush1.msra.mxu0 0.0
        %688 = vmatprep.subr.mxu0 0.0
        %689 = vmatpush1.msra.mxu0 0.0
        %690 = vmatprep.subr.mxu0 0.0
        %691 = vmatpush1.msra.mxu0 0.0
        %692 = vmatprep.subr.mxu0 0.0
        %693 = vmatpush1.msra.mxu0 0.0
        %694 = vmatprep.subr.mxu0 0.0
        %695 = vmatpush1.msra.mxu0 0.0
        %696 = vmatprep.subr.mxu0 0.0
        %697 = vmatpush1.msra.mxu0 0.0
        %698 = vmatprep.subr.mxu0 0.0
        %699 = vmatpush1.msra.mxu0 0.0
        %700 = vmatprep.subr.mxu0 0.0
        %701 = vmatpush1.msra.mxu0 0.0
        %702 = vmatprep.subr.mxu0 0.0
        %703 = vmatpush1.msra.mxu0 0.0
        %704 = vmatprep.subr.mxu0 0.0
        %705 = vmatpush1.msra.mxu0 0.0
        %706 = vmatprep.subr.mxu0 0.0
        %707 = vmatpush1.msra.mxu0 0.0
        %708 = vmatprep.subr.mxu0 0.0
        %709 = vmatpush1.msra.mxu0 0.0
        %710 = vmatprep.subr.mxu0 0.0
        %711 = vmatpush1.msra.mxu0 0.0
        %712 = vmatprep.subr.mxu0 0.0
        %713 = vmatpush1.msra.mxu0 0.0
        %714 = vmatprep.subr.mxu0 0.0
        %715 = vmatpush1.msra.mxu0 0.0
        %716 = vmatprep.subr.mxu0 0.0
        %717 = vmatpush1.msra.mxu0 0.0
        %718 = vmatprep.mubr.f32.mxu0 0.0
        %719 = vmatmul.mubr.f32.gmra.mrb[0].mxu0 %v652
        %v720 = vpop.f32.mrb[0].mxu0
        %v721 = vadd.f32 0.0, %v720
        %v722 = vpop.f32.mrb[0].mxu0
        %723 = vdwg.mxu0
        %724 = vxpose.xlu0.b32.start [1/16] %v611, 128
        %725 = vxpose.xlu0.b32.cont [2/16] 0.0, 128
        %726 = vxpose.xlu0.b32.cont [3/16] 0.0, 128
        %727 = vxpose.xlu0.b32.cont [4/16] 0.0, 128
        %728 = vxpose.xlu0.b32.cont [5/16] 0.0, 128
        %729 = vxpose.xlu0.b32.cont [6/16] 0.0, 128
        %730 = vxpose.xlu0.b32.cont [7/16] 0.0, 128
        %731 = vxpose.xlu0.b32.cont [8/16] 0.0, 128
        %732 = vxpose.xlu0.b32.cont [9/16] 0.0, 128
        %733 = vxpose.xlu0.b32.cont [10/16] 0.0, 128
        %734 = vxpose.xlu0.b32.cont [11/16] 0.0, 128
        %735 = vxpose.xlu0.b32.cont [12/16] 0.0, 128
        %736 = vxpose.xlu0.b32.cont [13/16] 0.0, 128
        %737 = vxpose.xlu0.b32.cont [14/16] 0.0, 128
        %738 = vxpose.xlu0.b32.cont [15/16] 0.0, 128
        %739 = vxpose.xlu0.b32.end [16/16] 0.0, 128
        %v740 = vpop.trf.xlu0
        %v741 = vpop.trf.xlu0
        %v742 = vpop.trf.xlu0
        %v743 = vpop.trf.xlu0
        %v744 = vpop.trf.xlu0
        %v745 = vpop.trf.xlu0
        %v746 = vpop.trf.xlu0
        %v747 = vpop.trf.xlu0
        %v748 = vpop.trf.xlu0
        %v749 = vpop.trf.xlu0
        %v750 = vpop.trf.xlu0
        %v751 = vpop.trf.xlu0
        %v752 = vpop.trf.xlu0
        %v753 = vpop.trf.xlu0
        %v754 = vpop.trf.xlu0
        %v755 = vpop.trf.xlu0
        %v757 = vsel %vm650, %v740, 0
        %759 = vmatprep.subr.mxu0 0.0
        %760 = vmatpush1.msra.mxu0 %v263
        %761 = vmatprep.subr.mxu0 0.0
        %762 = vmatpush1.msra.mxu0 0.0
        %763 = vmatprep.subr.mxu0 0.0
        %764 = vmatpush1.msra.mxu0 0.0
        %765 = vmatprep.subr.mxu0 0.0
        %766 = vmatpush1.msra.mxu0 0.0
        %767 = vmatprep.subr.mxu0 0.0
        %768 = vmatpush1.msra.mxu0 0.0
        %769 = vmatprep.subr.mxu0 0.0
        %770 = vmatpush1.msra.mxu0 0.0
        %771 = vmatprep.subr.mxu0 0.0
        %772 = vmatpush1.msra.mxu0 0.0
        %773 = vmatprep.subr.mxu0 0.0
        %774 = vmatpush1.msra.mxu0 0.0
        %775 = vmatprep.subr.mxu0 0.0
        %776 = vmatpush1.msra.mxu0 0.0
        %777 = vmatprep.subr.mxu0 0.0
        %778 = vmatpush1.msra.mxu0 0.0
        %779 = vmatprep.subr.mxu0 0.0
        %780 = vmatpush1.msra.mxu0 0.0
        %781 = vmatprep.subr.mxu0 0.0
        %782 = vmatpush1.msra.mxu0 0.0
        %783 = vmatprep.subr.mxu0 0.0
        %784 = vmatpush1.msra.mxu0 0.0
        %785 = vmatprep.subr.mxu0 0.0
        %786 = vmatpush1.msra.mxu0 0.0
        %787 = vmatprep.subr.mxu0 0.0
        %788 = vmatpush1.msra.mxu0 0.0
        %789 = vmatprep.subr.mxu0 0.0
        %790 = vmatpush1.msra.mxu0 0.0
        %791 = vmatprep.subr.mxu0 0.0
        %792 = vmatpush1.msra.mxu0 0.0
        %793 = vmatprep.subr.mxu0 0.0
        %794 = vmatpush1.msra.mxu0 0.0
        %795 = vmatprep.subr.mxu0 0.0
        %796 = vmatpush1.msra.mxu0 0.0
        %797 = vmatprep.subr.mxu0 0.0
        %798 = vmatpush1.msra.mxu0 0.0
        %799 = vmatprep.subr.mxu0 0.0
        %800 = vmatpush1.msra.mxu0 0.0
        %801 = vmatprep.subr.mxu0 0.0
        %802 = vmatpush1.msra.mxu0 0.0
        %803 = vmatprep.subr.mxu0 0.0
        %804 = vmatpush1.msra.mxu0 0.0
        %805 = vmatprep.subr.mxu0 0.0
        %806 = vmatpush1.msra.mxu0 0.0
        %807 = vmatprep.subr.mxu0 0.0
        %808 = vmatpush1.msra.mxu0 0.0
        %809 = vmatprep.subr.mxu0 0.0
        %810 = vmatpush1.msra.mxu0 0.0
        %811 = vmatprep.subr.mxu0 0.0
        %812 = vmatpush1.msra.mxu0 0.0
        %813 = vmatprep.subr.mxu0 0.0
        %814 = vmatpush1.msra.mxu0 0.0
        %815 = vmatprep.subr.mxu0 0.0
        %816 = vmatpush1.msra.mxu0 0.0
        %817 = vmatprep.subr.mxu0 0.0
        %818 = vmatpush1.msra.mxu0 0.0
        %819 = vmatprep.subr.mxu0 0.0
        %820 = vmatpush1.msra.mxu0 0.0
        %821 = vmatprep.subr.mxu0 0.0
        %822 = vmatpush1.msra.mxu0 0.0
        %823 = vmatprep.mubr.f32.mxu0 0.0
        %824 = vmatmul.mubr.f32.gmra.mrb[0].mxu0 %v757
        %v825 = vpop.f32.mrb[0].mxu0
        %v826 = vadd.f32 0.0, %v825
        %v827 = vpop.f32.mrb[0].mxu0
        %828 = vdwg.mxu0
        %829 = vxpose.xlu0.b32.start [1/16] %v612, 128
        %830 = vxpose.xlu0.b32.cont [2/16] 0.0, 128
        %831 = vxpose.xlu0.b32.cont [3/16] 0.0, 128
        %832 = vxpose.xlu0.b32.cont [4/16] 0.0, 128
        %833 = vxpose.xlu0.b32.cont [5/16] 0.0, 128
        %834 = vxpose.xlu0.b32.cont [6/16] 0.0, 128
        %835 = vxpose.xlu0.b32.cont [7/16] 0.0, 128
        %836 = vxpose.xlu0.b32.cont [8/16] 0.0, 128
        %837 = vxpose.xlu0.b32.cont [9/16] 0.0, 128
        %838 = vxpose.xlu0.b32.cont [10/16] 0.0, 128
        %839 = vxpose.xlu0.b32.cont [11/16] 0.0, 128
        %840 = vxpose.xlu0.b32.cont [12/16] 0.0, 128
        %841 = vxpose.xlu0.b32.cont [13/16] 0.0, 128
        %842 = vxpose.xlu0.b32.cont [14/16] 0.0, 128
        %843 = vxpose.xlu0.b32.cont [15/16] 0.0, 128
        %844 = vxpose.xlu0.b32.end [16/16] 0.0, 128
        %v845 = vpop.trf.xlu0
        %v846 = vpop.trf.xlu0
        %v847 = vpop.trf.xlu0
        %v848 = vpop.trf.xlu0
        %v849 = vpop.trf.xlu0
        %v850 = vpop.trf.xlu0
        %v851 = vpop.trf.xlu0
        %v852 = vpop.trf.xlu0
        %v853 = vpop.trf.xlu0
        %v854 = vpop.trf.xlu0
        %v855 = vpop.trf.xlu0
        %v856 = vpop.trf.xlu0
        %v857 = vpop.trf.xlu0
        %v858 = vpop.trf.xlu0
        %v859 = vpop.trf.xlu0
        %v860 = vpop.trf.xlu0
        %v862 = vsel %vm650, %v845, 0
        %864 = vmatprep.subr.mxu0 0.0
        %865 = vmatpush1.msra.mxu0 %v264
        %866 = vmatprep.subr.mxu0 0.0
        %867 = vmatpush1.msra.mxu0 0.0
        %868 = vmatprep.subr.mxu0 0.0
        %869 = vmatpush1.msra.mxu0 0.0
        %870 = vmatprep.subr.mxu0 0.0
        %871 = vmatpush1.msra.mxu0 0.0
        %872 = vmatprep.subr.mxu0 0.0
        %873 = vmatpush1.msra.mxu0 0.0
        %874 = vmatprep.subr.mxu0 0.0
        %875 = vmatpush1.msra.mxu0 0.0
        %876 = vmatprep.subr.mxu0 0.0
        %877 = vmatpush1.msra.mxu0 0.0
        %878 = vmatprep.subr.mxu0 0.0
        %879 = vmatpush1.msra.mxu0 0.0
        %880 = vmatprep.subr.mxu0 0.0
        %881 = vmatpush1.msra.mxu0 0.0
        %882 = vmatprep.subr.mxu0 0.0
        %883 = vmatpush1.msra.mxu0 0.0
        %884 = vmatprep.subr.mxu0 0.0
        %885 = vmatpush1.msra.mxu0 0.0
        %886 = vmatprep.subr.mxu0 0.0
        %887 = vmatpush1.msra.mxu0 0.0
        %888 = vmatprep.subr.mxu0 0.0
        %889 = vmatpush1.msra.mxu0 0.0
        %890 = vmatprep.subr.mxu0 0.0
        %891 = vmatpush1.msra.mxu0 0.0
        %892 = vmatprep.subr.mxu0 0.0
        %893 = vmatpush1.msra.mxu0 0.0
        %894 = vmatprep.subr.mxu0 0.0
        %895 = vmatpush1.msra.mxu0 0.0
        %896 = vmatprep.subr.mxu0 0.0
        %897 = vmatpush1.msra.mxu0 0.0
        %898 = vmatprep.subr.mxu0 0.0
        %899 = vmatpush1.msra.mxu0 0.0
        %900 = vmatprep.subr.mxu0 0.0
        %901 = vmatpush1.msra.mxu0 0.0
        %902 = vmatprep.subr.mxu0 0.0
        %903 = vmatpush1.msra.mxu0 0.0
        %904 = vmatprep.subr.mxu0 0.0
        %905 = vmatpush1.msra.mxu0 0.0
        %906 = vmatprep.subr.mxu0 0.0
        %907 = vmatpush1.msra.mxu0 0.0
        %908 = vmatprep.subr.mxu0 0.0
        %909 = vmatpush1.msra.mxu0 0.0
        %910 = vmatprep.subr.mxu0 0.0
        %911 = vmatpush1.msra.mxu0 0.0
        %912 = vmatprep.subr.mxu0 0.0
        %913 = vmatpush1.msra.mxu0 0.0
        %914 = vmatprep.subr.mxu0 0.0
        %915 = vmatpush1.msra.mxu0 0.0
        %916 = vmatprep.subr.mxu0 0.0
        %917 = vmatpush1.msra.mxu0 0.0
        %918 = vmatprep.subr.mxu0 0.0
        %919 = vmatpush1.msra.mxu0 0.0
        %920 = vmatprep.subr.mxu0 0.0
        %921 = vmatpush1.msra.mxu0 0.0
        %922 = vmatprep.subr.mxu0 0.0
        %923 = vmatpush1.msra.mxu0 0.0
        %924 = vmatprep.subr.mxu0 0.0
        %925 = vmatpush1.msra.mxu0 0.0
        %926 = vmatprep.subr.mxu0 0.0
        %927 = vmatpush1.msra.mxu0 0.0
        %928 = vmatprep.mubr.f32.mxu0 0.0
        %929 = vmatmul.mubr.f32.gmra.mrb[0].mxu0 %v862
        %v930 = vpop.f32.mrb[0].mxu0
        %v931 = vadd.f32 0.0, %v930
        %v932 = vpop.f32.mrb[0].mxu0
        %933 = vdwg.mxu0
        %934 = vxpose.xlu0.b32.start [1/16] %v613, 128
        %935 = vxpose.xlu0.b32.cont [2/16] 0.0, 128
        %936 = vxpose.xlu0.b32.cont [3/16] 0.0, 128
        %937 = vxpose.xlu0.b32.cont [4/16] 0.0, 128
        %938 = vxpose.xlu0.b32.cont [5/16] 0.0, 128
        %939 = vxpose.xlu0.b32.cont [6/16] 0.0, 128
        %940 = vxpose.xlu0.b32.cont [7/16] 0.0, 128
        %941 = vxpose.xlu0.b32.cont [8/16] 0.0, 128
        %942 = vxpose.xlu0.b32.cont [9/16] 0.0, 128
        %943 = vxpose.xlu0.b32.cont [10/16] 0.0, 128
        %944 = vxpose.xlu0.b32.cont [11/16] 0.0, 128
        %945 = vxpose.xlu0.b32.cont [12/16] 0.0, 128
        %946 = vxpose.xlu0.b32.cont [13/16] 0.0, 128
        %947 = vxpose.xlu0.b32.cont [14/16] 0.0, 128
        %948 = vxpose.xlu0.b32.cont [15/16] 0.0, 128
        %949 = vxpose.xlu0.b32.end [16/16] 0.0, 128
        %v950 = vpop.trf.xlu0
        %v951 = vpop.trf.xlu0
        %v952 = vpop.trf.xlu0
        %v953 = vpop.trf.xlu0
        %v954 = vpop.trf.xlu0
        %v955 = vpop.trf.xlu0
        %v956 = vpop.trf.xlu0
        %v957 = vpop.trf.xlu0
        %v958 = vpop.trf.xlu0
        %v959 = vpop.trf.xlu0
        %v960 = vpop.trf.xlu0
        %v961 = vpop.trf.xlu0
        %v962 = vpop.trf.xlu0
        %v963 = vpop.trf.xlu0
        %v964 = vpop.trf.xlu0
        %v965 = vpop.trf.xlu0
        %v967 = vsel %vm650, %v950, 0
        %969 = vmatprep.subr.mxu0 0.0
        %970 = vmatpush1.msra.mxu0 %v265
        %971 = vmatprep.subr.mxu0 0.0
        %972 = vmatpush1.msra.mxu0 0.0
        %973 = vmatprep.subr.mxu0 0.0
        %974 = vmatpush1.msra.mxu0 0.0
        %975 = vmatprep.subr.mxu0 0.0
        %976 = vmatpush1.msra.mxu0 0.0
        %977 = vmatprep.subr.mxu0 0.0
        %978 = vmatpush1.msra.mxu0 0.0
        %979 = vmatprep.subr.mxu0 0.0
        %980 = vmatpush1.msra.mxu0 0.0
        %981 = vmatprep.subr.mxu0 0.0
        %982 = vmatpush1.msra.mxu0 0.0
        %983 = vmatprep.subr.mxu0 0.0
        %984 = vmatpush1.msra.mxu0 0.0
        %985 = vmatprep.subr.mxu0 0.0
        %986 = vmatpush1.msra.mxu0 0.0
        %987 = vmatprep.subr.mxu0 0.0
        %988 = vmatpush1.msra.mxu0 0.0
        %989 = vmatprep.subr.mxu0 0.0
        %990 = vmatpush1.msra.mxu0 0.0
        %991 = vmatprep.subr.mxu0 0.0
        %992 = vmatpush1.msra.mxu0 0.0
        %993 = vmatprep.subr.mxu0 0.0
        %994 = vmatpush1.msra.mxu0 0.0
        %995 = vmatprep.subr.mxu0 0.0
        %996 = vmatpush1.msra.mxu0 0.0
        %997 = vmatprep.subr.mxu0 0.0
        %998 = vmatpush1.msra.mxu0 0.0
        %999 = vmatprep.subr.mxu0 0.0
        %1000 = vmatpush1.msra.mxu0 0.0
        %1001 = vmatprep.subr.mxu0 0.0
        %1002 = vmatpush1.msra.mxu0 0.0
        %1003 = vmatprep.subr.mxu0 0.0
        %1004 = vmatpush1.msra.mxu0 0.0
        %1005 = vmatprep.subr.mxu0 0.0
        %1006 = vmatpush1.msra.mxu0 0.0
        %1007 = vmatprep.subr.mxu0 0.0
        %1008 = vmatpush1.msra.mxu0 0.0
        %1009 = vmatprep.subr.mxu0 0.0
        %1010 = vmatpush1.msra.mxu0 0.0
        %1011 = vmatprep.subr.mxu0 0.0
        %1012 = vmatpush1.msra.mxu0 0.0
        %1013 = vmatprep.subr.mxu0 0.0
        %1014 = vmatpush1.msra.mxu0 0.0
        %1015 = vmatprep.subr.mxu0 0.0
        %1016 = vmatpush1.msra.mxu0 0.0
        %1017 = vmatprep.subr.mxu0 0.0
        %1018 = vmatpush1.msra.mxu0 0.0
        %1019 = vmatprep.subr.mxu0 0.0
        %1020 = vmatpush1.msra.mxu0 0.0
        %1021 = vmatprep.subr.mxu0 0.0
        %1022 = vmatpush1.msra.mxu0 0.0
        %1023 = vmatprep.subr.mxu0 0.0
        %1024 = vmatpush1.msra.mxu0 0.0
        %1025 = vmatprep.subr.mxu0 0.0
        %1026 = vmatpush1.msra.mxu0 0.0
        %1027 = vmatprep.subr.mxu0 0.0
        %1028 = vmatpush1.msra.mxu0 0.0
        %1029 = vmatprep.subr.mxu0 0.0
        %1030 = vmatpush1.msra.mxu0 0.0
        %1031 = vmatprep.subr.mxu0 0.0
        %1032 = vmatpush1.msra.mxu0 0.0
        %1033 = vmatprep.mubr.f32.mxu0 0.0
        %1034 = vmatmul.mubr.f32.gmra.mrb[0].mxu0 %v967
        %v1035 = vpop.f32.mrb[0].mxu0
        %v1036 = vadd.f32 0.0, %v1035
        %v1037 = vpop.f32.mrb[0].mxu0
        %1038 = vdwg.mxu0
        %1039 = vxpose.xlu0.b32.start [1/16] %v614, 128
        %1040 = vxpose.xlu0.b32.cont [2/16] 0.0, 128
        %1041 = vxpose.xlu0.b32.cont [3/16] 0.0, 128
        %1042 = vxpose.xlu0.b32.cont [4/16] 0.0, 128
        %1043 = vxpose.xlu0.b32.cont [5/16] 0.0, 128
        %1044 = vxpose.xlu0.b32.cont [6/16] 0.0, 128
        %1045 = vxpose.xlu0.b32.cont [7/16] 0.0, 128
        %1046 = vxpose.xlu0.b32.cont [8/16] 0.0, 128
        %1047 = vxpose.xlu0.b32.cont [9/16] 0.0, 128
        %1048 = vxpose.xlu0.b32.cont [10/16] 0.0, 128
        %1049 = vxpose.xlu0.b32.cont [11/16] 0.0, 128
        %1050 = vxpose.xlu0.b32.cont [12/16] 0.0, 128
        %1051 = vxpose.xlu0.b32.cont [13/16] 0.0, 128
        %1052 = vxpose.xlu0.b32.cont [14/16] 0.0, 128
        %1053 = vxpose.xlu0.b32.cont [15/16] 0.0, 128
        %1054 = vxpose.xlu0.b32.end [16/16] 0.0, 128
        %v1055 = vpop.trf.xlu0
        %v1056 = vpop.trf.xlu0
        %v1057 = vpop.trf.xlu0
        %v1058 = vpop.trf.xlu0
        %v1059 = vpop.trf.xlu0
        %v1060 = vpop.trf.xlu0
        %v1061 = vpop.trf.xlu0
        %v1062 = vpop.trf.xlu0
        %v1063 = vpop.trf.xlu0
        %v1064 = vpop.trf.xlu0
        %v1065 = vpop.trf.xlu0
        %v1066 = vpop.trf.xlu0
        %v1067 = vpop.trf.xlu0
        %v1068 = vpop.trf.xlu0
        %v1069 = vpop.trf.xlu0
        %v1070 = vpop.trf.xlu0
        %v1072 = vsel %vm650, %v1055, 0
        %1074 = vmatprep.subr.mxu0 0.0
        %1075 = vmatpush1.msra.mxu0 %v266
        %1076 = vmatprep.subr.mxu0 0.0
        %1077 = vmatpush1.msra.mxu0 0.0
        %1078 = vmatprep.subr.mxu0 0.0
        %1079 = vmatpush1.msra.mxu0 0.0
        %1080 = vmatprep.subr.mxu0 0.0
        %1081 = vmatpush1.msra.mxu0 0.0
        %1082 = vmatprep.subr.mxu0 0.0
        %1083 = vmatpush1.msra.mxu0 0.0
        %1084 = vmatprep.subr.mxu0 0.0
        %1085 = vmatpush1.msra.mxu0 0.0
        %1086 = vmatprep.subr.mxu0 0.0
        %1087 = vmatpush1.msra.mxu0 0.0
        %1088 = vmatprep.subr.mxu0 0.0
        %1089 = vmatpush1.msra.mxu0 0.0
        %1090 = vmatprep.subr.mxu0 0.0
        %1091 = vmatpush1.msra.mxu0 0.0
        %1092 = vmatprep.subr.mxu0 0.0
        %1093 = vmatpush1.msra.mxu0 0.0
        %1094 = vmatprep.subr.mxu0 0.0
        %1095 = vmatpush1.msra.mxu0 0.0
        %1096 = vmatprep.subr.mxu0 0.0
        %1097 = vmatpush1.msra.mxu0 0.0
        %1098 = vmatprep.subr.mxu0 0.0
        %1099 = vmatpush1.msra.mxu0 0.0
        %1100 = vmatprep.subr.mxu0 0.0
        %1101 = vmatpush1.msra.mxu0 0.0
        %1102 = vmatprep.subr.mxu0 0.0
        %1103 = vmatpush1.msra.mxu0 0.0
        %1104 = vmatprep.subr.mxu0 0.0
        %1105 = vmatpush1.msra.mxu0 0.0
        %1106 = vmatprep.subr.mxu0 0.0
        %1107 = vmatpush1.msra.mxu0 0.0
        %1108 = vmatprep.subr.mxu0 0.0
        %1109 = vmatpush1.msra.mxu0 0.0
        %1110 = vmatprep.subr.mxu0 0.0
        %1111 = vmatpush1.msra.mxu0 0.0
        %1112 = vmatprep.subr.mxu0 0.0
        %1113 = vmatpush1.msra.mxu0 0.0
        %1114 = vmatprep.subr.mxu0 0.0
        %1115 = vmatpush1.msra.mxu0 0.0
        %1116 = vmatprep.subr.mxu0 0.0
        %1117 = vmatpush1.msra.mxu0 0.0
        %1118 = vmatprep.subr.mxu0 0.0
        %1119 = vmatpush1.msra.mxu0 0.0
        %1120 = vmatprep.subr.mxu0 0.0
        %1121 = vmatpush1.msra.mxu0 0.0
        %1122 = vmatprep.subr.mxu0 0.0
        %1123 = vmatpush1.msra.mxu0 0.0
        %1124 = vmatprep.subr.mxu0 0.0
        %1125 = vmatpush1.msra.mxu0 0.0
        %1126 = vmatprep.subr.mxu0 0.0
        %1127 = vmatpush1.msra.mxu0 0.0
        %1128 = vmatprep.subr.mxu0 0.0
        %1129 = vmatpush1.msra.mxu0 0.0
        %1130 = vmatprep.subr.mxu0 0.0
        %1131 = vmatpush1.msra.mxu0 0.0
        %1132 = vmatprep.subr.mxu0 0.0
        %1133 = vmatpush1.msra.mxu0 0.0
        %1134 = vmatprep.subr.mxu0 0.0
        %1135 = vmatpush1.msra.mxu0 0.0
        %1136 = vmatprep.subr.mxu0 0.0
        %1137 = vmatpush1.msra.mxu0 0.0
        %1138 = vmatprep.mubr.f32.mxu0 0.0
        %1139 = vmatmul.mubr.f32.gmra.mrb[0].mxu0 %v1072
        %v1140 = vpop.f32.mrb[0].mxu0
        %v1141 = vadd.f32 0.0, %v1140
        %v1142 = vpop.f32.mrb[0].mxu0
        %1143 = vdwg.mxu0
        %1144 = vxpose.xlu0.b32.start [1/16] %v615, 128
        %1145 = vxpose.xlu0.b32.cont [2/16] 0.0, 128
        %1146 = vxpose.xlu0.b32.cont [3/16] 0.0, 128
        %1147 = vxpose.xlu0.b32.cont [4/16] 0.0, 128
        %1148 = vxpose.xlu0.b32.cont [5/16] 0.0, 128
        %1149 = vxpose.xlu0.b32.cont [6/16] 0.0, 128
        %1150 = vxpose.xlu0.b32.cont [7/16] 0.0, 128
        %1151 = vxpose.xlu0.b32.cont [8/16] 0.0, 128
        %1152 = vxpose.xlu0.b32.cont [9/16] 0.0, 128
        %1153 = vxpose.xlu0.b32.cont [10/16] 0.0, 128
        %1154 = vxpose.xlu0.b32.cont [11/16] 0.0, 128
        %1155 = vxpose.xlu0.b32.cont [12/16] 0.0, 128
        %1156 = vxpose.xlu0.b32.cont [13/16] 0.0, 128
        %1157 = vxpose.xlu0.b32.cont [14/16] 0.0, 128
        %1158 = vxpose.xlu0.b32.cont [15/16] 0.0, 128
        %1159 = vxpose.xlu0.b32.end [16/16] 0.0, 128
        %v1160 = vpop.trf.xlu0
        %v1161 = vpop.trf.xlu0
        %v1162 = vpop.trf.xlu0
        %v1163 = vpop.trf.xlu0
        %v1164 = vpop.trf.xlu0
        %v1165 = vpop.trf.xlu0
        %v1166 = vpop.trf.xlu0
        %v1167 = vpop.trf.xlu0
        %v1168 = vpop.trf.xlu0
        %v1169 = vpop.trf.xlu0
        %v1170 = vpop.trf.xlu0
        %v1171 = vpop.trf.xlu0
        %v1172 = vpop.trf.xlu0
        %v1173 = vpop.trf.xlu0
        %v1174 = vpop.trf.xlu0
        %v1175 = vpop.trf.xlu0
        %v1177 = vsel %vm650, %v1160, 0
        %1179 = vmatprep.subr.mxu0 0.0
        %1180 = vmatpush1.msra.mxu0 %v267
        %1181 = vmatprep.subr.mxu0 0.0
        %1182 = vmatpush1.msra.mxu0 0.0
        %1183 = vmatprep.subr.mxu0 0.0
        %1184 = vmatpush1.msra.mxu0 0.0
        %1185 = vmatprep.subr.mxu0 0.0
        %1186 = vmatpush1.msra.mxu0 0.0
        %1187 = vmatprep.subr.mxu0 0.0
        %1188 = vmatpush1.msra.mxu0 0.0
        %1189 = vmatprep.subr.mxu0 0.0
        %1190 = vmatpush1.msra.mxu0 0.0
        %1191 = vmatprep.subr.mxu0 0.0
        %1192 = vmatpush1.msra.mxu0 0.0
        %1193 = vmatprep.subr.mxu0 0.0
        %1194 = vmatpush1.msra.mxu0 0.0
        %1195 = vmatprep.subr.mxu0 0.0
        %1196 = vmatpush1.msra.mxu0 0.0
        %1197 = vmatprep.subr.mxu0 0.0
        %1198 = vmatpush1.msra.mxu0 0.0
        %1199 = vmatprep.subr.mxu0 0.0
        %1200 = vmatpush1.msra.mxu0 0.0
        %1201 = vmatprep.subr.mxu0 0.0
        %1202 = vmatpush1.msra.mxu0 0.0
        %1203 = vmatprep.subr.mxu0 0.0
        %1204 = vmatpush1.msra.mxu0 0.0
        %1205 = vmatprep.subr.mxu0 0.0
        %1206 = vmatpush1.msra.mxu0 0.0
        %1207 = vmatprep.subr.mxu0 0.0
        %1208 = vmatpush1.msra.mxu0 0.0
        %1209 = vmatprep.subr.mxu0 0.0
        %1210 = vmatpush1.msra.mxu0 0.0
        %1211 = vmatprep.subr.mxu0 0.0
        %1212 = vmatpush1.msra.mxu0 0.0
        %1213 = vmatprep.subr.mxu0 0.0
        %1214 = vmatpush1.msra.mxu0 0.0
        %1215 = vmatprep.subr.mxu0 0.0
        %1216 = vmatpush1.msra.mxu0 0.0
        %1217 = vmatprep.subr.mxu0 0.0
        %1218 = vmatpush1.msra.mxu0 0.0
        %1219 = vmatprep.subr.mxu0 0.0
        %1220 = vmatpush1.msra.mxu0 0.0
        %1221 = vmatprep.subr.mxu0 0.0
        %1222 = vmatpush1.msra.mxu0 0.0
        %1223 = vmatprep.subr.mxu0 0.0
        %1224 = vmatpush1.msra.mxu0 0.0
        %1225 = vmatprep.subr.mxu0 0.0
        %1226 = vmatpush1.msra.mxu0 0.0
        %1227 = vmatprep.subr.mxu0 0.0
        %1228 = vmatpush1.msra.mxu0 0.0
        %1229 = vmatprep.subr.mxu0 0.0
        %1230 = vmatpush1.msra.mxu0 0.0
        %1231 = vmatprep.subr.mxu0 0.0
        %1232 = vmatpush1.msra.mxu0 0.0
        %1233 = vmatprep.subr.mxu0 0.0
        %1234 = vmatpush1.msra.mxu0 0.0
        %1235 = vmatprep.subr.mxu0 0.0
        %1236 = vmatpush1.msra.mxu0 0.0
        %1237 = vmatprep.subr.mxu0 0.0
        %1238 = vmatpush1.msra.mxu0 0.0
        %1239 = vmatprep.subr.mxu0 0.0
        %1240 = vmatpush1.msra.mxu0 0.0
        %1241 = vmatprep.subr.mxu0 0.0
        %1242 = vmatpush1.msra.mxu0 0.0
        %1243 = vmatprep.mubr.f32.mxu0 0.0
        %1244 = vmatmul.mubr.f32.gmra.mrb[0].mxu0 %v1177
        %v1245 = vpop.f32.mrb[0].mxu0
        %v1246 = vadd.f32 0.0, %v1245
        %v1247 = vpop.f32.mrb[0].mxu0
        %1248 = vdwg.mxu0
        %1249 = vxpose.xlu0.b32.start [1/16] %v616, 128
        %1250 = vxpose.xlu0.b32.cont [2/16] 0.0, 128
        %1251 = vxpose.xlu0.b32.cont [3/16] 0.0, 128
        %1252 = vxpose.xlu0.b32.cont [4/16] 0.0, 128
        %1253 = vxpose.xlu0.b32.cont [5/16] 0.0, 128
        %1254 = vxpose.xlu0.b32.cont [6/16] 0.0, 128
        %1255 = vxpose.xlu0.b32.cont [7/16] 0.0, 128
        %1256 = vxpose.xlu0.b32.cont [8/16] 0.0, 128
        %1257 = vxpose.xlu0.b32.cont [9/16] 0.0, 128
        %1258 = vxpose.xlu0.b32.cont [10/16] 0.0, 128
        %1259 = vxpose.xlu0.b32.cont [11/16] 0.0, 128
        %1260 = vxpose.xlu0.b32.cont [12/16] 0.0, 128
        %1261 = vxpose.xlu0.b32.cont [13/16] 0.0, 128
        %1262 = vxpose.xlu0.b32.cont [14/16] 0.0, 128
        %1263 = vxpose.xlu0.b32.cont [15/16] 0.0, 128
        %1264 = vxpose.xlu0.b32.end [16/16] 0.0, 128
        %v1265 = vpop.trf.xlu0
        %v1266 = vpop.trf.xlu0
        %v1267 = vpop.trf.xlu0
        %v1268 = vpop.trf.xlu0
        %v1269 = vpop.trf.xlu0
        %v1270 = vpop.trf.xlu0
        %v1271 = vpop.trf.xlu0
        %v1272 = vpop.trf.xlu0
        %v1273 = vpop.trf.xlu0
        %v1274 = vpop.trf.xlu0
        %v1275 = vpop.trf.xlu0
        %v1276 = vpop.trf.xlu0
        %v1277 = vpop.trf.xlu0
        %v1278 = vpop.trf.xlu0
        %v1279 = vpop.trf.xlu0
        %v1280 = vpop.trf.xlu0
        %v1282 = vsel %vm650, %v1265, 0
        %1284 = vmatprep.subr.mxu0 0.0
        %1285 = vmatpush1.msra.mxu0 %v268
        %1286 = vmatprep.subr.mxu0 0.0
        %1287 = vmatpush1.msra.mxu0 0.0
        %1288 = vmatprep.subr.mxu0 0.0
        %1289 = vmatpush1.msra.mxu0 0.0
        %1290 = vmatprep.subr.mxu0 0.0
        %1291 = vmatpush1.msra.mxu0 0.0
        %1292 = vmatprep.subr.mxu0 0.0
        %1293 = vmatpush1.msra.mxu0 0.0
        %1294 = vmatprep.subr.mxu0 0.0
        %1295 = vmatpush1.msra.mxu0 0.0
        %1296 = vmatprep.subr.mxu0 0.0
        %1297 = vmatpush1.msra.mxu0 0.0
        %1298 = vmatprep.subr.mxu0 0.0
        %1299 = vmatpush1.msra.mxu0 0.0
        %1300 = vmatprep.subr.mxu0 0.0
        %1301 = vmatpush1.msra.mxu0 0.0
        %1302 = vmatprep.subr.mxu0 0.0
        %1303 = vmatpush1.msra.mxu0 0.0
        %1304 = vmatprep.subr.mxu0 0.0
        %1305 = vmatpush1.msra.mxu0 0.0
        %1306 = vmatprep.subr.mxu0 0.0
        %1307 = vmatpush1.msra.mxu0 0.0
        %1308 = vmatprep.subr.mxu0 0.0
        %1309 = vmatpush1.msra.mxu0 0.0
        %1310 = vmatprep.subr.mxu0 0.0
        %1311 = vmatpush1.msra.mxu0 0.0
        %1312 = vmatprep.subr.mxu0 0.0
        %1313 = vmatpush1.msra.mxu0 0.0
        %1314 = vmatprep.subr.mxu0 0.0
        %1315 = vmatpush1.msra.mxu0 0.0
        %1316 = vmatprep.subr.mxu0 0.0
        %1317 = vmatpush1.msra.mxu0 0.0
        %1318 = vmatprep.subr.mxu0 0.0
        %1319 = vmatpush1.msra.mxu0 0.0
        %1320 = vmatprep.subr.mxu0 0.0
        %1321 = vmatpush1.msra.mxu0 0.0
        %1322 = vmatprep.subr.mxu0 0.0
        %1323 = vmatpush1.msra.mxu0 0.0
        %1324 = vmatprep.subr.mxu0 0.0
        %1325 = vmatpush1.msra.mxu0 0.0
        %1326 = vmatprep.subr.mxu0 0.0
        %1327 = vmatpush1.msra.mxu0 0.0
        %1328 = vmatprep.subr.mxu0 0.0
        %1329 = vmatpush1.msra.mxu0 0.0
        %1330 = vmatprep.subr.mxu0 0.0
        %1331 = vmatpush1.msra.mxu0 0.0
        %1332 = vmatprep.subr.mxu0 0.0
        %1333 = vmatpush1.msra.mxu0 0.0
        %1334 = vmatprep.subr.mxu0 0.0
        %1335 = vmatpush1.msra.mxu0 0.0
        %1336 = vmatprep.subr.mxu0 0.0
        %1337 = vmatpush1.msra.mxu0 0.0
        %1338 = vmatprep.subr.mxu0 0.0
        %1339 = vmatpush1.msra.mxu0 0.0
        %1340 = vmatprep.subr.mxu0 0.0
        %1341 = vmatpush1.msra.mxu0 0.0
        %1342 = vmatprep.subr.mxu0 0.0
        %1343 = vmatpush1.msra.mxu0 0.0
        %1344 = vmatprep.subr.mxu0 0.0
        %1345 = vmatpush1.msra.mxu0 0.0
        %1346 = vmatprep.subr.mxu0 0.0
        %1347 = vmatpush1.msra.mxu0 0.0
        %1348 = vmatprep.mubr.f32.mxu0 0.0
        %1349 = vmatmul.mubr.f32.gmra.mrb[0].mxu0 %v1282
        %v1350 = vpop.f32.mrb[0].mxu0
        %v1351 = vadd.f32 0.0, %v1350
        %v1352 = vpop.f32.mrb[0].mxu0
        %1353 = vdwg.mxu0
        %1354 = vxpose.xlu0.b32.start [1/16] %v617, 128
        %1355 = vxpose.xlu0.b32.cont [2/16] 0.0, 128
        %1356 = vxpose.xlu0.b32.cont [3/16] 0.0, 128
        %1357 = vxpose.xlu0.b32.cont [4/16] 0.0, 128
        %1358 = vxpose.xlu0.b32.cont [5/16] 0.0, 128
        %1359 = vxpose.xlu0.b32.cont [6/16] 0.0, 128
        %1360 = vxpose.xlu0.b32.cont [7/16] 0.0, 128
        %1361 = vxpose.xlu0.b32.cont [8/16] 0.0, 128
        %1362 = vxpose.xlu0.b32.cont [9/16] 0.0, 128
        %1363 = vxpose.xlu0.b32.cont [10/16] 0.0, 128
        %1364 = vxpose.xlu0.b32.cont [11/16] 0.0, 128
        %1365 = vxpose.xlu0.b32.cont [12/16] 0.0, 128
        %1366 = vxpose.xlu0.b32.cont [13/16] 0.0, 128
        %1367 = vxpose.xlu0.b32.cont [14/16] 0.0, 128
        %1368 = vxpose.xlu0.b32.cont [15/16] 0.0, 128
        %1369 = vxpose.xlu0.b32.end [16/16] 0.0, 128
        %v1370 = vpop.trf.xlu0
        %v1371 = vpop.trf.xlu0
        %v1372 = vpop.trf.xlu0
        %v1373 = vpop.trf.xlu0
        %v1374 = vpop.trf.xlu0
        %v1375 = vpop.trf.xlu0
        %v1376 = vpop.trf.xlu0
        %v1377 = vpop.trf.xlu0
        %v1378 = vpop.trf.xlu0
        %v1379 = vpop.trf.xlu0
        %v1380 = vpop.trf.xlu0
        %v1381 = vpop.trf.xlu0
        %v1382 = vpop.trf.xlu0
        %v1383 = vpop.trf.xlu0
        %v1384 = vpop.trf.xlu0
        %v1385 = vpop.trf.xlu0
        %v1387 = vsel %vm650, %v1370, 0
        %1389 = vmatprep.subr.mxu0 0.0
        %1390 = vmatpush1.msra.mxu0 %v269
        %1391 = vmatprep.subr.mxu0 0.0
        %1392 = vmatpush1.msra.mxu0 0.0
        %1393 = vmatprep.subr.mxu0 0.0
        %1394 = vmatpush1.msra.mxu0 0.0
        %1395 = vmatprep.subr.mxu0 0.0
        %1396 = vmatpush1.msra.mxu0 0.0
        %1397 = vmatprep.subr.mxu0 0.0
        %1398 = vmatpush1.msra.mxu0 0.0
        %1399 = vmatprep.subr.mxu0 0.0
        %1400 = vmatpush1.msra.mxu0 0.0
        %1401 = vmatprep.subr.mxu0 0.0
        %1402 = vmatpush1.msra.mxu0 0.0
        %1403 = vmatprep.subr.mxu0 0.0
        %1404 = vmatpush1.msra.mxu0 0.0
        %1405 = vmatprep.subr.mxu0 0.0
        %1406 = vmatpush1.msra.mxu0 0.0
        %1407 = vmatprep.subr.mxu0 0.0
        %1408 = vmatpush1.msra.mxu0 0.0
        %1409 = vmatprep.subr.mxu0 0.0
        %1410 = vmatpush1.msra.mxu0 0.0
        %1411 = vmatprep.subr.mxu0 0.0
        %1412 = vmatpush1.msra.mxu0 0.0
        %1413 = vmatprep.subr.mxu0 0.0
        %1414 = vmatpush1.msra.mxu0 0.0
        %1415 = vmatprep.subr.mxu0 0.0
        %1416 = vmatpush1.msra.mxu0 0.0
        %1417 = vmatprep.subr.mxu0 0.0
        %1418 = vmatpush1.msra.mxu0 0.0
        %1419 = vmatprep.subr.mxu0 0.0
        %1420 = vmatpush1.msra.mxu0 0.0
        %1421 = vmatprep.subr.mxu0 0.0
        %1422 = vmatpush1.msra.mxu0 0.0
        %1423 = vmatprep.subr.mxu0 0.0
        %1424 = vmatpush1.msra.mxu0 0.0
        %1425 = vmatprep.subr.mxu0 0.0
        %1426 = vmatpush1.msra.mxu0 0.0
        %1427 = vmatprep.subr.mxu0 0.0
        %1428 = vmatpush1.msra.mxu0 0.0
        %1429 = vmatprep.subr.mxu0 0.0
        %1430 = vmatpush1.msra.mxu0 0.0
        %1431 = vmatprep.subr.mxu0 0.0
        %1432 = vmatpush1.msra.mxu0 0.0
        %1433 = vmatprep.subr.mxu0 0.0
        %1434 = vmatpush1.msra.mxu0 0.0
        %1435 = vmatprep.subr.mxu0 0.0
        %1436 = vmatpush1.msra.mxu0 0.0
        %1437 = vmatprep.subr.mxu0 0.0
        %1438 = vmatpush1.msra.mxu0 0.0
        %1439 = vmatprep.subr.mxu0 0.0
        %1440 = vmatpush1.msra.mxu0 0.0
        %1441 = vmatprep.subr.mxu0 0.0
        %1442 = vmatpush1.msra.mxu0 0.0
        %1443 = vmatprep.subr.mxu0 0.0
        %1444 = vmatpush1.msra.mxu0 0.0
        %1445 = vmatprep.subr.mxu0 0.0
        %1446 = vmatpush1.msra.mxu0 0.0
        %1447 = vmatprep.subr.mxu0 0.0
        %1448 = vmatpush1.msra.mxu0 0.0
        %1449 = vmatprep.subr.mxu0 0.0
        %1450 = vmatpush1.msra.mxu0 0.0
        %1451 = vmatprep.subr.mxu0 0.0
        %1452 = vmatpush1.msra.mxu0 0.0
        %1453 = vmatprep.mubr.f32.mxu0 0.0
        %1454 = vmatmul.mubr.f32.gmra.mrb[0].mxu0 %v1387
        %v1455 = vpop.f32.mrb[0].mxu0
        %v1456 = vadd.f32 0.0, %v1455
        %v1457 = vpop.f32.mrb[0].mxu0
        %1458 = vdwg.mxu0
        %v1459 = vld [vmem:[%s1] sm:$0xff]
        %v1460 = vld [vmem:[%s1 + $0x10] sm:$0xff]
        %v1461 = vld [vmem:[%s1 + $0x20] sm:$0xff]
        %v1462 = vld [vmem:[%s1 + $0x30] sm:$0xff]
        %v1463 = vlaneseq
        %v1464 = vshrl.u32 %v1463, 7
        %v1465 = vsub.s32 0, %v1464
        %v1466 = vrot.slane %v271, %v1465
        %v1475 = vcombine.low %v721, %v826
        %v1476 = vcombine.low %v931, %v1036
        %v1478 = vunpack.c.l.s4 1983009808
        %v1479 = vunpack.c.0.s8 %v1478
        %v1480 = vlaneseq
        %v1481 = vshrl.u32 %v1480, 7
        %v1482 = vsub.s32 %v1479, %v1481
        %v1483 = vrot.slane %v1475, %v1482
        %v1485 = vunpack.c.l.s4 1983009808
        %v1486 = vunpack.c.0.s8 %v1485
        %v1487 = vlaneseq
        %v1488 = vshrl.u32 %v1487, 7
        %v1489 = vsub.s32 %v1486, %v1488
        %v1490 = vrot.slane %v1476, %v1489
        %v1491 = vcombine.low %v1483, %v1490
        %v1492 = vcombine.low %v1141, %v1246
        %v1493 = vcombine.low %v1351, %v1456
        %v1495 = vunpack.c.l.s4 1983009808
        %v1496 = vunpack.c.0.s8 %v1495
        %v1497 = vlaneseq
        %v1498 = vshrl.u32 %v1497, 7
        %v1499 = vsub.s32 %v1496, %v1498
        %v1500 = vrot.slane %v1492, %v1499
        %v1502 = vunpack.c.l.s4 1983009808
        %v1503 = vunpack.c.0.s8 %v1502
        %v1504 = vlaneseq
        %v1505 = vshrl.u32 %v1504, 7
        %v1506 = vsub.s32 %v1503, %v1505
        %v1507 = vrot.slane %v1493, %v1506
        %v1508 = vcombine.low %v1500, %v1507
        %v1509 = vsel %vm293, %v1491, 0
        %v1511 = vsel %vm293, %v1508, 0
        %1513 = vmatprep.subr.mxu0 0.0
        %1514 = vmatpush1.msra.mxu0 %v1459
        %1515 = vmatprep.subr.mxu0 0.0
        %1516 = vmatpush1.msra.mxu0 %v1460
        %1517 = vmatprep.subr.mxu0 0.0
        %1518 = vmatpush1.msra.mxu0 %v1461
        %1519 = vmatprep.subr.mxu0 0.0
        %1520 = vmatpush1.msra.mxu0 %v1462
        %1521 = vmatprep.subr.mxu0 0.0
        %1522 = vmatpush1.msra.mxu0 0.0
        %1523 = vmatprep.subr.mxu0 0.0
        %1524 = vmatpush1.msra.mxu0 0.0
        %1525 = vmatprep.subr.mxu0 0.0
        %1526 = vmatpush1.msra.mxu0 0.0
        %1527 = vmatprep.subr.mxu0 0.0
        %1528 = vmatpush1.msra.mxu0 0.0
        %1529 = vmatprep.subr.mxu0 0.0
        %1530 = vmatpush1.msra.mxu0 0.0
        %1531 = vmatprep.subr.mxu0 0.0
        %1532 = vmatpush1.msra.mxu0 0.0
        %1533 = vmatprep.subr.mxu0 0.0
        %1534 = vmatpush1.msra.mxu0 0.0
        %1535 = vmatprep.subr.mxu0 0.0
        %1536 = vmatpush1.msra.mxu0 0.0
        %1537 = vmatprep.subr.mxu0 0.0
        %1538 = vmatpush1.msra.mxu0 0.0
        %1539 = vmatprep.subr.mxu0 0.0
        %1540 = vmatpush1.msra.mxu0 0.0
        %1541 = vmatprep.subr.mxu0 0.0
        %1542 = vmatpush1.msra.mxu0 0.0
        %1543 = vmatprep.subr.mxu0 0.0
        %1544 = vmatpush1.msra.mxu0 0.0
        %1545 = vmatprep.subr.mxu0 0.0
        %1546 = vmatpush1.msra.mxu0 0.0
        %1547 = vmatprep.subr.mxu0 0.0
        %1548 = vmatpush1.msra.mxu0 0.0
        %1549 = vmatprep.subr.mxu0 0.0
        %1550 = vmatpush1.msra.mxu0 0.0
        %1551 = vmatprep.subr.mxu0 0.0
        %1552 = vmatpush1.msra.mxu0 0.0
        %1553 = vmatprep.subr.mxu0 0.0
        %1554 = vmatpush1.msra.mxu0 0.0
        %1555 = vmatprep.subr.mxu0 0.0
        %1556 = vmatpush1.msra.mxu0 0.0
        %1557 = vmatprep.subr.mxu0 0.0
        %1558 = vmatpush1.msra.mxu0 0.0
        %1559 = vmatprep.subr.mxu0 0.0
        %1560 = vmatpush1.msra.mxu0 0.0
        %1561 = vmatprep.subr.mxu0 0.0
        %1562 = vmatpush1.msra.mxu0 0.0
        %1563 = vmatprep.subr.mxu0 0.0
        %1564 = vmatpush1.msra.mxu0 0.0
        %1565 = vmatprep.subr.mxu0 0.0
        %1566 = vmatpush1.msra.mxu0 0.0
        %1567 = vmatprep.subr.mxu0 0.0
        %1568 = vmatpush1.msra.mxu0 0.0
        %1569 = vmatprep.subr.mxu0 0.0
        %1570 = vmatpush1.msra.mxu0 0.0
        %1571 = vmatprep.subr.mxu0 0.0
        %1572 = vmatpush1.msra.mxu0 0.0
        %1573 = vmatprep.subr.mxu0 0.0
        %1574 = vmatpush1.msra.mxu0 0.0
        %1575 = vmatprep.subr.mxu0 0.0
        %1576 = vmatpush1.msra.mxu0 0.0
        %1577 = vmatprep.mubr.f32.mxu0 0.0
        %1578 = vmatmul.mubr.f32.gmra.mrb[0].mxu0 %v1509
        %v1579 = vpop.f32.mrb[0].mxu0
        %v1580 = vadd.f32 %v1466, %v1579
        %v1581 = vpop.f32.mrb[0].mxu0
        %1582 = vmatprep.mubr.f32.mxu0 0.0
        %1583 = vmatmul.mubr.f32.gmra.mrb[0].mxu0 %v1511
        %v1584 = vpop.f32.mrb[0].mxu0
        %v1585 = vadd.f32 %v1466, %v1584
        %v1586 = vpop.f32.mrb[0].mxu0
        %1587 = vdwg.mxu0
        %v1588 = vmax.f32 %v1580, 0.0
        %v1589 = vmax.f32 %v1585, 0.0
        %v1590 = vld [vmem:[#allocation4] sm:$0xff]
        %v1591 = vld [vmem:[#allocation4 + $0x8] sm:$0xff]
        %v1592 = vld [vmem:[#allocation4 + $0x10] sm:$0xff]
        %v1593 = vld [vmem:[#allocation4 + $0x18] sm:$0xff]
        %v1594 = vld [vmem:[#allocation4 + $0x20] sm:$0xff]
        %v1595 = vld [vmem:[#allocation4 + $0x28] sm:$0xff]
        %v1596 = vld [vmem:[#allocation4 + $0x30] sm:$0xff]
        %v1597 = vld [vmem:[#allocation4 + $0x38] sm:$0xff]
        %v1598 = vld [vmem:[#allocation4 + $0x40] sm:$0xff]
        %v1599 = vld [vmem:[#allocation4 + $0x48] sm:$0xff]
        %v1600 = vld [vmem:[#allocation4 + $0x50] sm:$0xff]
        %v1601 = vld [vmem:[#allocation4 + $0x58] sm:$0xff]
        %v1602 = vld [vmem:[#allocation4 + $0x60] sm:$0xff]
        %v1603 = vld [vmem:[#allocation4 + $0x68] sm:$0xff]
        %v1604 = vld [vmem:[#allocation4 + $0x70] sm:$0xff]
        %v1605 = vld [vmem:[#allocation4 + $0x78] sm:$0xff]
        %v1606 = vlaneseq
        %v1607 = vshrl.u32 %v1606, 7
        %v1608 = vsub.s32 0, %v1607
        %v1609 = vrot.slane %v272, %v1608
        %1610 = vmatprep.subr.mxu0 0.0
        %1611 = vmatpush1.msra.mxu0 %v1590
        %1612 = vmatprep.subr.mxu0 0.0
        %1613 = vmatpush1.msra.mxu0 %v1591
        %1614 = vmatprep.subr.mxu0 0.0
        %1615 = vmatpush1.msra.mxu0 %v1592
        %1616 = vmatprep.subr.mxu0 0.0
        %1617 = vmatpush1.msra.mxu0 %v1593
        %1618 = vmatprep.subr.mxu0 0.0
        %1619 = vmatpush1.msra.mxu0 %v1594
        %1620 = vmatprep.subr.mxu0 0.0
        %1621 = vmatpush1.msra.mxu0 %v1595
        %1622 = vmatprep.subr.mxu0 0.0
        %1623 = vmatpush1.msra.mxu0 %v1596
        %1624 = vmatprep.subr.mxu0 0.0
        %1625 = vmatpush1.msra.mxu0 %v1597
        %1626 = vmatprep.subr.mxu0 0.0
        %1627 = vmatpush1.msra.mxu0 %v1598
        %1628 = vmatprep.subr.mxu0 0.0
        %1629 = vmatpush1.msra.mxu0 %v1599
        %1630 = vmatprep.subr.mxu0 0.0
        %1631 = vmatpush1.msra.mxu0 %v1600
        %1632 = vmatprep.subr.mxu0 0.0
        %1633 = vmatpush1.msra.mxu0 %v1601
        %1634 = vmatprep.subr.mxu0 0.0
        %1635 = vmatpush1.msra.mxu0 %v1602
        %1636 = vmatprep.subr.mxu0 0.0
        %1637 = vmatpush1.msra.mxu0 %v1603
        %1638 = vmatprep.subr.mxu0 0.0
        %1639 = vmatpush1.msra.mxu0 %v1604
        %1640 = vmatprep.subr.mxu0 0.0
        %1641 = vmatpush1.msra.mxu0 %v1605
        %1642 = vmatprep.subr.mxu0 0.0
        %1643 = vmatpush1.msra.mxu0 0.0
        %1644 = vmatprep.subr.mxu0 0.0
        %1645 = vmatpush1.msra.mxu0 0.0
        %1646 = vmatprep.subr.mxu0 0.0
        %1647 = vmatpush1.msra.mxu0 0.0
        %1648 = vmatprep.subr.mxu0 0.0
        %1649 = vmatpush1.msra.mxu0 0.0
        %1650 = vmatprep.subr.mxu0 0.0
        %1651 = vmatpush1.msra.mxu0 0.0
        %1652 = vmatprep.subr.mxu0 0.0
        %1653 = vmatpush1.msra.mxu0 0.0
        %1654 = vmatprep.subr.mxu0 0.0
        %1655 = vmatpush1.msra.mxu0 0.0
        %1656 = vmatprep.subr.mxu0 0.0
        %1657 = vmatpush1.msra.mxu0 0.0
        %1658 = vmatprep.subr.mxu0 0.0
        %1659 = vmatpush1.msra.mxu0 0.0
        %1660 = vmatprep.subr.mxu0 0.0
        %1661 = vmatpush1.msra.mxu0 0.0
        %1662 = vmatprep.subr.mxu0 0.0
        %1663 = vmatpush1.msra.mxu0 0.0
        %1664 = vmatprep.subr.mxu0 0.0
        %1665 = vmatpush1.msra.mxu0 0.0
        %1666 = vmatprep.subr.mxu0 0.0
        %1667 = vmatpush1.msra.mxu0 0.0
        %1668 = vmatprep.subr.mxu0 0.0
        %1669 = vmatpush1.msra.mxu0 0.0
        %1670 = vmatprep.subr.mxu0 0.0
        %1671 = vmatpush1.msra.mxu0 0.0
        %1672 = vmatprep.subr.mxu0 0.0
        %1673 = vmatpush1.msra.mxu0 0.0
        %1674 = vmatprep.mubr.f32.mxu0 0.0
        %1675 = vmatmul.mubr.f32.gmra.mrb[0].mxu0 %v431
        %v1676 = vpop.f32.mrb[0].mxu0
        %v1677 = vadd.f32 %v1609, %v1676
        %v1678 = vpop.f32.mrb[0].mxu0
        %1679 = vmatprep.mubr.f32.mxu0 0.0
        %1680 = vmatmul.mubr.f32.gmra.mrb[0].mxu0 %v432
        %v1681 = vpop.f32.mrb[0].mxu0
        %v1682 = vadd.f32 %v1609, %v1681
        %v1683 = vpop.f32.mrb[0].mxu0
        %1684 = vmatprep.mubr.f32.mxu0 0.0
        %1685 = vmatmul.mubr.f32.gmra.mrb[0].mxu0 %v433
        %v1686 = vpop.f32.mrb[0].mxu0
        %v1687 = vadd.f32 %v1609, %v1686
        %v1688 = vpop.f32.mrb[0].mxu0
        %1689 = vmatprep.mubr.f32.mxu0 0.0
        %1690 = vmatmul.mubr.f32.gmra.mrb[0].mxu0 %v434
        %v1691 = vpop.f32.mrb[0].mxu0
        %v1692 = vadd.f32 %v1609, %v1691
        %v1693 = vpop.f32.mrb[0].mxu0
        %1694 = vmatprep.mubr.f32.mxu0 0.0
        %1695 = vmatmul.mubr.f32.gmra.mrb[0].mxu0 %v435
        %v1696 = vpop.f32.mrb[0].mxu0
        %v1697 = vadd.f32 %v1609, %v1696
        %v1698 = vpop.f32.mrb[0].mxu0
        %1699 = vmatprep.mubr.f32.mxu0 0.0
        %1700 = vmatmul.mubr.f32.gmra.mrb[0].mxu0 %v436
        %v1701 = vpop.f32.mrb[0].mxu0
        %v1702 = vadd.f32 %v1609, %v1701
        %v1703 = vpop.f32.mrb[0].mxu0
        %1704 = vmatprep.mubr.f32.mxu0 0.0
        %1705 = vmatmul.mubr.f32.gmra.mrb[0].mxu0 %v437
        %v1706 = vpop.f32.mrb[0].mxu0
        %v1707 = vadd.f32 %v1609, %v1706
        %v1708 = vpop.f32.mrb[0].mxu0
        %1709 = vmatprep.mubr.f32.mxu0 0.0
        %1710 = vmatmul.mubr.f32.gmra.mrb[0].mxu0 %v438
        %v1711 = vpop.f32.mrb[0].mxu0
        %v1712 = vadd.f32 %v1609, %v1711
        %v1713 = vpop.f32.mrb[0].mxu0
        %1714 = vmatprep.mubr.f32.mxu0 0.0
        %1715 = vmatmul.mubr.f32.gmra.mrb[0].mxu0 %v1588
        %v1716 = vpop.f32.mrb[0].mxu0
        %v1717 = vadd.f32 %v1609, %v1716
        %v1718 = vpop.f32.mrb[0].mxu0
        %1719 = vmatprep.mubr.f32.mxu0 0.0
        %1720 = vmatmul.mubr.f32.gmra.mrb[0].mxu0 %v1589
        %v1721 = vpop.f32.mrb[0].mxu0
        %v1722 = vadd.f32 %v1609, %v1721
        %v1723 = vpop.f32.mrb[0].mxu0
        %1724 = vdwg.mxu0
        %v1725 = vtanh.pop %v1677
        %v1726 = vtanh.pop %v1682
        %v1727 = vtanh.pop %v1687
        %v1728 = vtanh.pop %v1692
        %v1729 = vtanh.pop %v1697
        %v1730 = vtanh.pop %v1702
        %v1731 = vtanh.pop %v1707
        %v1732 = vtanh.pop %v1712
        %v1733 = vtanh.pop %v1717
        %v1734 = vtanh.pop %v1722
        %v1737 = vcombine.high %v1733, %v1733
        %v1739 = vunpack.c.l.s4 1983009808
        %v1740 = vunpack.c.0.s8 %v1739
        %v1741 = vlaneseq
        %v1742 = vshrl.u32 %v1741, 7
        %v1743 = vsub.s32 %v1740, %v1742
        %v1744 = vrot.slane %v1733, %v1743
        %v1746 = vunpack.c.l.s4 1983009808
        %v1747 = vunpack.c.0.s8 %v1746
        %v1748 = vlaneseq
        %v1749 = vshrl.u32 %v1748, 7
        %v1750 = vsub.s32 %v1747, %v1749
        %v1751 = vrot.slane %v1737, %v1750
        %v1752 = vcombine.high %v1744, %v1744
        %v1753 = vcombine.high %v1751, %v1751
        %v1754 = vcombine.high %v1734, %v1734
        %v1756 = vunpack.c.l.s4 1983009808
        %v1757 = vunpack.c.0.s8 %v1756
        %v1758 = vlaneseq
        %v1759 = vshrl.u32 %v1758, 7
        %v1760 = vsub.s32 %v1757, %v1759
        %v1761 = vrot.slane %v1734, %v1760
        %v1763 = vunpack.c.l.s4 1983009808
        %v1764 = vunpack.c.0.s8 %v1763
        %v1765 = vlaneseq
        %v1766 = vshrl.u32 %v1765, 7
        %v1767 = vsub.s32 %v1764, %v1766
        %v1768 = vrot.slane %v1754, %v1767
        %v1769 = vcombine.high %v1761, %v1761
        %v1770 = vcombine.high %v1768, %v1768
        %1779 = vmatprep.subr.mxu0 0.0
        %1780 = vmatpush1.xpose.msra.mxu0 %v1744
        %1781 = vmatprep.subr.mxu0 0.0
        %1782 = vmatpush1.xpose.msra.mxu0 0.0
        %1783 = vmatprep.subr.mxu0 0.0
        %1784 = vmatpush1.xpose.msra.mxu0 0.0
        %1785 = vmatprep.subr.mxu0 0.0
        %1786 = vmatpush1.xpose.msra.mxu0 0.0
        %1787 = vmatprep.subr.mxu0 0.0
        %1788 = vmatpush1.xpose.msra.mxu0 0.0
        %1789 = vmatprep.subr.mxu0 0.0
        %1790 = vmatpush1.xpose.msra.mxu0 0.0
        %1791 = vmatprep.subr.mxu0 0.0
        %1792 = vmatpush1.xpose.msra.mxu0 0.0
        %1793 = vmatprep.subr.mxu0 0.0
        %1794 = vmatpush1.xpose.msra.mxu0 0.0
        %1795 = vmatprep.subr.mxu0 0.0
        %1796 = vmatpush1.xpose.msra.mxu0 0.0
        %1797 = vmatprep.subr.mxu0 0.0
        %1798 = vmatpush1.xpose.msra.mxu0 0.0
        %1799 = vmatprep.subr.mxu0 0.0
        %1800 = vmatpush1.xpose.msra.mxu0 0.0
        %1801 = vmatprep.subr.mxu0 0.0
        %1802 = vmatpush1.xpose.msra.mxu0 0.0
        %1803 = vmatprep.subr.mxu0 0.0
        %1804 = vmatpush1.xpose.msra.mxu0 0.0
        %1805 = vmatprep.subr.mxu0 0.0
        %1806 = vmatpush1.xpose.msra.mxu0 0.0
        %1807 = vmatprep.subr.mxu0 0.0
        %1808 = vmatpush1.xpose.msra.mxu0 0.0
        %1809 = vmatprep.subr.mxu0 0.0
        %1810 = vmatpush1.xpose.msra.mxu0 0.0
        %1811 = vmatprep.subr.mxu0 0.0
        %1812 = vmatpush1.xpose.msra.mxu0 0.0
        %1813 = vmatprep.subr.mxu0 0.0
        %1814 = vmatpush1.xpose.msra.mxu0 0.0
        %1815 = vmatprep.subr.mxu0 0.0
        %1816 = vmatpush1.xpose.msra.mxu0 0.0
        %1817 = vmatprep.subr.mxu0 0.0
        %1818 = vmatpush1.xpose.msra.mxu0 0.0
        %1819 = vmatprep.subr.mxu0 0.0
        %1820 = vmatpush1.xpose.msra.mxu0 0.0
        %1821 = vmatprep.subr.mxu0 0.0
        %1822 = vmatpush1.xpose.msra.mxu0 0.0
        %1823 = vmatprep.subr.mxu0 0.0
        %1824 = vmatpush1.xpose.msra.mxu0 0.0
        %1825 = vmatprep.subr.mxu0 0.0
        %1826 = vmatpush1.xpose.msra.mxu0 0.0
        %1827 = vmatprep.subr.mxu0 0.0
        %1828 = vmatpush1.xpose.msra.mxu0 0.0
        %1829 = vmatprep.subr.mxu0 0.0
        %1830 = vmatpush1.xpose.msra.mxu0 0.0
        %1831 = vmatprep.subr.mxu0 0.0
        %1832 = vmatpush1.xpose.msra.mxu0 0.0
        %1833 = vmatprep.subr.mxu0 0.0
        %1834 = vmatpush1.xpose.msra.mxu0 0.0
        %1835 = vmatprep.subr.mxu0 0.0
        %1836 = vmatpush1.xpose.msra.mxu0 0.0
        %1837 = vmatprep.subr.mxu0 0.0
        %1838 = vmatpush1.xpose.msra.mxu0 0.0
        %1839 = vmatprep.subr.mxu0 0.0
        %1840 = vmatpush1.xpose.msra.mxu0 0.0
        %1841 = vmatprep.subr.mxu0 0.0
        %1842 = vmatpush1.xpose.msra.mxu0 0.0
        %1843 = vmatprep.mubr.f32.mxu0 0.0
        %1844 = vmatmul.mubr.f32.gmra.mrb[0].mxu0 %v1725
        %v1845 = vpop.f32.mrb[0].mxu0
        %v1846 = vadd.f32 0.0, %v1845
        %v1847 = vpop.f32.mrb[0].mxu0
        %1848 = vdwg.mxu0
        %1849 = vmatprep.subr.mxu0 0.0
        %1850 = vmatpush1.xpose.msra.mxu0 %v1752
        %1851 = vmatprep.subr.mxu0 0.0
        %1852 = vmatpush1.xpose.msra.mxu0 0.0
        %1853 = vmatprep.subr.mxu0 0.0
        %1854 = vmatpush1.xpose.msra.mxu0 0.0
        %1855 = vmatprep.subr.mxu0 0.0
        %1856 = vmatpush1.xpose.msra.mxu0 0.0
        %1857 = vmatprep.subr.mxu0 0.0
        %1858 = vmatpush1.xpose.msra.mxu0 0.0
        %1859 = vmatprep.subr.mxu0 0.0
        %1860 = vmatpush1.xpose.msra.mxu0 0.0
        %1861 = vmatprep.subr.mxu0 0.0
        %1862 = vmatpush1.xpose.msra.mxu0 0.0
        %1863 = vmatprep.subr.mxu0 0.0
        %1864 = vmatpush1.xpose.msra.mxu0 0.0
        %1865 = vmatprep.subr.mxu0 0.0
        %1866 = vmatpush1.xpose.msra.mxu0 0.0
        %1867 = vmatprep.subr.mxu0 0.0
        %1868 = vmatpush1.xpose.msra.mxu0 0.0
        %1869 = vmatprep.subr.mxu0 0.0
        %1870 = vmatpush1.xpose.msra.mxu0 0.0
        %1871 = vmatprep.subr.mxu0 0.0
        %1872 = vmatpush1.xpose.msra.mxu0 0.0
        %1873 = vmatprep.subr.mxu0 0.0
        %1874 = vmatpush1.xpose.msra.mxu0 0.0
        %1875 = vmatprep.subr.mxu0 0.0
        %1876 = vmatpush1.xpose.msra.mxu0 0.0
        %1877 = vmatprep.subr.mxu0 0.0
        %1878 = vmatpush1.xpose.msra.mxu0 0.0
        %1879 = vmatprep.subr.mxu0 0.0
        %1880 = vmatpush1.xpose.msra.mxu0 0.0
        %1881 = vmatprep.subr.mxu0 0.0
        %1882 = vmatpush1.xpose.msra.mxu0 0.0
        %1883 = vmatprep.subr.mxu0 0.0
        %1884 = vmatpush1.xpose.msra.mxu0 0.0
        %1885 = vmatprep.subr.mxu0 0.0
        %1886 = vmatpush1.xpose.msra.mxu0 0.0
        %1887 = vmatprep.subr.mxu0 0.0
        %1888 = vmatpush1.xpose.msra.mxu0 0.0
        %1889 = vmatprep.subr.mxu0 0.0
        %1890 = vmatpush1.xpose.msra.mxu0 0.0
        %1891 = vmatprep.subr.mxu0 0.0
        %1892 = vmatpush1.xpose.msra.mxu0 0.0
        %1893 = vmatprep.subr.mxu0 0.0
        %1894 = vmatpush1.xpose.msra.mxu0 0.0
        %1895 = vmatprep.subr.mxu0 0.0
        %1896 = vmatpush1.xpose.msra.mxu0 0.0
        %1897 = vmatprep.subr.mxu0 0.0
        %1898 = vmatpush1.xpose.msra.mxu0 0.0
        %1899 = vmatprep.subr.mxu0 0.0
        %1900 = vmatpush1.xpose.msra.mxu0 0.0
        %1901 = vmatprep.subr.mxu0 0.0
        %1902 = vmatpush1.xpose.msra.mxu0 0.0
        %1903 = vmatprep.subr.mxu0 0.0
        %1904 = vmatpush1.xpose.msra.mxu0 0.0
        %1905 = vmatprep.subr.mxu0 0.0
        %1906 = vmatpush1.xpose.msra.mxu0 0.0
        %1907 = vmatprep.subr.mxu0 0.0
        %1908 = vmatpush1.xpose.msra.mxu0 0.0
        %1909 = vmatprep.subr.mxu0 0.0
        %1910 = vmatpush1.xpose.msra.mxu0 0.0
        %1911 = vmatprep.subr.mxu0 0.0
        %1912 = vmatpush1.xpose.msra.mxu0 0.0
        %1913 = vmatprep.mubr.f32.mxu0 0.0
        %1914 = vmatmul.mubr.f32.gmra.mrb[0].mxu0 %v1726
        %v1915 = vpop.f32.mrb[0].mxu0
        %v1916 = vadd.f32 0.0, %v1915
        %v1917 = vpop.f32.mrb[0].mxu0
        %1918 = vdwg.mxu0
        %1919 = vmatprep.subr.mxu0 0.0
        %1920 = vmatpush1.xpose.msra.mxu0 %v1751
        %1921 = vmatprep.subr.mxu0 0.0
        %1922 = vmatpush1.xpose.msra.mxu0 0.0
        %1923 = vmatprep.subr.mxu0 0.0
        %1924 = vmatpush1.xpose.msra.mxu0 0.0
        %1925 = vmatprep.subr.mxu0 0.0
        %1926 = vmatpush1.xpose.msra.mxu0 0.0
        %1927 = vmatprep.subr.mxu0 0.0
        %1928 = vmatpush1.xpose.msra.mxu0 0.0
        %1929 = vmatprep.subr.mxu0 0.0
        %1930 = vmatpush1.xpose.msra.mxu0 0.0
        %1931 = vmatprep.subr.mxu0 0.0
        %1932 = vmatpush1.xpose.msra.mxu0 0.0
        %1933 = vmatprep.subr.mxu0 0.0
        %1934 = vmatpush1.xpose.msra.mxu0 0.0
        %1935 = vmatprep.subr.mxu0 0.0
        %1936 = vmatpush1.xpose.msra.mxu0 0.0
        %1937 = vmatprep.subr.mxu0 0.0
        %1938 = vmatpush1.xpose.msra.mxu0 0.0
        %1939 = vmatprep.subr.mxu0 0.0
        %1940 = vmatpush1.xpose.msra.mxu0 0.0
        %1941 = vmatprep.subr.mxu0 0.0
        %1942 = vmatpush1.xpose.msra.mxu0 0.0
        %1943 = vmatprep.subr.mxu0 0.0
        %1944 = vmatpush1.xpose.msra.mxu0 0.0
        %1945 = vmatprep.subr.mxu0 0.0
        %1946 = vmatpush1.xpose.msra.mxu0 0.0
        %1947 = vmatprep.subr.mxu0 0.0
        %1948 = vmatpush1.xpose.msra.mxu0 0.0
        %1949 = vmatprep.subr.mxu0 0.0
        %1950 = vmatpush1.xpose.msra.mxu0 0.0
        %1951 = vmatprep.subr.mxu0 0.0
        %1952 = vmatpush1.xpose.msra.mxu0 0.0
        %1953 = vmatprep.subr.mxu0 0.0
        %1954 = vmatpush1.xpose.msra.mxu0 0.0
        %1955 = vmatprep.subr.mxu0 0.0
        %1956 = vmatpush1.xpose.msra.mxu0 0.0
        %1957 = vmatprep.subr.mxu0 0.0
        %1958 = vmatpush1.xpose.msra.mxu0 0.0
        %1959 = vmatprep.subr.mxu0 0.0
        %1960 = vmatpush1.xpose.msra.mxu0 0.0
        %1961 = vmatprep.subr.mxu0 0.0
        %1962 = vmatpush1.xpose.msra.mxu0 0.0
        %1963 = vmatprep.subr.mxu0 0.0
        %1964 = vmatpush1.xpose.msra.mxu0 0.0
        %1965 = vmatprep.subr.mxu0 0.0
        %1966 = vmatpush1.xpose.msra.mxu0 0.0
        %1967 = vmatprep.subr.mxu0 0.0
        %1968 = vmatpush1.xpose.msra.mxu0 0.0
        %1969 = vmatprep.subr.mxu0 0.0
        %1970 = vmatpush1.xpose.msra.mxu0 0.0
        %1971 = vmatprep.subr.mxu0 0.0
        %1972 = vmatpush1.xpose.msra.mxu0 0.0
        %1973 = vmatprep.subr.mxu0 0.0
        %1974 = vmatpush1.xpose.msra.mxu0 0.0
        %1975 = vmatprep.subr.mxu0 0.0
        %1976 = vmatpush1.xpose.msra.mxu0 0.0
        %1977 = vmatprep.subr.mxu0 0.0
        %1978 = vmatpush1.xpose.msra.mxu0 0.0
        %1979 = vmatprep.subr.mxu0 0.0
        %1980 = vmatpush1.xpose.msra.mxu0 0.0
        %1981 = vmatprep.subr.mxu0 0.0
        %1982 = vmatpush1.xpose.msra.mxu0 0.0
        %1983 = vmatprep.mubr.f32.mxu0 0.0
        %1984 = vmatmul.mubr.f32.gmra.mrb[0].mxu0 %v1727
        %v1985 = vpop.f32.mrb[0].mxu0
        %v1986 = vadd.f32 0.0, %v1985
        %v1987 = vpop.f32.mrb[0].mxu0
        %1988 = vdwg.mxu0
        %1989 = vmatprep.subr.mxu0 0.0
        %1990 = vmatpush1.xpose.msra.mxu0 %v1753
        %1991 = vmatprep.subr.mxu0 0.0
        %1992 = vmatpush1.xpose.msra.mxu0 0.0
        %1993 = vmatprep.subr.mxu0 0.0
        %1994 = vmatpush1.xpose.msra.mxu0 0.0
        %1995 = vmatprep.subr.mxu0 0.0
        %1996 = vmatpush1.xpose.msra.mxu0 0.0
        %1997 = vmatprep.subr.mxu0 0.0
        %1998 = vmatpush1.xpose.msra.mxu0 0.0
        %1999 = vmatprep.subr.mxu0 0.0
        %2000 = vmatpush1.xpose.msra.mxu0 0.0
        %2001 = vmatprep.subr.mxu0 0.0
        %2002 = vmatpush1.xpose.msra.mxu0 0.0
        %2003 = vmatprep.subr.mxu0 0.0
        %2004 = vmatpush1.xpose.msra.mxu0 0.0
        %2005 = vmatprep.subr.mxu0 0.0
        %2006 = vmatpush1.xpose.msra.mxu0 0.0
        %2007 = vmatprep.subr.mxu0 0.0
        %2008 = vmatpush1.xpose.msra.mxu0 0.0
        %2009 = vmatprep.subr.mxu0 0.0
        %2010 = vmatpush1.xpose.msra.mxu0 0.0
        %2011 = vmatprep.subr.mxu0 0.0
        %2012 = vmatpush1.xpose.msra.mxu0 0.0
        %2013 = vmatprep.subr.mxu0 0.0
        %2014 = vmatpush1.xpose.msra.mxu0 0.0
        %2015 = vmatprep.subr.mxu0 0.0
        %2016 = vmatpush1.xpose.msra.mxu0 0.0
        %2017 = vmatprep.subr.mxu0 0.0
        %2018 = vmatpush1.xpose.msra.mxu0 0.0
        %2019 = vmatprep.subr.mxu0 0.0
        %2020 = vmatpush1.xpose.msra.mxu0 0.0
        %2021 = vmatprep.subr.mxu0 0.0
        %2022 = vmatpush1.xpose.msra.mxu0 0.0
        %2023 = vmatprep.subr.mxu0 0.0
        %2024 = vmatpush1.xpose.msra.mxu0 0.0
        %2025 = vmatprep.subr.mxu0 0.0
        %2026 = vmatpush1.xpose.msra.mxu0 0.0
        %2027 = vmatprep.subr.mxu0 0.0
        %2028 = vmatpush1.xpose.msra.mxu0 0.0
        %2029 = vmatprep.subr.mxu0 0.0
        %2030 = vmatpush1.xpose.msra.mxu0 0.0
        %2031 = vmatprep.subr.mxu0 0.0
        %2032 = vmatpush1.xpose.msra.mxu0 0.0
        %2033 = vmatprep.subr.mxu0 0.0
        %2034 = vmatpush1.xpose.msra.mxu0 0.0
        %2035 = vmatprep.subr.mxu0 0.0
        %2036 = vmatpush1.xpose.msra.mxu0 0.0
        %2037 = vmatprep.subr.mxu0 0.0
        %2038 = vmatpush1.xpose.msra.mxu0 0.0
        %2039 = vmatprep.subr.mxu0 0.0
        %2040 = vmatpush1.xpose.msra.mxu0 0.0
        %2041 = vmatprep.subr.mxu0 0.0
        %2042 = vmatpush1.xpose.msra.mxu0 0.0
        %2043 = vmatprep.subr.mxu0 0.0
        %2044 = vmatpush1.xpose.msra.mxu0 0.0
        %2045 = vmatprep.subr.mxu0 0.0
        %2046 = vmatpush1.xpose.msra.mxu0 0.0
        %2047 = vmatprep.subr.mxu0 0.0
        %2048 = vmatpush1.xpose.msra.mxu0 0.0
        %2049 = vmatprep.subr.mxu0 0.0
        %2050 = vmatpush1.xpose.msra.mxu0 0.0
        %2051 = vmatprep.subr.mxu0 0.0
        %2052 = vmatpush1.xpose.msra.mxu0 0.0
        %2053 = vmatprep.mubr.f32.mxu0 0.0
        %2054 = vmatmul.mubr.f32.gmra.mrb[0].mxu0 %v1728
        %v2055 = vpop.f32.mrb[0].mxu0
        %v2056 = vadd.f32 0.0, %v2055
        %v2057 = vpop.f32.mrb[0].mxu0
        %2058 = vdwg.mxu0
        %2059 = vmatprep.subr.mxu0 0.0
        %2060 = vmatpush1.xpose.msra.mxu0 %v1761
        %2061 = vmatprep.subr.mxu0 0.0
        %2062 = vmatpush1.xpose.msra.mxu0 0.0
        %2063 = vmatprep.subr.mxu0 0.0
        %2064 = vmatpush1.xpose.msra.mxu0 0.0
        %2065 = vmatprep.subr.mxu0 0.0
        %2066 = vmatpush1.xpose.msra.mxu0 0.0
        %2067 = vmatprep.subr.mxu0 0.0
        %2068 = vmatpush1.xpose.msra.mxu0 0.0
        %2069 = vmatprep.subr.mxu0 0.0
        %2070 = vmatpush1.xpose.msra.mxu0 0.0
        %2071 = vmatprep.subr.mxu0 0.0
        %2072 = vmatpush1.xpose.msra.mxu0 0.0
        %2073 = vmatprep.subr.mxu0 0.0
        %2074 = vmatpush1.xpose.msra.mxu0 0.0
        %2075 = vmatprep.subr.mxu0 0.0
        %2076 = vmatpush1.xpose.msra.mxu0 0.0
        %2077 = vmatprep.subr.mxu0 0.0
        %2078 = vmatpush1.xpose.msra.mxu0 0.0
        %2079 = vmatprep.subr.mxu0 0.0
        %2080 = vmatpush1.xpose.msra.mxu0 0.0
        %2081 = vmatprep.subr.mxu0 0.0
        %2082 = vmatpush1.xpose.msra.mxu0 0.0
        %2083 = vmatprep.subr.mxu0 0.0
        %2084 = vmatpush1.xpose.msra.mxu0 0.0
        %2085 = vmatprep.subr.mxu0 0.0
        %2086 = vmatpush1.xpose.msra.mxu0 0.0
        %2087 = vmatprep.subr.mxu0 0.0
        %2088 = vmatpush1.xpose.msra.mxu0 0.0
        %2089 = vmatprep.subr.mxu0 0.0
        %2090 = vmatpush1.xpose.msra.mxu0 0.0
        %2091 = vmatprep.subr.mxu0 0.0
        %2092 = vmatpush1.xpose.msra.mxu0 0.0
        %2093 = vmatprep.subr.mxu0 0.0
        %2094 = vmatpush1.xpose.msra.mxu0 0.0
        %2095 = vmatprep.subr.mxu0 0.0
        %2096 = vmatpush1.xpose.msra.mxu0 0.0
        %2097 = vmatprep.subr.mxu0 0.0
        %2098 = vmatpush1.xpose.msra.mxu0 0.0
        %2099 = vmatprep.subr.mxu0 0.0
        %2100 = vmatpush1.xpose.msra.mxu0 0.0
        %2101 = vmatprep.subr.mxu0 0.0
        %2102 = vmatpush1.xpose.msra.mxu0 0.0
        %2103 = vmatprep.subr.mxu0 0.0
        %2104 = vmatpush1.xpose.msra.mxu0 0.0
        %2105 = vmatprep.subr.mxu0 0.0
        %2106 = vmatpush1.xpose.msra.mxu0 0.0
        %2107 = vmatprep.subr.mxu0 0.0
        %2108 = vmatpush1.xpose.msra.mxu0 0.0
        %2109 = vmatprep.subr.mxu0 0.0
        %2110 = vmatpush1.xpose.msra.mxu0 0.0
        %2111 = vmatprep.subr.mxu0 0.0
        %2112 = vmatpush1.xpose.msra.mxu0 0.0
        %2113 = vmatprep.subr.mxu0 0.0
        %2114 = vmatpush1.xpose.msra.mxu0 0.0
        %2115 = vmatprep.subr.mxu0 0.0
        %2116 = vmatpush1.xpose.msra.mxu0 0.0
        %2117 = vmatprep.subr.mxu0 0.0
        %2118 = vmatpush1.xpose.msra.mxu0 0.0
        %2119 = vmatprep.subr.mxu0 0.0
        %2120 = vmatpush1.xpose.msra.mxu0 0.0
        %2121 = vmatprep.subr.mxu0 0.0
        %2122 = vmatpush1.xpose.msra.mxu0 0.0
        %2123 = vmatprep.mubr.f32.mxu0 0.0
        %2124 = vmatmul.mubr.f32.gmra.mrb[0].mxu0 %v1729
        %v2125 = vpop.f32.mrb[0].mxu0
        %v2126 = vadd.f32 0.0, %v2125
        %v2127 = vpop.f32.mrb[0].mxu0
        %2128 = vdwg.mxu0
        %2129 = vmatprep.subr.mxu0 0.0
        %2130 = vmatpush1.xpose.msra.mxu0 %v1769
        %2131 = vmatprep.subr.mxu0 0.0
        %2132 = vmatpush1.xpose.msra.mxu0 0.0
        %2133 = vmatprep.subr.mxu0 0.0
        %2134 = vmatpush1.xpose.msra.mxu0 0.0
        %2135 = vmatprep.subr.mxu0 0.0
        %2136 = vmatpush1.xpose.msra.mxu0 0.0
        %2137 = vmatprep.subr.mxu0 0.0
        %2138 = vmatpush1.xpose.msra.mxu0 0.0
        %2139 = vmatprep.subr.mxu0 0.0
        %2140 = vmatpush1.xpose.msra.mxu0 0.0
        %2141 = vmatprep.subr.mxu0 0.0
        %2142 = vmatpush1.xpose.msra.mxu0 0.0
        %2143 = vmatprep.subr.mxu0 0.0
        %2144 = vmatpush1.xpose.msra.mxu0 0.0
        %2145 = vmatprep.subr.mxu0 0.0
        %2146 = vmatpush1.xpose.msra.mxu0 0.0
        %2147 = vmatprep.subr.mxu0 0.0
        %2148 = vmatpush1.xpose.msra.mxu0 0.0
        %2149 = vmatprep.subr.mxu0 0.0
        %2150 = vmatpush1.xpose.msra.mxu0 0.0
        %2151 = vmatprep.subr.mxu0 0.0
        %2152 = vmatpush1.xpose.msra.mxu0 0.0
        %2153 = vmatprep.subr.mxu0 0.0
        %2154 = vmatpush1.xpose.msra.mxu0 0.0
        %2155 = vmatprep.subr.mxu0 0.0
        %2156 = vmatpush1.xpose.msra.mxu0 0.0
        %2157 = vmatprep.subr.mxu0 0.0
        %2158 = vmatpush1.xpose.msra.mxu0 0.0
        %2159 = vmatprep.subr.mxu0 0.0
        %2160 = vmatpush1.xpose.msra.mxu0 0.0
        %2161 = vmatprep.subr.mxu0 0.0
        %2162 = vmatpush1.xpose.msra.mxu0 0.0
        %2163 = vmatprep.subr.mxu0 0.0
        %2164 = vmatpush1.xpose.msra.mxu0 0.0
        %2165 = vmatprep.subr.mxu0 0.0
        %2166 = vmatpush1.xpose.msra.mxu0 0.0
        %2167 = vmatprep.subr.mxu0 0.0
        %2168 = vmatpush1.xpose.msra.mxu0 0.0
        %2169 = vmatprep.subr.mxu0 0.0
        %2170 = vmatpush1.xpose.msra.mxu0 0.0
        %2171 = vmatprep.subr.mxu0 0.0
        %2172 = vmatpush1.xpose.msra.mxu0 0.0
        %2173 = vmatprep.subr.mxu0 0.0
        %2174 = vmatpush1.xpose.msra.mxu0 0.0
        %2175 = vmatprep.subr.mxu0 0.0
        %2176 = vmatpush1.xpose.msra.mxu0 0.0
        %2177 = vmatprep.subr.mxu0 0.0
        %2178 = vmatpush1.xpose.msra.mxu0 0.0
        %2179 = vmatprep.subr.mxu0 0.0
        %2180 = vmatpush1.xpose.msra.mxu0 0.0
        %2181 = vmatprep.subr.mxu0 0.0
        %2182 = vmatpush1.xpose.msra.mxu0 0.0
        %2183 = vmatprep.subr.mxu0 0.0
        %2184 = vmatpush1.xpose.msra.mxu0 0.0
        %2185 = vmatprep.subr.mxu0 0.0
        %2186 = vmatpush1.xpose.msra.mxu0 0.0
        %2187 = vmatprep.subr.mxu0 0.0
        %2188 = vmatpush1.xpose.msra.mxu0 0.0
        %2189 = vmatprep.subr.mxu0 0.0
        %2190 = vmatpush1.xpose.msra.mxu0 0.0
        %2191 = vmatprep.subr.mxu0 0.0
        %2192 = vmatpush1.xpose.msra.mxu0 0.0
        %2193 = vmatprep.mubr.f32.mxu0 0.0
        %2194 = vmatmul.mubr.f32.gmra.mrb[0].mxu0 %v1730
        %v2195 = vpop.f32.mrb[0].mxu0
        %v2196 = vadd.f32 0.0, %v2195
        %v2197 = vpop.f32.mrb[0].mxu0
        %2198 = vdwg.mxu0
        %2199 = vmatprep.subr.mxu0 0.0
        %2200 = vmatpush1.xpose.msra.mxu0 %v1768
        %2201 = vmatprep.subr.mxu0 0.0
        %2202 = vmatpush1.xpose.msra.mxu0 0.0
        %2203 = vmatprep.subr.mxu0 0.0
        %2204 = vmatpush1.xpose.msra.mxu0 0.0
        %2205 = vmatprep.subr.mxu0 0.0
        %2206 = vmatpush1.xpose.msra.mxu0 0.0
        %2207 = vmatprep.subr.mxu0 0.0
        %2208 = vmatpush1.xpose.msra.mxu0 0.0
        %2209 = vmatprep.subr.mxu0 0.0
        %2210 = vmatpush1.xpose.msra.mxu0 0.0
        %2211 = vmatprep.subr.mxu0 0.0
        %2212 = vmatpush1.xpose.msra.mxu0 0.0
        %2213 = vmatprep.subr.mxu0 0.0
        %2214 = vmatpush1.xpose.msra.mxu0 0.0
        %2215 = vmatprep.subr.mxu0 0.0
        %2216 = vmatpush1.xpose.msra.mxu0 0.0
        %2217 = vmatprep.subr.mxu0 0.0
        %2218 = vmatpush1.xpose.msra.mxu0 0.0
        %2219 = vmatprep.subr.mxu0 0.0
        %2220 = vmatpush1.xpose.msra.mxu0 0.0
        %2221 = vmatprep.subr.mxu0 0.0
        %2222 = vmatpush1.xpose.msra.mxu0 0.0
        %2223 = vmatprep.subr.mxu0 0.0
        %2224 = vmatpush1.xpose.msra.mxu0 0.0
        %2225 = vmatprep.subr.mxu0 0.0
        %2226 = vmatpush1.xpose.msra.mxu0 0.0
        %2227 = vmatprep.subr.mxu0 0.0
        %2228 = vmatpush1.xpose.msra.mxu0 0.0
        %2229 = vmatprep.subr.mxu0 0.0
        %2230 = vmatpush1.xpose.msra.mxu0 0.0
        %2231 = vmatprep.subr.mxu0 0.0
        %2232 = vmatpush1.xpose.msra.mxu0 0.0
        %2233 = vmatprep.subr.mxu0 0.0
        %2234 = vmatpush1.xpose.msra.mxu0 0.0
        %2235 = vmatprep.subr.mxu0 0.0
        %2236 = vmatpush1.xpose.msra.mxu0 0.0
        %2237 = vmatprep.subr.mxu0 0.0
        %2238 = vmatpush1.xpose.msra.mxu0 0.0
        %2239 = vmatprep.subr.mxu0 0.0
        %2240 = vmatpush1.xpose.msra.mxu0 0.0
        %2241 = vmatprep.subr.mxu0 0.0
        %2242 = vmatpush1.xpose.msra.mxu0 0.0
        %2243 = vmatprep.subr.mxu0 0.0
        %2244 = vmatpush1.xpose.msra.mxu0 0.0
        %2245 = vmatprep.subr.mxu0 0.0
        %2246 = vmatpush1.xpose.msra.mxu0 0.0
        %2247 = vmatprep.subr.mxu0 0.0
        %2248 = vmatpush1.xpose.msra.mxu0 0.0
        %2249 = vmatprep.subr.mxu0 0.0
        %2250 = vmatpush1.xpose.msra.mxu0 0.0
        %2251 = vmatprep.subr.mxu0 0.0
        %2252 = vmatpush1.xpose.msra.mxu0 0.0
        %2253 = vmatprep.subr.mxu0 0.0
        %2254 = vmatpush1.xpose.msra.mxu0 0.0
        %2255 = vmatprep.subr.mxu0 0.0
        %2256 = vmatpush1.xpose.msra.mxu0 0.0
        %2257 = vmatprep.subr.mxu0 0.0
        %2258 = vmatpush1.xpose.msra.mxu0 0.0
        %2259 = vmatprep.subr.mxu0 0.0
        %2260 = vmatpush1.xpose.msra.mxu0 0.0
        %2261 = vmatprep.subr.mxu0 0.0
        %2262 = vmatpush1.xpose.msra.mxu0 0.0
        %2263 = vmatprep.mubr.f32.mxu0 0.0
        %2264 = vmatmul.mubr.f32.gmra.mrb[0].mxu0 %v1731
        %v2265 = vpop.f32.mrb[0].mxu0
        %v2266 = vadd.f32 0.0, %v2265
        %v2267 = vpop.f32.mrb[0].mxu0
        %2268 = vdwg.mxu0
        %2269 = vmatprep.subr.mxu0 0.0
        %2270 = vmatpush1.xpose.msra.mxu0 %v1770
        %2271 = vmatprep.subr.mxu0 0.0
        %2272 = vmatpush1.xpose.msra.mxu0 0.0
        %2273 = vmatprep.subr.mxu0 0.0
        %2274 = vmatpush1.xpose.msra.mxu0 0.0
        %2275 = vmatprep.subr.mxu0 0.0
        %2276 = vmatpush1.xpose.msra.mxu0 0.0
        %2277 = vmatprep.subr.mxu0 0.0
        %2278 = vmatpush1.xpose.msra.mxu0 0.0
        %2279 = vmatprep.subr.mxu0 0.0
        %2280 = vmatpush1.xpose.msra.mxu0 0.0
        %2281 = vmatprep.subr.mxu0 0.0
        %2282 = vmatpush1.xpose.msra.mxu0 0.0
        %2283 = vmatprep.subr.mxu0 0.0
        %2284 = vmatpush1.xpose.msra.mxu0 0.0
        %2285 = vmatprep.subr.mxu0 0.0
        %2286 = vmatpush1.xpose.msra.mxu0 0.0
        %2287 = vmatprep.subr.mxu0 0.0
        %2288 = vmatpush1.xpose.msra.mxu0 0.0
        %2289 = vmatprep.subr.mxu0 0.0
        %2290 = vmatpush1.xpose.msra.mxu0 0.0
        %2291 = vmatprep.subr.mxu0 0.0
        %2292 = vmatpush1.xpose.msra.mxu0 0.0
        %2293 = vmatprep.subr.mxu0 0.0
        %2294 = vmatpush1.xpose.msra.mxu0 0.0
        %2295 = vmatprep.subr.mxu0 0.0
        %2296 = vmatpush1.xpose.msra.mxu0 0.0
        %2297 = vmatprep.subr.mxu0 0.0
        %2298 = vmatpush1.xpose.msra.mxu0 0.0
        %2299 = vmatprep.subr.mxu0 0.0
        %2300 = vmatpush1.xpose.msra.mxu0 0.0
        %2301 = vmatprep.subr.mxu0 0.0
        %2302 = vmatpush1.xpose.msra.mxu0 0.0
        %2303 = vmatprep.subr.mxu0 0.0
        %2304 = vmatpush1.xpose.msra.mxu0 0.0
        %2305 = vmatprep.subr.mxu0 0.0
        %2306 = vmatpush1.xpose.msra.mxu0 0.0
        %2307 = vmatprep.subr.mxu0 0.0
        %2308 = vmatpush1.xpose.msra.mxu0 0.0
        %2309 = vmatprep.subr.mxu0 0.0
        %2310 = vmatpush1.xpose.msra.mxu0 0.0
        %2311 = vmatprep.subr.mxu0 0.0
        %2312 = vmatpush1.xpose.msra.mxu0 0.0
        %2313 = vmatprep.subr.mxu0 0.0
        %2314 = vmatpush1.xpose.msra.mxu0 0.0
        %2315 = vmatprep.subr.mxu0 0.0
        %2316 = vmatpush1.xpose.msra.mxu0 0.0
        %2317 = vmatprep.subr.mxu0 0.0
        %2318 = vmatpush1.xpose.msra.mxu0 0.0
        %2319 = vmatprep.subr.mxu0 0.0
        %2320 = vmatpush1.xpose.msra.mxu0 0.0
        %2321 = vmatprep.subr.mxu0 0.0
        %2322 = vmatpush1.xpose.msra.mxu0 0.0
        %2323 = vmatprep.subr.mxu0 0.0
        %2324 = vmatpush1.xpose.msra.mxu0 0.0
        %2325 = vmatprep.subr.mxu0 0.0
        %2326 = vmatpush1.xpose.msra.mxu0 0.0
        %2327 = vmatprep.subr.mxu0 0.0
        %2328 = vmatpush1.xpose.msra.mxu0 0.0
        %2329 = vmatprep.subr.mxu0 0.0
        %2330 = vmatpush1.xpose.msra.mxu0 0.0
        %2331 = vmatprep.subr.mxu0 0.0
        %2332 = vmatpush1.xpose.msra.mxu0 0.0
        %2333 = vmatprep.mubr.f32.mxu0 0.0
        %2334 = vmatmul.mubr.f32.gmra.mrb[0].mxu0 %v1732
        %v2335 = vpop.f32.mrb[0].mxu0
        %v2336 = vadd.f32 0.0, %v2335
        %v2337 = vpop.f32.mrb[0].mxu0
        %2338 = vdwg.mxu0
        %v2339 = vmul.f32 %v1846, 0.088388346
        %v2340 = vmul.f32 %v1916, 0.088388346
        %v2341 = vmul.f32 %v1986, 0.088388346
        %v2342 = vmul.f32 %v2056, 0.088388346
        %v2343 = vmul.f32 %v2126, 0.088388346
        %v2344 = vmul.f32 %v2196, 0.088388346
        %v2345 = vmul.f32 %v2266, 0.088388346
        %v2346 = vmul.f32 %v2336, 0.088388346
        %v2347 = vsel %vm441, %v2339, -inf
        %v2348 = vrot.slane %v2347, 4
        %v2349 = vmax.f32 %v2347, %v2348
        %v2350 = vrot.slane %v2349, 2
        %v2351 = vmax.f32 %v2349, %v2350
        %v2352 = vrot.slane %v2351, 1
        %v2353 = vmax.f32 %v2351, %v2352
        %v2354 = vsel %vm441, %v2340, -inf
        %v2355 = vrot.slane %v2354, 4
        %v2356 = vmax.f32 %v2354, %v2355
        %v2357 = vrot.slane %v2356, 2
        %v2358 = vmax.f32 %v2356, %v2357
        %v2359 = vrot.slane %v2358, 1
        %v2360 = vmax.f32 %v2358, %v2359
        %v2361 = vsel %vm441, %v2341, -inf
        %v2362 = vrot.slane %v2361, 4
        %v2363 = vmax.f32 %v2361, %v2362
        %v2364 = vrot.slane %v2363, 2
        %v2365 = vmax.f32 %v2363, %v2364
        %v2366 = vrot.slane %v2365, 1
        %v2367 = vmax.f32 %v2365, %v2366
        %v2368 = vsel %vm441, %v2342, -inf
        %v2369 = vrot.slane %v2368, 4
        %v2370 = vmax.f32 %v2368, %v2369
        %v2371 = vrot.slane %v2370, 2
        %v2372 = vmax.f32 %v2370, %v2371
        %v2373 = vrot.slane %v2372, 1
        %v2374 = vmax.f32 %v2372, %v2373
        %v2375 = vsel %vm441, %v2343, -inf
        %v2376 = vrot.slane %v2375, 4
        %v2377 = vmax.f32 %v2375, %v2376
        %v2378 = vrot.slane %v2377, 2
        %v2379 = vmax.f32 %v2377, %v2378
        %v2380 = vrot.slane %v2379, 1
        %v2381 = vmax.f32 %v2379, %v2380
        %v2382 = vsel %vm441, %v2344, -inf
        %v2383 = vrot.slane %v2382, 4
        %v2384 = vmax.f32 %v2382, %v2383
        %v2385 = vrot.slane %v2384, 2
        %v2386 = vmax.f32 %v2384, %v2385
        %v2387 = vrot.slane %v2386, 1
        %v2388 = vmax.f32 %v2386, %v2387
        %v2389 = vsel %vm441, %v2345, -inf
        %v2390 = vrot.slane %v2389, 4
        %v2391 = vmax.f32 %v2389, %v2390
        %v2392 = vrot.slane %v2391, 2
        %v2393 = vmax.f32 %v2391, %v2392
        %v2394 = vrot.slane %v2393, 1
        %v2395 = vmax.f32 %v2393, %v2394
        %v2396 = vsel %vm441, %v2346, -inf
        %v2397 = vrot.slane %v2396, 4
        %v2398 = vmax.f32 %v2396, %v2397
        %v2399 = vrot.slane %v2398, 2
        %v2400 = vmax.f32 %v2398, %v2399
        %v2401 = vrot.slane %v2400, 1
        %v2402 = vmax.f32 %v2400, %v2401
        %v2403 = vsub.f32 %v2339, %v2353
        %v2404 = vsub.f32 %v2340, %v2360
        %v2405 = vsub.f32 %v2341, %v2367
        %v2406 = vsub.f32 %v2342, %v2374
        %v2407 = vsub.f32 %v2343, %v2381
        %v2408 = vsub.f32 %v2344, %v2388
        %v2409 = vsub.f32 %v2345, %v2395
        %v2410 = vsub.f32 %v2346, %v2402
        %v2411 = vmul.f32 %v2403, 1.442695
        %v2412 = vpow.pop %v2411
        %v2413 = vmul.f32 %v2404, 1.442695
        %v2414 = vpow.pop %v2413
        %v2415 = vmul.f32 %v2405, 1.442695
        %v2416 = vpow.pop %v2415
        %v2417 = vmul.f32 %v2406, 1.442695
        %v2418 = vpow.pop %v2417
        %v2419 = vmul.f32 %v2407, 1.442695
        %v2420 = vpow.pop %v2419
        %v2421 = vmul.f32 %v2408, 1.442695
        %v2422 = vpow.pop %v2421
        %v2423 = vmul.f32 %v2409, 1.442695
        %v2424 = vpow.pop %v2423
        %v2425 = vmul.f32 %v2410, 1.442695
        %v2426 = vpow.pop %v2425
        %v2427 = vsel %vm441, %v2412, 0.0
        %v2428 = vrot.slane %v2427, 4
        %v2429 = vadd.f32 %v2427, %v2428
        %v2430 = vrot.slane %v2429, 2
        %v2431 = vadd.f32 %v2429, %v2430
        %v2432 = vrot.slane %v2431, 1
        %v2433 = vadd.f32 %v2431, %v2432
        %v2434 = vsel %vm441, %v2414, 0.0
        %v2435 = vrot.slane %v2434, 4
        %v2436 = vadd.f32 %v2434, %v2435
        %v2437 = vrot.slane %v2436, 2
        %v2438 = vadd.f32 %v2436, %v2437
        %v2439 = vrot.slane %v2438, 1
        %v2440 = vadd.f32 %v2438, %v2439
        %v2441 = vsel %vm441, %v2416, 0.0
        %v2442 = vrot.slane %v2441, 4
        %v2443 = vadd.f32 %v2441, %v2442
        %v2444 = vrot.slane %v2443, 2
        %v2445 = vadd.f32 %v2443, %v2444
        %v2446 = vrot.slane %v2445, 1
        %v2447 = vadd.f32 %v2445, %v2446
        %v2448 = vsel %vm441, %v2418, 0.0
        %v2449 = vrot.slane %v2448, 4
        %v2450 = vadd.f32 %v2448, %v2449
        %v2451 = vrot.slane %v2450, 2
        %v2452 = vadd.f32 %v2450, %v2451
        %v2453 = vrot.slane %v2452, 1
        %v2454 = vadd.f32 %v2452, %v2453
        %v2455 = vsel %vm441, %v2420, 0.0
        %v2456 = vrot.slane %v2455, 4
        %v2457 = vadd.f32 %v2455, %v2456
        %v2458 = vrot.slane %v2457, 2
        %v2459 = vadd.f32 %v2457, %v2458
        %v2460 = vrot.slane %v2459, 1
        %v2461 = vadd.f32 %v2459, %v2460
        %v2462 = vsel %vm441, %v2422, 0.0
        %v2463 = vrot.slane %v2462, 4
        %v2464 = vadd.f32 %v2462, %v2463
        %v2465 = vrot.slane %v2464, 2
        %v2466 = vadd.f32 %v2464, %v2465
        %v2467 = vrot.slane %v2466, 1
        %v2468 = vadd.f32 %v2466, %v2467
        %v2469 = vsel %vm441, %v2424, 0.0
        %v2470 = vrot.slane %v2469, 4
        %v2471 = vadd.f32 %v2469, %v2470
        %v2472 = vrot.slane %v2471, 2
        %v2473 = vadd.f32 %v2471, %v2472
        %v2474 = vrot.slane %v2473, 1
        %v2475 = vadd.f32 %v2473, %v2474
        %v2476 = vsel %vm441, %v2426, 0.0
        %v2477 = vrot.slane %v2476, 4
        %v2478 = vadd.f32 %v2476, %v2477
        %v2479 = vrot.slane %v2478, 2
        %v2480 = vadd.f32 %v2478, %v2479
        %v2481 = vrot.slane %v2480, 1
        %v2482 = vadd.f32 %v2480, %v2481
        %v2483 = vrcp.pop %v2433
        %v2484 = vmul.f32 %v2412, %v2483
        %v2485 = vrcp.pop %v2440
        %v2486 = vmul.f32 %v2414, %v2485
        %v2487 = vrcp.pop %v2447
        %v2488 = vmul.f32 %v2416, %v2487
        %v2489 = vrcp.pop %v2454
        %v2490 = vmul.f32 %v2418, %v2489
        %v2491 = vrcp.pop %v2461
        %v2492 = vmul.f32 %v2420, %v2491
        %v2493 = vrcp.pop %v2468
        %v2494 = vmul.f32 %v2422, %v2493
        %v2495 = vrcp.pop %v2475
        %v2496 = vmul.f32 %v2424, %v2495
        %v2497 = vrcp.pop %v2482
        %v2498 = vmul.f32 %v2426, %v2497
        %2499 = vxpose.xlu0.b32.start [1/16] %v2484, 128
        %2500 = vxpose.xlu0.b32.cont [2/16] 0.0, 128
        %2501 = vxpose.xlu0.b32.cont [3/16] 0.0, 128
        %2502 = vxpose.xlu0.b32.cont [4/16] 0.0, 128
        %2503 = vxpose.xlu0.b32.cont [5/16] 0.0, 128
        %2504 = vxpose.xlu0.b32.cont [6/16] 0.0, 128
        %2505 = vxpose.xlu0.b32.cont [7/16] 0.0, 128
        %2506 = vxpose.xlu0.b32.cont [8/16] 0.0, 128
        %2507 = vxpose.xlu0.b32.cont [9/16] 0.0, 128
        %2508 = vxpose.xlu0.b32.cont [10/16] 0.0, 128
        %2509 = vxpose.xlu0.b32.cont [11/16] 0.0, 128
        %2510 = vxpose.xlu0.b32.cont [12/16] 0.0, 128
        %2511 = vxpose.xlu0.b32.cont [13/16] 0.0, 128
        %2512 = vxpose.xlu0.b32.cont [14/16] 0.0, 128
        %2513 = vxpose.xlu0.b32.cont [15/16] 0.0, 128
        %2514 = vxpose.xlu0.b32.end [16/16] 0.0, 128
        %v2515 = vpop.trf.xlu0
        %v2516 = vpop.trf.xlu0
        %v2517 = vpop.trf.xlu0
        %v2518 = vpop.trf.xlu0
        %v2519 = vpop.trf.xlu0
        %v2520 = vpop.trf.xlu0
        %v2521 = vpop.trf.xlu0
        %v2522 = vpop.trf.xlu0
        %v2523 = vpop.trf.xlu0
        %v2524 = vpop.trf.xlu0
        %v2525 = vpop.trf.xlu0
        %v2526 = vpop.trf.xlu0
        %v2527 = vpop.trf.xlu0
        %v2528 = vpop.trf.xlu0
        %v2529 = vpop.trf.xlu0
        %v2530 = vpop.trf.xlu0
        %v2532 = vsel %vm650, %v2515, 0
        %2534 = vmatprep.subr.mxu0 0.0
        %2535 = vmatpush1.msra.mxu0 %v262
        %2536 = vmatprep.subr.mxu0 0.0
        %2537 = vmatpush1.msra.mxu0 0.0
        %2538 = vmatprep.subr.mxu0 0.0
        %2539 = vmatpush1.msra.mxu0 0.0
        %2540 = vmatprep.subr.mxu0 0.0
        %2541 = vmatpush1.msra.mxu0 0.0
        %2542 = vmatprep.subr.mxu0 0.0
        %2543 = vmatpush1.msra.mxu0 0.0
        %2544 = vmatprep.subr.mxu0 0.0
        %2545 = vmatpush1.msra.mxu0 0.0
        %2546 = vmatprep.subr.mxu0 0.0
        %2547 = vmatpush1.msra.mxu0 0.0
        %2548 = vmatprep.subr.mxu0 0.0
        %2549 = vmatpush1.msra.mxu0 0.0
        %2550 = vmatprep.subr.mxu0 0.0
        %2551 = vmatpush1.msra.mxu0 0.0
        %2552 = vmatprep.subr.mxu0 0.0
        %2553 = vmatpush1.msra.mxu0 0.0
        %2554 = vmatprep.subr.mxu0 0.0
        %2555 = vmatpush1.msra.mxu0 0.0
        %2556 = vmatprep.subr.mxu0 0.0
        %2557 = vmatpush1.msra.mxu0 0.0
        %2558 = vmatprep.subr.mxu0 0.0
        %2559 = vmatpush1.msra.mxu0 0.0
        %2560 = vmatprep.subr.mxu0 0.0
        %2561 = vmatpush1.msra.mxu0 0.0
        %2562 = vmatprep.subr.mxu0 0.0
        %2563 = vmatpush1.msra.mxu0 0.0
        %2564 = vmatprep.subr.mxu0 0.0
        %2565 = vmatpush1.msra.mxu0 0.0
        %2566 = vmatprep.subr.mxu0 0.0
        %2567 = vmatpush1.msra.mxu0 0.0
        %2568 = vmatprep.subr.mxu0 0.0
        %2569 = vmatpush1.msra.mxu0 0.0
        %2570 = vmatprep.subr.mxu0 0.0
        %2571 = vmatpush1.msra.mxu0 0.0
        %2572 = vmatprep.subr.mxu0 0.0
        %2573 = vmatpush1.msra.mxu0 0.0
        %2574 = vmatprep.subr.mxu0 0.0
        %2575 = vmatpush1.msra.mxu0 0.0
        %2576 = vmatprep.subr.mxu0 0.0
        %2577 = vmatpush1.msra.mxu0 0.0
        %2578 = vmatprep.subr.mxu0 0.0
        %2579 = vmatpush1.msra.mxu0 0.0
        %2580 = vmatprep.subr.mxu0 0.0
        %2581 = vmatpush1.msra.mxu0 0.0
        %2582 = vmatprep.subr.mxu0 0.0
        %2583 = vmatpush1.msra.mxu0 0.0
        %2584 = vmatprep.subr.mxu0 0.0
        %2585 = vmatpush1.msra.mxu0 0.0
        %2586 = vmatprep.subr.mxu0 0.0
        %2587 = vmatpush1.msra.mxu0 0.0
        %2588 = vmatprep.subr.mxu0 0.0
        %2589 = vmatpush1.msra.mxu0 0.0
        %2590 = vmatprep.subr.mxu0 0.0
        %2591 = vmatpush1.msra.mxu0 0.0
        %2592 = vmatprep.subr.mxu0 0.0
        %2593 = vmatpush1.msra.mxu0 0.0
        %2594 = vmatprep.subr.mxu0 0.0
        %2595 = vmatpush1.msra.mxu0 0.0
        %2596 = vmatprep.subr.mxu0 0.0
        %2597 = vmatpush1.msra.mxu0 0.0
        %2598 = vmatprep.mubr.f32.mxu0 0.0
        %2599 = vmatmul.mubr.f32.gmra.mrb[0].mxu0 %v2532
        %v2600 = vpop.f32.mrb[0].mxu0
        %v2601 = vadd.f32 0.0, %v2600
        %v2602 = vpop.f32.mrb[0].mxu0
        %2603 = vdwg.mxu0
        %2604 = vxpose.xlu0.b32.start [1/16] %v2486, 128
        %2605 = vxpose.xlu0.b32.cont [2/16] 0.0, 128
        %2606 = vxpose.xlu0.b32.cont [3/16] 0.0, 128
        %2607 = vxpose.xlu0.b32.cont [4/16] 0.0, 128
        %2608 = vxpose.xlu0.b32.cont [5/16] 0.0, 128
        %2609 = vxpose.xlu0.b32.cont [6/16] 0.0, 128
        %2610 = vxpose.xlu0.b32.cont [7/16] 0.0, 128
        %2611 = vxpose.xlu0.b32.cont [8/16] 0.0, 128
        %2612 = vxpose.xlu0.b32.cont [9/16] 0.0, 128
        %2613 = vxpose.xlu0.b32.cont [10/16] 0.0, 128
        %2614 = vxpose.xlu0.b32.cont [11/16] 0.0, 128
        %2615 = vxpose.xlu0.b32.cont [12/16] 0.0, 128
        %2616 = vxpose.xlu0.b32.cont [13/16] 0.0, 128
        %2617 = vxpose.xlu0.b32.cont [14/16] 0.0, 128
        %2618 = vxpose.xlu0.b32.cont [15/16] 0.0, 128
        %2619 = vxpose.xlu0.b32.end [16/16] 0.0, 128
        %v2620 = vpop.trf.xlu0
        %v2621 = vpop.trf.xlu0
        %v2622 = vpop.trf.xlu0
        %v2623 = vpop.trf.xlu0
        %v2624 = vpop.trf.xlu0
        %v2625 = vpop.trf.xlu0
        %v2626 = vpop.trf.xlu0
        %v2627 = vpop.trf.xlu0
        %v2628 = vpop.trf.xlu0
        %v2629 = vpop.trf.xlu0
        %v2630 = vpop.trf.xlu0
        %v2631 = vpop.trf.xlu0
        %v2632 = vpop.trf.xlu0
        %v2633 = vpop.trf.xlu0
        %v2634 = vpop.trf.xlu0
        %v2635 = vpop.trf.xlu0
        %v2637 = vsel %vm650, %v2620, 0
        %2639 = vmatprep.subr.mxu0 0.0
        %2640 = vmatpush1.msra.mxu0 %v263
        %2641 = vmatprep.subr.mxu0 0.0
        %2642 = vmatpush1.msra.mxu0 0.0
        %2643 = vmatprep.subr.mxu0 0.0
        %2644 = vmatpush1.msra.mxu0 0.0
        %2645 = vmatprep.subr.mxu0 0.0
        %2646 = vmatpush1.msra.mxu0 0.0
        %2647 = vmatprep.subr.mxu0 0.0
        %2648 = vmatpush1.msra.mxu0 0.0
        %2649 = vmatprep.subr.mxu0 0.0
        %2650 = vmatpush1.msra.mxu0 0.0
        %2651 = vmatprep.subr.mxu0 0.0
        %2652 = vmatpush1.msra.mxu0 0.0
        %2653 = vmatprep.subr.mxu0 0.0
        %2654 = vmatpush1.msra.mxu0 0.0
        %2655 = vmatprep.subr.mxu0 0.0
        %2656 = vmatpush1.msra.mxu0 0.0
        %2657 = vmatprep.subr.mxu0 0.0
        %2658 = vmatpush1.msra.mxu0 0.0
        %2659 = vmatprep.subr.mxu0 0.0
        %2660 = vmatpush1.msra.mxu0 0.0
        %2661 = vmatprep.subr.mxu0 0.0
        %2662 = vmatpush1.msra.mxu0 0.0
        %2663 = vmatprep.subr.mxu0 0.0
        %2664 = vmatpush1.msra.mxu0 0.0
        %2665 = vmatprep.subr.mxu0 0.0
        %2666 = vmatpush1.msra.mxu0 0.0
        %2667 = vmatprep.subr.mxu0 0.0
        %2668 = vmatpush1.msra.mxu0 0.0
        %2669 = vmatprep.subr.mxu0 0.0
        %2670 = vmatpush1.msra.mxu0 0.0
        %2671 = vmatprep.subr.mxu0 0.0
        %2672 = vmatpush1.msra.mxu0 0.0
        %2673 = vmatprep.subr.mxu0 0.0
        %2674 = vmatpush1.msra.mxu0 0.0
        %2675 = vmatprep.subr.mxu0 0.0
        %2676 = vmatpush1.msra.mxu0 0.0
        %2677 = vmatprep.subr.mxu0 0.0
        %2678 = vmatpush1.msra.mxu0 0.0
        %2679 = vmatprep.subr.mxu0 0.0
        %2680 = vmatpush1.msra.mxu0 0.0
        %2681 = vmatprep.subr.mxu0 0.0
        %2682 = vmatpush1.msra.mxu0 0.0
        %2683 = vmatprep.subr.mxu0 0.0
        %2684 = vmatpush1.msra.mxu0 0.0
        %2685 = vmatprep.subr.mxu0 0.0
        %2686 = vmatpush1.msra.mxu0 0.0
        %2687 = vmatprep.subr.mxu0 0.0
        %2688 = vmatpush1.msra.mxu0 0.0
        %2689 = vmatprep.subr.mxu0 0.0
        %2690 = vmatpush1.msra.mxu0 0.0
        %2691 = vmatprep.subr.mxu0 0.0
        %2692 = vmatpush1.msra.mxu0 0.0
        %2693 = vmatprep.subr.mxu0 0.0
        %2694 = vmatpush1.msra.mxu0 0.0
        %2695 = vmatprep.subr.mxu0 0.0
        %2696 = vmatpush1.msra.mxu0 0.0
        %2697 = vmatprep.subr.mxu0 0.0
        %2698 = vmatpush1.msra.mxu0 0.0
        %2699 = vmatprep.subr.mxu0 0.0
        %2700 = vmatpush1.msra.mxu0 0.0
        %2701 = vmatprep.subr.mxu0 0.0
        %2702 = vmatpush1.msra.mxu0 0.0
        %2703 = vmatprep.mubr.f32.mxu0 0.0
        %2704 = vmatmul.mubr.f32.gmra.mrb[0].mxu0 %v2637
        %v2705 = vpop.f32.mrb[0].mxu0
        %v2706 = vadd.f32 0.0, %v2705
        %v2707 = vpop.f32.mrb[0].mxu0
        %2708 = vdwg.mxu0
        %2709 = vxpose.xlu0.b32.start [1/16] %v2488, 128
        %2710 = vxpose.xlu0.b32.cont [2/16] 0.0, 128
        %2711 = vxpose.xlu0.b32.cont [3/16] 0.0, 128
        %2712 = vxpose.xlu0.b32.cont [4/16] 0.0, 128
        %2713 = vxpose.xlu0.b32.cont [5/16] 0.0, 128
        %2714 = vxpose.xlu0.b32.cont [6/16] 0.0, 128
        %2715 = vxpose.xlu0.b32.cont [7/16] 0.0, 128
        %2716 = vxpose.xlu0.b32.cont [8/16] 0.0, 128
        %2717 = vxpose.xlu0.b32.cont [9/16] 0.0, 128
        %2718 = vxpose.xlu0.b32.cont [10/16] 0.0, 128
        %2719 = vxpose.xlu0.b32.cont [11/16] 0.0, 128
        %2720 = vxpose.xlu0.b32.cont [12/16] 0.0, 128
        %2721 = vxpose.xlu0.b32.cont [13/16] 0.0, 128
        %2722 = vxpose.xlu0.b32.cont [14/16] 0.0, 128
        %2723 = vxpose.xlu0.b32.cont [15/16] 0.0, 128
        %2724 = vxpose.xlu0.b32.end [16/16] 0.0, 128
        %v2725 = vpop.trf.xlu0
        %v2726 = vpop.trf.xlu0
        %v2727 = vpop.trf.xlu0
        %v2728 = vpop.trf.xlu0
        %v2729 = vpop.trf.xlu0
        %v2730 = vpop.trf.xlu0
        %v2731 = vpop.trf.xlu0
        %v2732 = vpop.trf.xlu0
        %v2733 = vpop.trf.xlu0
        %v2734 = vpop.trf.xlu0
        %v2735 = vpop.trf.xlu0
        %v2736 = vpop.trf.xlu0
        %v2737 = vpop.trf.xlu0
        %v2738 = vpop.trf.xlu0
        %v2739 = vpop.trf.xlu0
        %v2740 = vpop.trf.xlu0
        %v2742 = vsel %vm650, %v2725, 0
        %2744 = vmatprep.subr.mxu0 0.0
        %2745 = vmatpush1.msra.mxu0 %v264
        %2746 = vmatprep.subr.mxu0 0.0
        %2747 = vmatpush1.msra.mxu0 0.0
        %2748 = vmatprep.subr.mxu0 0.0
        %2749 = vmatpush1.msra.mxu0 0.0
        %2750 = vmatprep.subr.mxu0 0.0
        %2751 = vmatpush1.msra.mxu0 0.0
        %2752 = vmatprep.subr.mxu0 0.0
        %2753 = vmatpush1.msra.mxu0 0.0
        %2754 = vmatprep.subr.mxu0 0.0
        %2755 = vmatpush1.msra.mxu0 0.0
        %2756 = vmatprep.subr.mxu0 0.0
        %2757 = vmatpush1.msra.mxu0 0.0
        %2758 = vmatprep.subr.mxu0 0.0
        %2759 = vmatpush1.msra.mxu0 0.0
        %2760 = vmatprep.subr.mxu0 0.0
        %2761 = vmatpush1.msra.mxu0 0.0
        %2762 = vmatprep.subr.mxu0 0.0
        %2763 = vmatpush1.msra.mxu0 0.0
        %2764 = vmatprep.subr.mxu0 0.0
        %2765 = vmatpush1.msra.mxu0 0.0
        %2766 = vmatprep.subr.mxu0 0.0
        %2767 = vmatpush1.msra.mxu0 0.0
        %2768 = vmatprep.subr.mxu0 0.0
        %2769 = vmatpush1.msra.mxu0 0.0
        %2770 = vmatprep.subr.mxu0 0.0
        %2771 = vmatpush1.msra.mxu0 0.0
        %2772 = vmatprep.subr.mxu0 0.0
        %2773 = vmatpush1.msra.mxu0 0.0
        %2774 = vmatprep.subr.mxu0 0.0
        %2775 = vmatpush1.msra.mxu0 0.0
        %2776 = vmatprep.subr.mxu0 0.0
        %2777 = vmatpush1.msra.mxu0 0.0
        %2778 = vmatprep.subr.mxu0 0.0
        %2779 = vmatpush1.msra.mxu0 0.0
        %2780 = vmatprep.subr.mxu0 0.0
        %2781 = vmatpush1.msra.mxu0 0.0
        %2782 = vmatprep.subr.mxu0 0.0
        %2783 = vmatpush1.msra.mxu0 0.0
        %2784 = vmatprep.subr.mxu0 0.0
        %2785 = vmatpush1.msra.mxu0 0.0
        %2786 = vmatprep.subr.mxu0 0.0
        %2787 = vmatpush1.msra.mxu0 0.0
        %2788 = vmatprep.subr.mxu0 0.0
        %2789 = vmatpush1.msra.mxu0 0.0
        %2790 = vmatprep.subr.mxu0 0.0
        %2791 = vmatpush1.msra.mxu0 0.0
        %2792 = vmatprep.subr.mxu0 0.0
        %2793 = vmatpush1.msra.mxu0 0.0
        %2794 = vmatprep.subr.mxu0 0.0
        %2795 = vmatpush1.msra.mxu0 0.0
        %2796 = vmatprep.subr.mxu0 0.0
        %2797 = vmatpush1.msra.mxu0 0.0
        %2798 = vmatprep.subr.mxu0 0.0
        %2799 = vmatpush1.msra.mxu0 0.0
        %2800 = vmatprep.subr.mxu0 0.0
        %2801 = vmatpush1.msra.mxu0 0.0
        %2802 = vmatprep.subr.mxu0 0.0
        %2803 = vmatpush1.msra.mxu0 0.0
        %2804 = vmatprep.subr.mxu0 0.0
        %2805 = vmatpush1.msra.mxu0 0.0
        %2806 = vmatprep.subr.mxu0 0.0
        %2807 = vmatpush1.msra.mxu0 0.0
        %2808 = vmatprep.mubr.f32.mxu0 0.0
        %2809 = vmatmul.mubr.f32.gmra.mrb[0].mxu0 %v2742
        %v2810 = vpop.f32.mrb[0].mxu0
        %v2811 = vadd.f32 0.0, %v2810
        %v2812 = vpop.f32.mrb[0].mxu0
        %2813 = vdwg.mxu0
        %2814 = vxpose.xlu0.b32.start [1/16] %v2490, 128
        %2815 = vxpose.xlu0.b32.cont [2/16] 0.0, 128
        %2816 = vxpose.xlu0.b32.cont [3/16] 0.0, 128
        %2817 = vxpose.xlu0.b32.cont [4/16] 0.0, 128
        %2818 = vxpose.xlu0.b32.cont [5/16] 0.0, 128
        %2819 = vxpose.xlu0.b32.cont [6/16] 0.0, 128
        %2820 = vxpose.xlu0.b32.cont [7/16] 0.0, 128
        %2821 = vxpose.xlu0.b32.cont [8/16] 0.0, 128
        %2822 = vxpose.xlu0.b32.cont [9/16] 0.0, 128
        %2823 = vxpose.xlu0.b32.cont [10/16] 0.0, 128
        %2824 = vxpose.xlu0.b32.cont [11/16] 0.0, 128
        %2825 = vxpose.xlu0.b32.cont [12/16] 0.0, 128
        %2826 = vxpose.xlu0.b32.cont [13/16] 0.0, 128
        %2827 = vxpose.xlu0.b32.cont [14/16] 0.0, 128
        %2828 = vxpose.xlu0.b32.cont [15/16] 0.0, 128
        %2829 = vxpose.xlu0.b32.end [16/16] 0.0, 128
        %v2830 = vpop.trf.xlu0
        %v2831 = vpop.trf.xlu0
        %v2832 = vpop.trf.xlu0
        %v2833 = vpop.trf.xlu0
        %v2834 = vpop.trf.xlu0
        %v2835 = vpop.trf.xlu0
        %v2836 = vpop.trf.xlu0
        %v2837 = vpop.trf.xlu0
        %v2838 = vpop.trf.xlu0
        %v2839 = vpop.trf.xlu0
        %v2840 = vpop.trf.xlu0
        %v2841 = vpop.trf.xlu0
        %v2842 = vpop.trf.xlu0
        %v2843 = vpop.trf.xlu0
        %v2844 = vpop.trf.xlu0
        %v2845 = vpop.trf.xlu0
        %v2847 = vsel %vm650, %v2830, 0
        %2849 = vmatprep.subr.mxu0 0.0
        %2850 = vmatpush1.msra.mxu0 %v265
        %2851 = vmatprep.subr.mxu0 0.0
        %2852 = vmatpush1.msra.mxu0 0.0
        %2853 = vmatprep.subr.mxu0 0.0
        %2854 = vmatpush1.msra.mxu0 0.0
        %2855 = vmatprep.subr.mxu0 0.0
        %2856 = vmatpush1.msra.mxu0 0.0
        %2857 = vmatprep.subr.mxu0 0.0
        %2858 = vmatpush1.msra.mxu0 0.0
        %2859 = vmatprep.subr.mxu0 0.0
        %2860 = vmatpush1.msra.mxu0 0.0
        %2861 = vmatprep.subr.mxu0 0.0
        %2862 = vmatpush1.msra.mxu0 0.0
        %2863 = vmatprep.subr.mxu0 0.0
        %2864 = vmatpush1.msra.mxu0 0.0
        %2865 = vmatprep.subr.mxu0 0.0
        %2866 = vmatpush1.msra.mxu0 0.0
        %2867 = vmatprep.subr.mxu0 0.0
        %2868 = vmatpush1.msra.mxu0 0.0
        %2869 = vmatprep.subr.mxu0 0.0
        %2870 = vmatpush1.msra.mxu0 0.0
        %2871 = vmatprep.subr.mxu0 0.0
        %2872 = vmatpush1.msra.mxu0 0.0
        %2873 = vmatprep.subr.mxu0 0.0
        %2874 = vmatpush1.msra.mxu0 0.0
        %2875 = vmatprep.subr.mxu0 0.0
        %2876 = vmatpush1.msra.mxu0 0.0
        %2877 = vmatprep.subr.mxu0 0.0
        %2878 = vmatpush1.msra.mxu0 0.0
        %2879 = vmatprep.subr.mxu0 0.0
        %2880 = vmatpush1.msra.mxu0 0.0
        %2881 = vmatprep.subr.mxu0 0.0
        %2882 = vmatpush1.msra.mxu0 0.0
        %2883 = vmatprep.subr.mxu0 0.0
        %2884 = vmatpush1.msra.mxu0 0.0
        %2885 = vmatprep.subr.mxu0 0.0
        %2886 = vmatpush1.msra.mxu0 0.0
        %2887 = vmatprep.subr.mxu0 0.0
        %2888 = vmatpush1.msra.mxu0 0.0
        %2889 = vmatprep.subr.mxu0 0.0
        %2890 = vmatpush1.msra.mxu0 0.0
        %2891 = vmatprep.subr.mxu0 0.0
        %2892 = vmatpush1.msra.mxu0 0.0
        %2893 = vmatprep.subr.mxu0 0.0
        %2894 = vmatpush1.msra.mxu0 0.0
        %2895 = vmatprep.subr.mxu0 0.0
        %2896 = vmatpush1.msra.mxu0 0.0
        %2897 = vmatprep.subr.mxu0 0.0
        %2898 = vmatpush1.msra.mxu0 0.0
        %2899 = vmatprep.subr.mxu0 0.0
        %2900 = vmatpush1.msra.mxu0 0.0
        %2901 = vmatprep.subr.mxu0 0.0
        %2902 = vmatpush1.msra.mxu0 0.0
        %2903 = vmatprep.subr.mxu0 0.0
        %2904 = vmatpush1.msra.mxu0 0.0
        %2905 = vmatprep.subr.mxu0 0.0
        %2906 = vmatpush1.msra.mxu0 0.0
        %2907 = vmatprep.subr.mxu0 0.0
        %2908 = vmatpush1.msra.mxu0 0.0
        %2909 = vmatprep.subr.mxu0 0.0
        %2910 = vmatpush1.msra.mxu0 0.0
        %2911 = vmatprep.subr.mxu0 0.0
        %2912 = vmatpush1.msra.mxu0 0.0
        %2913 = vmatprep.mubr.f32.mxu0 0.0
        %2914 = vmatmul.mubr.f32.gmra.mrb[0].mxu0 %v2847
        %v2915 = vpop.f32.mrb[0].mxu0
        %v2916 = vadd.f32 0.0, %v2915
        %v2917 = vpop.f32.mrb[0].mxu0
        %2918 = vdwg.mxu0
        %2919 = vxpose.xlu0.b32.start [1/16] %v2492, 128
        %2920 = vxpose.xlu0.b32.cont [2/16] 0.0, 128
        %2921 = vxpose.xlu0.b32.cont [3/16] 0.0, 128
        %2922 = vxpose.xlu0.b32.cont [4/16] 0.0, 128
        %2923 = vxpose.xlu0.b32.cont [5/16] 0.0, 128
        %2924 = vxpose.xlu0.b32.cont [6/16] 0.0, 128
        %2925 = vxpose.xlu0.b32.cont [7/16] 0.0, 128
        %2926 = vxpose.xlu0.b32.cont [8/16] 0.0, 128
        %2927 = vxpose.xlu0.b32.cont [9/16] 0.0, 128
        %2928 = vxpose.xlu0.b32.cont [10/16] 0.0, 128
        %2929 = vxpose.xlu0.b32.cont [11/16] 0.0, 128
        %2930 = vxpose.xlu0.b32.cont [12/16] 0.0, 128
        %2931 = vxpose.xlu0.b32.cont [13/16] 0.0, 128
        %2932 = vxpose.xlu0.b32.cont [14/16] 0.0, 128
        %2933 = vxpose.xlu0.b32.cont [15/16] 0.0, 128
        %2934 = vxpose.xlu0.b32.end [16/16] 0.0, 128
        %v2935 = vpop.trf.xlu0
        %v2936 = vpop.trf.xlu0
        %v2937 = vpop.trf.xlu0
        %v2938 = vpop.trf.xlu0
        %v2939 = vpop.trf.xlu0
        %v2940 = vpop.trf.xlu0
        %v2941 = vpop.trf.xlu0
        %v2942 = vpop.trf.xlu0
        %v2943 = vpop.trf.xlu0
        %v2944 = vpop.trf.xlu0
        %v2945 = vpop.trf.xlu0
        %v2946 = vpop.trf.xlu0
        %v2947 = vpop.trf.xlu0
        %v2948 = vpop.trf.xlu0
        %v2949 = vpop.trf.xlu0
        %v2950 = vpop.trf.xlu0
        %v2952 = vsel %vm650, %v2935, 0
        %2954 = vmatprep.subr.mxu0 0.0
        %2955 = vmatpush1.msra.mxu0 %v266
        %2956 = vmatprep.subr.mxu0 0.0
        %2957 = vmatpush1.msra.mxu0 0.0
        %2958 = vmatprep.subr.mxu0 0.0
        %2959 = vmatpush1.msra.mxu0 0.0
        %2960 = vmatprep.subr.mxu0 0.0
        %2961 = vmatpush1.msra.mxu0 0.0
        %2962 = vmatprep.subr.mxu0 0.0
        %2963 = vmatpush1.msra.mxu0 0.0
        %2964 = vmatprep.subr.mxu0 0.0
        %2965 = vmatpush1.msra.mxu0 0.0
        %2966 = vmatprep.subr.mxu0 0.0
        %2967 = vmatpush1.msra.mxu0 0.0
        %2968 = vmatprep.subr.mxu0 0.0
        %2969 = vmatpush1.msra.mxu0 0.0
        %2970 = vmatprep.subr.mxu0 0.0
        %2971 = vmatpush1.msra.mxu0 0.0
        %2972 = vmatprep.subr.mxu0 0.0
        %2973 = vmatpush1.msra.mxu0 0.0
        %2974 = vmatprep.subr.mxu0 0.0
        %2975 = vmatpush1.msra.mxu0 0.0
        %2976 = vmatprep.subr.mxu0 0.0
        %2977 = vmatpush1.msra.mxu0 0.0
        %2978 = vmatprep.subr.mxu0 0.0
        %2979 = vmatpush1.msra.mxu0 0.0
        %2980 = vmatprep.subr.mxu0 0.0
        %2981 = vmatpush1.msra.mxu0 0.0
        %2982 = vmatprep.subr.mxu0 0.0
        %2983 = vmatpush1.msra.mxu0 0.0
        %2984 = vmatprep.subr.mxu0 0.0
        %2985 = vmatpush1.msra.mxu0 0.0
        %2986 = vmatprep.subr.mxu0 0.0
        %2987 = vmatpush1.msra.mxu0 0.0
        %2988 = vmatprep.subr.mxu0 0.0
        %2989 = vmatpush1.msra.mxu0 0.0
        %2990 = vmatprep.subr.mxu0 0.0
        %2991 = vmatpush1.msra.mxu0 0.0
        %2992 = vmatprep.subr.mxu0 0.0
        %2993 = vmatpush1.msra.mxu0 0.0
        %2994 = vmatprep.subr.mxu0 0.0
        %2995 = vmatpush1.msra.mxu0 0.0
        %2996 = vmatprep.subr.mxu0 0.0
        %2997 = vmatpush1.msra.mxu0 0.0
        %2998 = vmatprep.subr.mxu0 0.0
        %2999 = vmatpush1.msra.mxu0 0.0
        %3000 = vmatprep.subr.mxu0 0.0
        %3001 = vmatpush1.msra.mxu0 0.0
        %3002 = vmatprep.subr.mxu0 0.0
        %3003 = vmatpush1.msra.mxu0 0.0
        %3004 = vmatprep.subr.mxu0 0.0
        %3005 = vmatpush1.msra.mxu0 0.0
        %3006 = vmatprep.subr.mxu0 0.0
        %3007 = vmatpush1.msra.mxu0 0.0
        %3008 = vmatprep.subr.mxu0 0.0
        %3009 = vmatpush1.msra.mxu0 0.0
        %3010 = vmatprep.subr.mxu0 0.0
        %3011 = vmatpush1.msra.mxu0 0.0
        %3012 = vmatprep.subr.mxu0 0.0
        %3013 = vmatpush1.msra.mxu0 0.0
        %3014 = vmatprep.subr.mxu0 0.0
        %3015 = vmatpush1.msra.mxu0 0.0
        %3016 = vmatprep.subr.mxu0 0.0
        %3017 = vmatpush1.msra.mxu0 0.0
        %3018 = vmatprep.mubr.f32.mxu0 0.0
        %3019 = vmatmul.mubr.f32.gmra.mrb[0].mxu0 %v2952
        %v3020 = vpop.f32.mrb[0].mxu0
        %v3021 = vadd.f32 0.0, %v3020
        %v3022 = vpop.f32.mrb[0].mxu0
        %3023 = vdwg.mxu0
        %3024 = vxpose.xlu0.b32.start [1/16] %v2494, 128
        %3025 = vxpose.xlu0.b32.cont [2/16] 0.0, 128
        %3026 = vxpose.xlu0.b32.cont [3/16] 0.0, 128
        %3027 = vxpose.xlu0.b32.cont [4/16] 0.0, 128
        %3028 = vxpose.xlu0.b32.cont [5/16] 0.0, 128
        %3029 = vxpose.xlu0.b32.cont [6/16] 0.0, 128
        %3030 = vxpose.xlu0.b32.cont [7/16] 0.0, 128
        %3031 = vxpose.xlu0.b32.cont [8/16] 0.0, 128
        %3032 = vxpose.xlu0.b32.cont [9/16] 0.0, 128
        %3033 = vxpose.xlu0.b32.cont [10/16] 0.0, 128
        %3034 = vxpose.xlu0.b32.cont [11/16] 0.0, 128
        %3035 = vxpose.xlu0.b32.cont [12/16] 0.0, 128
        %3036 = vxpose.xlu0.b32.cont [13/16] 0.0, 128
        %3037 = vxpose.xlu0.b32.cont [14/16] 0.0, 128
        %3038 = vxpose.xlu0.b32.cont [15/16] 0.0, 128
        %3039 = vxpose.xlu0.b32.end [16/16] 0.0, 128
        %v3040 = vpop.trf.xlu0
        %v3041 = vpop.trf.xlu0
        %v3042 = vpop.trf.xlu0
        %v3043 = vpop.trf.xlu0
        %v3044 = vpop.trf.xlu0
        %v3045 = vpop.trf.xlu0
        %v3046 = vpop.trf.xlu0
        %v3047 = vpop.trf.xlu0
        %v3048 = vpop.trf.xlu0
        %v3049 = vpop.trf.xlu0
        %v3050 = vpop.trf.xlu0
        %v3051 = vpop.trf.xlu0
        %v3052 = vpop.trf.xlu0
        %v3053 = vpop.trf.xlu0
        %v3054 = vpop.trf.xlu0
        %v3055 = vpop.trf.xlu0
        %v3057 = vsel %vm650, %v3040, 0
        %3059 = vmatprep.subr.mxu0 0.0
        %3060 = vmatpush1.msra.mxu0 %v267
        %3061 = vmatprep.subr.mxu0 0.0
        %3062 = vmatpush1.msra.mxu0 0.0
        %3063 = vmatprep.subr.mxu0 0.0
        %3064 = vmatpush1.msra.mxu0 0.0
        %3065 = vmatprep.subr.mxu0 0.0
        %3066 = vmatpush1.msra.mxu0 0.0
        %3067 = vmatprep.subr.mxu0 0.0
        %3068 = vmatpush1.msra.mxu0 0.0
        %3069 = vmatprep.subr.mxu0 0.0
        %3070 = vmatpush1.msra.mxu0 0.0
        %3071 = vmatprep.subr.mxu0 0.0
        %3072 = vmatpush1.msra.mxu0 0.0
        %3073 = vmatprep.subr.mxu0 0.0
        %3074 = vmatpush1.msra.mxu0 0.0
        %3075 = vmatprep.subr.mxu0 0.0
        %3076 = vmatpush1.msra.mxu0 0.0
        %3077 = vmatprep.subr.mxu0 0.0
        %3078 = vmatpush1.msra.mxu0 0.0
        %3079 = vmatprep.subr.mxu0 0.0
        %3080 = vmatpush1.msra.mxu0 0.0
        %3081 = vmatprep.subr.mxu0 0.0
        %3082 = vmatpush1.msra.mxu0 0.0
        %3083 = vmatprep.subr.mxu0 0.0
        %3084 = vmatpush1.msra.mxu0 0.0
        %3085 = vmatprep.subr.mxu0 0.0
        %3086 = vmatpush1.msra.mxu0 0.0
        %3087 = vmatprep.subr.mxu0 0.0
        %3088 = vmatpush1.msra.mxu0 0.0
        %3089 = vmatprep.subr.mxu0 0.0
        %3090 = vmatpush1.msra.mxu0 0.0
        %3091 = vmatprep.subr.mxu0 0.0
        %3092 = vmatpush1.msra.mxu0 0.0
        %3093 = vmatprep.subr.mxu0 0.0
        %3094 = vmatpush1.msra.mxu0 0.0
        %3095 = vmatprep.subr.mxu0 0.0
        %3096 = vmatpush1.msra.mxu0 0.0
        %3097 = vmatprep.subr.mxu0 0.0
        %3098 = vmatpush1.msra.mxu0 0.0
        %3099 = vmatprep.subr.mxu0 0.0
        %3100 = vmatpush1.msra.mxu0 0.0
        %3101 = vmatprep.subr.mxu0 0.0
        %3102 = vmatpush1.msra.mxu0 0.0
        %3103 = vmatprep.subr.mxu0 0.0
        %3104 = vmatpush1.msra.mxu0 0.0
        %3105 = vmatprep.subr.mxu0 0.0
        %3106 = vmatpush1.msra.mxu0 0.0
        %3107 = vmatprep.subr.mxu0 0.0
        %3108 = vmatpush1.msra.mxu0 0.0
        %3109 = vmatprep.subr.mxu0 0.0
        %3110 = vmatpush1.msra.mxu0 0.0
        %3111 = vmatprep.subr.mxu0 0.0
        %3112 = vmatpush1.msra.mxu0 0.0
        %3113 = vmatprep.subr.mxu0 0.0
        %3114 = vmatpush1.msra.mxu0 0.0
        %3115 = vmatprep.subr.mxu0 0.0
        %3116 = vmatpush1.msra.mxu0 0.0
        %3117 = vmatprep.subr.mxu0 0.0
        %3118 = vmatpush1.msra.mxu0 0.0
        %3119 = vmatprep.subr.mxu0 0.0
        %3120 = vmatpush1.msra.mxu0 0.0
        %3121 = vmatprep.subr.mxu0 0.0
        %3122 = vmatpush1.msra.mxu0 0.0
        %3123 = vmatprep.mubr.f32.mxu0 0.0
        %3124 = vmatmul.mubr.f32.gmra.mrb[0].mxu0 %v3057
        %v3125 = vpop.f32.mrb[0].mxu0
        %v3126 = vadd.f32 0.0, %v3125
        %v3127 = vpop.f32.mrb[0].mxu0
        %3128 = vdwg.mxu0
        %3129 = vxpose.xlu0.b32.start [1/16] %v2496, 128
        %3130 = vxpose.xlu0.b32.cont [2/16] 0.0, 128
        %3131 = vxpose.xlu0.b32.cont [3/16] 0.0, 128
        %3132 = vxpose.xlu0.b32.cont [4/16] 0.0, 128
        %3133 = vxpose.xlu0.b32.cont [5/16] 0.0, 128
        %3134 = vxpose.xlu0.b32.cont [6/16] 0.0, 128
        %3135 = vxpose.xlu0.b32.cont [7/16] 0.0, 128
        %3136 = vxpose.xlu0.b32.cont [8/16] 0.0, 128
        %3137 = vxpose.xlu0.b32.cont [9/16] 0.0, 128
        %3138 = vxpose.xlu0.b32.cont [10/16] 0.0, 128
        %3139 = vxpose.xlu0.b32.cont [11/16] 0.0, 128
        %3140 = vxpose.xlu0.b32.cont [12/16] 0.0, 128
        %3141 = vxpose.xlu0.b32.cont [13/16] 0.0, 128
        %3142 = vxpose.xlu0.b32.cont [14/16] 0.0, 128
        %3143 = vxpose.xlu0.b32.cont [15/16] 0.0, 128
        %3144 = vxpose.xlu0.b32.end [16/16] 0.0, 128
        %v3145 = vpop.trf.xlu0
        %v3146 = vpop.trf.xlu0
        %v3147 = vpop.trf.xlu0
        %v3148 = vpop.trf.xlu0
        %v3149 = vpop.trf.xlu0
        %v3150 = vpop.trf.xlu0
        %v3151 = vpop.trf.xlu0
        %v3152 = vpop.trf.xlu0
        %v3153 = vpop.trf.xlu0
        %v3154 = vpop.trf.xlu0
        %v3155 = vpop.trf.xlu0
        %v3156 = vpop.trf.xlu0
        %v3157 = vpop.trf.xlu0
        %v3158 = vpop.trf.xlu0
        %v3159 = vpop.trf.xlu0
        %v3160 = vpop.trf.xlu0
        %v3162 = vsel %vm650, %v3145, 0
        %3164 = vmatprep.subr.mxu0 0.0
        %3165 = vmatpush1.msra.mxu0 %v268
        %3166 = vmatprep.subr.mxu0 0.0
        %3167 = vmatpush1.msra.mxu0 0.0
        %3168 = vmatprep.subr.mxu0 0.0
        %3169 = vmatpush1.msra.mxu0 0.0
        %3170 = vmatprep.subr.mxu0 0.0
        %3171 = vmatpush1.msra.mxu0 0.0
        %3172 = vmatprep.subr.mxu0 0.0
        %3173 = vmatpush1.msra.mxu0 0.0
        %3174 = vmatprep.subr.mxu0 0.0
        %3175 = vmatpush1.msra.mxu0 0.0
        %3176 = vmatprep.subr.mxu0 0.0
        %3177 = vmatpush1.msra.mxu0 0.0
        %3178 = vmatprep.subr.mxu0 0.0
        %3179 = vmatpush1.msra.mxu0 0.0
        %3180 = vmatprep.subr.mxu0 0.0
        %3181 = vmatpush1.msra.mxu0 0.0
        %3182 = vmatprep.subr.mxu0 0.0
        %3183 = vmatpush1.msra.mxu0 0.0
        %3184 = vmatprep.subr.mxu0 0.0
        %3185 = vmatpush1.msra.mxu0 0.0
        %3186 = vmatprep.subr.mxu0 0.0
        %3187 = vmatpush1.msra.mxu0 0.0
        %3188 = vmatprep.subr.mxu0 0.0
        %3189 = vmatpush1.msra.mxu0 0.0
        %3190 = vmatprep.subr.mxu0 0.0
        %3191 = vmatpush1.msra.mxu0 0.0
        %3192 = vmatprep.subr.mxu0 0.0
        %3193 = vmatpush1.msra.mxu0 0.0
        %3194 = vmatprep.subr.mxu0 0.0
        %3195 = vmatpush1.msra.mxu0 0.0
        %3196 = vmatprep.subr.mxu0 0.0
        %3197 = vmatpush1.msra.mxu0 0.0
        %3198 = vmatprep.subr.mxu0 0.0
        %3199 = vmatpush1.msra.mxu0 0.0
        %3200 = vmatprep.subr.mxu0 0.0
        %3201 = vmatpush1.msra.mxu0 0.0
        %3202 = vmatprep.subr.mxu0 0.0
        %3203 = vmatpush1.msra.mxu0 0.0
        %3204 = vmatprep.subr.mxu0 0.0
        %3205 = vmatpush1.msra.mxu0 0.0
        %3206 = vmatprep.subr.mxu0 0.0
        %3207 = vmatpush1.msra.mxu0 0.0
        %3208 = vmatprep.subr.mxu0 0.0
        %3209 = vmatpush1.msra.mxu0 0.0
        %3210 = vmatprep.subr.mxu0 0.0
        %3211 = vmatpush1.msra.mxu0 0.0
        %3212 = vmatprep.subr.mxu0 0.0
        %3213 = vmatpush1.msra.mxu0 0.0
        %3214 = vmatprep.subr.mxu0 0.0
        %3215 = vmatpush1.msra.mxu0 0.0
        %3216 = vmatprep.subr.mxu0 0.0
        %3217 = vmatpush1.msra.mxu0 0.0
        %3218 = vmatprep.subr.mxu0 0.0
        %3219 = vmatpush1.msra.mxu0 0.0
        %3220 = vmatprep.subr.mxu0 0.0
        %3221 = vmatpush1.msra.mxu0 0.0
        %3222 = vmatprep.subr.mxu0 0.0
        %3223 = vmatpush1.msra.mxu0 0.0
        %3224 = vmatprep.subr.mxu0 0.0
        %3225 = vmatpush1.msra.mxu0 0.0
        %3226 = vmatprep.subr.mxu0 0.0
        %3227 = vmatpush1.msra.mxu0 0.0
        %3228 = vmatprep.mubr.f32.mxu0 0.0
        %3229 = vmatmul.mubr.f32.gmra.mrb[0].mxu0 %v3162
        %v3230 = vpop.f32.mrb[0].mxu0
        %v3231 = vadd.f32 0.0, %v3230
        %v3232 = vpop.f32.mrb[0].mxu0
        %3233 = vdwg.mxu0
        %3234 = vxpose.xlu0.b32.start [1/16] %v2498, 128
        %3235 = vxpose.xlu0.b32.cont [2/16] 0.0, 128
        %3236 = vxpose.xlu0.b32.cont [3/16] 0.0, 128
        %3237 = vxpose.xlu0.b32.cont [4/16] 0.0, 128
        %3238 = vxpose.xlu0.b32.cont [5/16] 0.0, 128
        %3239 = vxpose.xlu0.b32.cont [6/16] 0.0, 128
        %3240 = vxpose.xlu0.b32.cont [7/16] 0.0, 128
        %3241 = vxpose.xlu0.b32.cont [8/16] 0.0, 128
        %3242 = vxpose.xlu0.b32.cont [9/16] 0.0, 128
        %3243 = vxpose.xlu0.b32.cont [10/16] 0.0, 128
        %3244 = vxpose.xlu0.b32.cont [11/16] 0.0, 128
        %3245 = vxpose.xlu0.b32.cont [12/16] 0.0, 128
        %3246 = vxpose.xlu0.b32.cont [13/16] 0.0, 128
        %3247 = vxpose.xlu0.b32.cont [14/16] 0.0, 128
        %3248 = vxpose.xlu0.b32.cont [15/16] 0.0, 128
        %3249 = vxpose.xlu0.b32.end [16/16] 0.0, 128
        %v3250 = vpop.trf.xlu0
        %v3251 = vpop.trf.xlu0
        %v3252 = vpop.trf.xlu0
        %v3253 = vpop.trf.xlu0
        %v3254 = vpop.trf.xlu0
        %v3255 = vpop.trf.xlu0
        %v3256 = vpop.trf.xlu0
        %v3257 = vpop.trf.xlu0
        %v3258 = vpop.trf.xlu0
        %v3259 = vpop.trf.xlu0
        %v3260 = vpop.trf.xlu0
        %v3261 = vpop.trf.xlu0
        %v3262 = vpop.trf.xlu0
        %v3263 = vpop.trf.xlu0
        %v3264 = vpop.trf.xlu0
        %v3265 = vpop.trf.xlu0
        %v3267 = vsel %vm650, %v3250, 0
        %3269 = vmatprep.subr.mxu0 0.0
        %3270 = vmatpush1.msra.mxu0 %v269
        %3271 = vmatprep.subr.mxu0 0.0
        %3272 = vmatpush1.msra.mxu0 0.0
        %3273 = vmatprep.subr.mxu0 0.0
        %3274 = vmatpush1.msra.mxu0 0.0
        %3275 = vmatprep.subr.mxu0 0.0
        %3276 = vmatpush1.msra.mxu0 0.0
        %3277 = vmatprep.subr.mxu0 0.0
        %3278 = vmatpush1.msra.mxu0 0.0
        %3279 = vmatprep.subr.mxu0 0.0
        %3280 = vmatpush1.msra.mxu0 0.0
        %3281 = vmatprep.subr.mxu0 0.0
        %3282 = vmatpush1.msra.mxu0 0.0
        %3283 = vmatprep.subr.mxu0 0.0
        %3284 = vmatpush1.msra.mxu0 0.0
        %3285 = vmatprep.subr.mxu0 0.0
        %3286 = vmatpush1.msra.mxu0 0.0
        %3287 = vmatprep.subr.mxu0 0.0
        %3288 = vmatpush1.msra.mxu0 0.0
        %3289 = vmatprep.subr.mxu0 0.0
        %3290 = vmatpush1.msra.mxu0 0.0
        %3291 = vmatprep.subr.mxu0 0.0
        %3292 = vmatpush1.msra.mxu0 0.0
        %3293 = vmatprep.subr.mxu0 0.0
        %3294 = vmatpush1.msra.mxu0 0.0
        %3295 = vmatprep.subr.mxu0 0.0
        %3296 = vmatpush1.msra.mxu0 0.0
        %3297 = vmatprep.subr.mxu0 0.0
        %3298 = vmatpush1.msra.mxu0 0.0
        %3299 = vmatprep.subr.mxu0 0.0
        %3300 = vmatpush1.msra.mxu0 0.0
        %3301 = vmatprep.subr.mxu0 0.0
        %3302 = vmatpush1.msra.mxu0 0.0
        %3303 = vmatprep.subr.mxu0 0.0
        %3304 = vmatpush1.msra.mxu0 0.0
        %3305 = vmatprep.subr.mxu0 0.0
        %3306 = vmatpush1.msra.mxu0 0.0
        %3307 = vmatprep.subr.mxu0 0.0
        %3308 = vmatpush1.msra.mxu0 0.0
        %3309 = vmatprep.subr.mxu0 0.0
        %3310 = vmatpush1.msra.mxu0 0.0
        %3311 = vmatprep.subr.mxu0 0.0
        %3312 = vmatpush1.msra.mxu0 0.0
        %3313 = vmatprep.subr.mxu0 0.0
        %3314 = vmatpush1.msra.mxu0 0.0
        %3315 = vmatprep.subr.mxu0 0.0
        %3316 = vmatpush1.msra.mxu0 0.0
        %3317 = vmatprep.subr.mxu0 0.0
        %3318 = vmatpush1.msra.mxu0 0.0
        %3319 = vmatprep.subr.mxu0 0.0
        %3320 = vmatpush1.msra.mxu0 0.0
        %3321 = vmatprep.subr.mxu0 0.0
        %3322 = vmatpush1.msra.mxu0 0.0
        %3323 = vmatprep.subr.mxu0 0.0
        %3324 = vmatpush1.msra.mxu0 0.0
        %3325 = vmatprep.subr.mxu0 0.0
        %3326 = vmatpush1.msra.mxu0 0.0
        %3327 = vmatprep.subr.mxu0 0.0
        %3328 = vmatpush1.msra.mxu0 0.0
        %3329 = vmatprep.subr.mxu0 0.0
        %3330 = vmatpush1.msra.mxu0 0.0
        %3331 = vmatprep.subr.mxu0 0.0
        %3332 = vmatpush1.msra.mxu0 0.0
        %3333 = vmatprep.mubr.f32.mxu0 0.0
        %3334 = vmatmul.mubr.f32.gmra.mrb[0].mxu0 %v3267
        %v3335 = vpop.f32.mrb[0].mxu0
        %v3336 = vadd.f32 0.0, %v3335
        %v3337 = vpop.f32.mrb[0].mxu0
        %3338 = vdwg.mxu0
        %v3339 = vcombine.low %v2601, %v2811
        %v3341 = vunpack.c.l.s4 1983009808
        %v3342 = vunpack.c.0.s8 %v3341
        %v3343 = vlaneseq
        %v3344 = vshrl.u32 %v3343, 7
        %v3345 = vsub.s32 %v3342, %v3344
        %v3346 = vrot.slane %v3339, %v3345
        %v3347 = vcombine.low %v2706, %v2916
        %v3349 = vunpack.c.l.s4 1983009808
        %v3350 = vunpack.c.0.s8 %v3349
        %v3351 = vlaneseq
        %v3352 = vshrl.u32 %v3351, 7
        %v3353 = vsub.s32 %v3350, %v3352
        %v3354 = vrot.slane %v3347, %v3353
        %v3355 = vcombine.low %v3021, %v3231
        %v3357 = vunpack.c.l.s4 1983009808
        %v3358 = vunpack.c.0.s8 %v3357
        %v3359 = vlaneseq
        %v3360 = vshrl.u32 %v3359, 7
        %v3361 = vsub.s32 %v3358, %v3360
        %v3362 = vrot.slane %v3355, %v3361
        %v3363 = vcombine.low %v3126, %v3336
        %v3365 = vunpack.c.l.s4 1983009808
        %v3366 = vunpack.c.0.s8 %v3365
        %v3367 = vlaneseq
        %v3368 = vshrl.u32 %v3367, 7
        %v3369 = vsub.s32 %v3366, %v3368
        %v3370 = vrot.slane %v3363, %v3369
        %v3371 = vcombine.low %v3346, %v3354
        %v3373 = vunpack.c.l.s4 1934713408
        %v3374 = vunpack.c.0.s8 %v3373
        %v3375 = vlaneseq
        %v3376 = vshrl.u32 %v3375, 7
        %v3377 = vsub.s32 %v3374, %v3376
        %v3378 = vrot.slane %v3371, %v3377
        %v3379 = vcombine.low %v3362, %v3370
        %v3381 = vunpack.c.l.s4 1934713408
        %v3382 = vunpack.c.0.s8 %v3381
        %v3383 = vlaneseq
        %v3384 = vshrl.u32 %v3383, 7
        %v3385 = vsub.s32 %v3382, %v3384
        %v3386 = vrot.slane %v3379, %v3385
        %v3387 = vcombine.low %v3378, %v3386
        %v3388 = vcombine.high %v3378, %v3386
        %3390 = vrot.lane.b32.xlu0 %v3388, 32
        %v3391 = vpop.permute.xlu0 %3390
        %v3393 = vsel %vm293, %v3387, %v3391
        %v3394 = vld [vmem:[%s3] sm:$0xff]
        %v3395 = vld [vmem:[%s3 + $0x8] sm:$0xff]
        %v3396 = vld [vmem:[%s3 + $0x10] sm:$0xff]
        %v3397 = vld [vmem:[%s3 + $0x18] sm:$0xff]
        %v3398 = vld [vmem:[%s3 + $0x20] sm:$0xff]
        %v3399 = vld [vmem:[%s3 + $0x28] sm:$0xff]
        %v3400 = vld [vmem:[%s3 + $0x30] sm:$0xff]
        %v3401 = vld [vmem:[%s3 + $0x38] sm:$0xff]
        %v3402 = vlaneseq
        %v3403 = vshrl.u32 %v3402, 7
        %v3404 = vsub.s32 0, %v3403
        %v3405 = vrot.slane %v273, %v3404
        %vm3406 = vcmask 523264
        %v3408 = vsel %vm3406, %v3393, 0
        %3410 = vmatprep.subr.mxu0 0.0
        %3411 = vmatpush1.msra.mxu0 %v3394
        %3412 = vmatprep.subr.mxu0 0.0
        %3413 = vmatpush1.msra.mxu0 %v3395
        %3414 = vmatprep.subr.mxu0 0.0
        %3415 = vmatpush1.msra.mxu0 %v3396
        %3416 = vmatprep.subr.mxu0 0.0
        %3417 = vmatpush1.msra.mxu0 %v3397
        %3418 = vmatprep.subr.mxu0 0.0
        %3419 = vmatpush1.msra.mxu0 %v3398
        %3420 = vmatprep.subr.mxu0 0.0
        %3421 = vmatpush1.msra.mxu0 %v3399
        %3422 = vmatprep.subr.mxu0 0.0
        %3423 = vmatpush1.msra.mxu0 %v3400
        %3424 = vmatprep.subr.mxu0 0.0
        %3425 = vmatpush1.msra.mxu0 %v3401
        %3426 = vmatprep.subr.mxu0 0.0
        %3427 = vmatpush1.msra.mxu0 0.0
        %3428 = vmatprep.subr.mxu0 0.0
        %3429 = vmatpush1.msra.mxu0 0.0
        %3430 = vmatprep.subr.mxu0 0.0
        %3431 = vmatpush1.msra.mxu0 0.0
        %3432 = vmatprep.subr.mxu0 0.0
        %3433 = vmatpush1.msra.mxu0 0.0
        %3434 = vmatprep.subr.mxu0 0.0
        %3435 = vmatpush1.msra.mxu0 0.0
        %3436 = vmatprep.subr.mxu0 0.0
        %3437 = vmatpush1.msra.mxu0 0.0
        %3438 = vmatprep.subr.mxu0 0.0
        %3439 = vmatpush1.msra.mxu0 0.0
        %3440 = vmatprep.subr.mxu0 0.0
        %3441 = vmatpush1.msra.mxu0 0.0
        %3442 = vmatprep.subr.mxu0 0.0
        %3443 = vmatpush1.msra.mxu0 0.0
        %3444 = vmatprep.subr.mxu0 0.0
        %3445 = vmatpush1.msra.mxu0 0.0
        %3446 = vmatprep.subr.mxu0 0.0
        %3447 = vmatpush1.msra.mxu0 0.0
        %3448 = vmatprep.subr.mxu0 0.0
        %3449 = vmatpush1.msra.mxu0 0.0
        %3450 = vmatprep.subr.mxu0 0.0
        %3451 = vmatpush1.msra.mxu0 0.0
        %3452 = vmatprep.subr.mxu0 0.0
        %3453 = vmatpush1.msra.mxu0 0.0
        %3454 = vmatprep.subr.mxu0 0.0
        %3455 = vmatpush1.msra.mxu0 0.0
        %3456 = vmatprep.subr.mxu0 0.0
        %3457 = vmatpush1.msra.mxu0 0.0
        %3458 = vmatprep.subr.mxu0 0.0
        %3459 = vmatpush1.msra.mxu0 0.0
        %3460 = vmatprep.subr.mxu0 0.0
        %3461 = vmatpush1.msra.mxu0 0.0
        %3462 = vmatprep.subr.mxu0 0.0
        %3463 = vmatpush1.msra.mxu0 0.0
        %3464 = vmatprep.subr.mxu0 0.0
        %3465 = vmatpush1.msra.mxu0 0.0
        %3466 = vmatprep.subr.mxu0 0.0
        %3467 = vmatpush1.msra.mxu0 0.0
        %3468 = vmatprep.subr.mxu0 0.0
        %3469 = vmatpush1.msra.mxu0 0.0
        %3470 = vmatprep.subr.mxu0 0.0
        %3471 = vmatpush1.msra.mxu0 0.0
        %3472 = vmatprep.subr.mxu0 0.0
        %3473 = vmatpush1.msra.mxu0 0.0
        %3474 = vmatprep.mubr.f32.mxu0 0.0
        %3475 = vmatmul.mubr.f32.gmra.mrb[0].mxu0 %v3408
        %v3476 = vpop.f32.mrb[0].mxu0
        %v3477 = vadd.f32 %v3405, %v3476
        %v3478 = vpop.f32.mrb[0].mxu0
        %3479 = vdwg.mxu0
        %vm3480 = vcmp.eq.s32.totalorder %v440, 0
        %v3482 = vcombine.high %v3477, %v3477
        %v3484 = vunpack.c.l.s4 1966171168
        %v3485 = vunpack.c.0.s8 %v3484
        %v3486 = vlaneseq
        %v3487 = vshrl.u32 %v3486, 7
        %v3488 = vsub.s32 %v3485, %v3487
        %v3489 = vrot.slane %v3477, %v3488
        %v3491 = vunpack.c.l.s4 1966171168
        %v3492 = vunpack.c.0.s8 %v3491
        %v3493 = vlaneseq
        %v3494 = vshrl.u32 %v3493, 7
        %v3495 = vsub.s32 %v3492, %v3494
        %v3496 = vrot.slane %v3482, %v3495
        %v3497 = vcombine.high %v3489, %v3489
        %v3498 = vcombine.high %v3496, %v3496
        %v3500 = vunpack.c.l.s4 1966171168
        %v3501 = vunpack.c.0.s8 %v3500
        %v3502 = vlaneseq
        %v3503 = vshrl.u32 %v3502, 7
        %v3504 = vsub.s32 %v3501, %v3503
        %v3505 = vrot.slane %v3489, %v3504
        %v3507 = vunpack.c.l.s4 1966171168
        %v3508 = vunpack.c.0.s8 %v3507
        %v3509 = vlaneseq
        %v3510 = vshrl.u32 %v3509, 7
        %v3511 = vsub.s32 %v3508, %v3510
        %v3512 = vrot.slane %v3496, %v3511
        %v3514 = vunpack.c.l.s4 1966171168
        %v3515 = vunpack.c.0.s8 %v3514
        %v3516 = vlaneseq
        %v3517 = vshrl.u32 %v3516, 7
        %v3518 = vsub.s32 %v3515, %v3517
        %v3519 = vrot.slane %v3497, %v3518
        %v3521 = vunpack.c.l.s4 1966171168
        %v3522 = vunpack.c.0.s8 %v3521
        %v3523 = vlaneseq
        %v3524 = vshrl.u32 %v3523, 7
        %v3525 = vsub.s32 %v3522, %v3524
        %v3526 = vrot.slane %v3498, %v3525
        %v3527 = vcombine.high %v3505, %v3505
        %v3528 = vcombine.high %v3512, %v3512
        %v3529 = vcombine.high %v3519, %v3519
        %v3530 = vcombine.high %v3526, %v3526
        %v3531 = vsel %vm3480, 1, 0
        %vm3532 = vcmp.eq.s32.totalorder %v3531, 1
        %v3533 = vlaneseq
        %v3534 = vshrl.u32 %v3533, 7
        %v3535 = vsub.s32 0, %v3534
        %v3536 = vrot.slane %v3505, %v3535
        %v3537 = vlaneseq
        %v3538 = vshrl.u32 %v3537, 7
        %v3539 = vsub.s32 0, %v3538
        %v3540 = vrot.slane %v3519, %v3539
        %v3541 = vlaneseq
        %v3542 = vshrl.u32 %v3541, 7
        %v3543 = vsub.s32 0, %v3542
        %v3544 = vrot.slane %v3527, %v3543
        %v3545 = vlaneseq
        %v3546 = vshrl.u32 %v3545, 7
        %v3547 = vsub.s32 0, %v3546
        %v3548 = vrot.slane %v3529, %v3547
        %v3549 = vlaneseq
        %v3550 = vshrl.u32 %v3549, 7
        %v3551 = vsub.s32 0, %v3550
        %v3552 = vrot.slane %v3512, %v3551
        %v3553 = vlaneseq
        %v3554 = vshrl.u32 %v3553, 7
        %v3555 = vsub.s32 0, %v3554
        %v3556 = vrot.slane %v3526, %v3555
        %v3557 = vlaneseq
        %v3558 = vshrl.u32 %v3557, 7
        %v3559 = vsub.s32 0, %v3558
        %v3560 = vrot.slane %v3528, %v3559
        %v3561 = vlaneseq
        %v3562 = vshrl.u32 %v3561, 7
        %v3563 = vsub.s32 0, %v3562
        %v3564 = vrot.slane %v3530, %v3563
        %v3573 = vsel %vm3532, %v3536, 0.0
        %v3574 = vsel %vm3532, %v3540, 0.0
        %v3575 = vsel %vm3532, %v3544, 0.0
        %v3576 = vsel %vm3532, %v3548, 0.0
        %v3577 = vsel %vm3532, %v3552, 0.0
        %v3578 = vsel %vm3532, %v3556, 0.0
        %v3579 = vsel %vm3532, %v3560, 0.0
        %v3580 = vsel %vm3532, %v3564, 0.0
        %vm3581 = vcmask 1041408
        %v3582 = vsel %vm3581, %v2601, 0.0
        %v3583 = vsel %vm3581, %v2706, 0.0
        %v3584 = vsel %vm3581, %v2811, 0.0
        %v3585 = vsel %vm3581, %v2916, 0.0
        %v3586 = vsel %vm3581, %v3021, 0.0
        %v3587 = vsel %vm3581, %v3126, 0.0
        %v3588 = vsel %vm3581, %v3231, 0.0
        %v3589 = vsel %vm3581, %v3336, 0.0
        %3598 = vrot.lane.b32.xlu0 %v2484, 2
        %v3599 = vpop.permute.xlu0 %3598
        %3600 = vrot.lane.b32.xlu0 %v2486, 2
        %v3601 = vpop.permute.xlu0 %3600
        %3602 = vrot.lane.b32.xlu0 %v2488, 2
        %v3603 = vpop.permute.xlu0 %3602
        %3604 = vrot.lane.b32.xlu0 %v2490, 2
        %v3605 = vpop.permute.xlu0 %3604
        %3606 = vrot.lane.b32.xlu0 %v2492, 2
        %v3607 = vpop.permute.xlu0 %3606
        %3608 = vrot.lane.b32.xlu0 %v2494, 2
        %v3609 = vpop.permute.xlu0 %3608
        %3610 = vrot.lane.b32.xlu0 %v2496, 2
        %v3611 = vpop.permute.xlu0 %3610
        %3612 = vrot.lane.b32.xlu0 %v2498, 2
        %v3613 = vpop.permute.xlu0 %3612
        %3630 = vrot.lane.b32.xlu0 %v3573, 4
        %v3631 = vpop.permute.xlu0 %3630
        %3632 = vrot.lane.b32.xlu0 %v3574, 4
        %v3633 = vpop.permute.xlu0 %3632
        %3634 = vrot.lane.b32.xlu0 %v3575, 4
        %v3635 = vpop.permute.xlu0 %3634
        %3636 = vrot.lane.b32.xlu0 %v3576, 4
        %v3637 = vpop.permute.xlu0 %3636
        %3638 = vrot.lane.b32.xlu0 %v3577, 4
        %v3639 = vpop.permute.xlu0 %3638
        %3640 = vrot.lane.b32.xlu0 %v3578, 4
        %v3641 = vpop.permute.xlu0 %3640
        %3642 = vrot.lane.b32.xlu0 %v3579, 4
        %v3643 = vpop.permute.xlu0 %3642
        %3644 = vrot.lane.b32.xlu0 %v3580, 4
        %v3645 = vpop.permute.xlu0 %3644
        %3662 = vrot.lane.b32.xlu0 %v3582, 8
        %v3663 = vpop.permute.xlu0 %3662
        %3664 = vrot.lane.b32.xlu0 %v3583, 8
        %v3665 = vpop.permute.xlu0 %3664
        %3666 = vrot.lane.b32.xlu0 %v3584, 8
        %v3667 = vpop.permute.xlu0 %3666
        %3668 = vrot.lane.b32.xlu0 %v3585, 8
        %v3669 = vpop.permute.xlu0 %3668
        %3670 = vrot.lane.b32.xlu0 %v3586, 8
        %v3671 = vpop.permute.xlu0 %3670
        %3672 = vrot.lane.b32.xlu0 %v3587, 8
        %v3673 = vpop.permute.xlu0 %3672
        %3674 = vrot.lane.b32.xlu0 %v3588, 8
        %v3675 = vpop.permute.xlu0 %3674
        %3676 = vrot.lane.b32.xlu0 %v3589, 8
        %v3677 = vpop.permute.xlu0 %3676
        %v3686 = vsel %vm441, %v387, %v3599
        %v3687 = vsel %vm441, %v393, %v3601
        %v3688 = vsel %vm441, %v399, %v3603
        %v3689 = vsel %vm441, %v405, %v3605
        %v3690 = vsel %vm441, %v411, %v3607
        %v3691 = vsel %vm441, %v417, %v3609
        %v3692 = vsel %vm441, %v423, %v3611
        %v3693 = vsel %vm441, %v429, %v3613
        %vm3694 = vcmask 31744
        %v3695 = vsel %vm3694, %v3686, %v3631
        %v3696 = vsel %vm3694, %v3687, %v3633
        %v3697 = vsel %vm3694, %v3688, %v3635
        %v3698 = vsel %vm3694, %v3689, %v3637
        %v3699 = vsel %vm3694, %v3690, %v3639
        %v3700 = vsel %vm3694, %v3691, %v3641
        %v3701 = vsel %vm3694, %v3692, %v3643
        %v3702 = vsel %vm3694, %v3693, %v3645
        %vm3703 = vcmask 48128
        %v3704 = vsel %vm3703, %v3695, 0.0
        %v3705 = vsel %vm3703, %v3696, 0.0
        %v3706 = vsel %vm3703, %v3697, 0.0
        %v3707 = vsel %vm3703, %v3698, 0.0
        %v3708 = vsel %vm3703, %v3699, 0.0
        %v3709 = vsel %vm3703, %v3700, 0.0
        %v3710 = vsel %vm3703, %v3701, 0.0
        %v3711 = vsel %vm3703, %v3702, 0.0
        %v3712 = vsel %vm650, %v3704, %v3663
        %v3713 = vsel %vm650, %v3705, %v3665
        %v3714 = vsel %vm650, %v3706, %v3667
        %v3715 = vsel %vm650, %v3707, %v3669
        %v3716 = vsel %vm650, %v3708, %v3671
        %v3717 = vsel %vm650, %v3709, %v3673
        %v3718 = vsel %vm650, %v3710, %v3675
        %v3719 = vsel %vm650, %v3711, %v3677
        %vm3720 = vcmask 326656
        %v3721 = vsel %vm3720, %v3712, 0.0
        %v3722 = vsel %vm3720, %v3713, 0.0
        %v3723 = vsel %vm3720, %v3714, 0.0
        %v3724 = vsel %vm3720, %v3715, 0.0
        %v3725 = vsel %vm3720, %v3716, 0.0
        %v3726 = vsel %vm3720, %v3717, 0.0
        %v3727 = vsel %vm3720, %v3718, 0.0
        %v3728 = vsel %vm3720, %v3719, 0.0
        %3729 = vst [vmem:[%s260] sm:$0xff] %v3721
        %3730 = vst [vmem:[%s260 + $0x8] sm:$0xff] %v3722
        %3731 = vst [vmem:[%s260 + $0x10] sm:$0xff] %v3723
        %3732 = vst [vmem:[%s260 + $0x18] sm:$0xff] %v3724
        %3733 = vst [vmem:[%s260 + $0x20] sm:$0xff] %v3725
        %3734 = vst [vmem:[%s260 + $0x28] sm:$0xff] %v3726
        %3735 = vst [vmem:[%s260 + $0x30] sm:$0xff] %v3727
        %3736 = vst [vmem:[%s260 + $0x38] sm:$0xff] %v3728
        %s3737 = smul.u32 8, %s20
        %p3738 = scmp.lt.s32.totalorder %s3737, 15
        %s3739 = scalar_select %p3738, %s3737, 15
        %s3740 = smul.addr %s3739, 8
        %s3741 = scalar_lea.vmem %s5, %s3740
        // Predicated region
        $region49: #{milnet_forward.1} parent=39 // pred_check
          %p3742 = pneg %p148
        $region50: #{milnet_forward.1} parent=39 // pred_check_branch
          %3744 = sbr.rel (%p3742) target = $region52
        $region51: #{milnet_forward.1} parent=39 // pred_region
          %s3745 = smul.u32 8, %s20
        $region52: #{milnet_forward.1} parent=39 // pred_fallthru
          _
      $region40: #{milnet_forward.1} parent=5 // pred_fallthru
        _
      %p3746 = scmp.le.s32.totalorder 2, %s15
      // Predicated region
      $region53: #{milnet_forward.1} parent=5 // pred_check
        %p3747 = pneg %p3746
      $region54: #{milnet_forward.1} parent=5 // pred_check_branch
        %3749 = sbr.rel (%p3747) target = $region56
      $region55: #{milnet_forward.1} parent=5 // pred_region
        %s3750 = ssub.s32 %s15, 2
        // Predicated region
        $region57: #{milnet_forward.1} parent=55 // pred_check
          %p3751 = pneg %p154
        $region58: #{milnet_forward.1} parent=55 // pred_check_branch
          %3753 = sbr.rel (%p3751) target = $region60
        $region59: #{milnet_forward.1} parent=55 // pred_region
          %s3754 = smul.u32 8, %s21
          %p3755 = scmp.lt.s32.totalorder %s3754, 15
          %s3756 = scalar_select %p3755, %s3754, 15
          %s3757 = smul.addr %s3756, 8
          %s3758 = scalar_lea.vmem %s5, %s3757
        $region60: #{milnet_forward.1} parent=55 // pred_fallthru
          _
      $region56: #{milnet_forward.1} parent=5 // pred_fallthru
        _
    $region6: #{milnet_forward.1} parent=1 // loop_footer
      %s19 = sadd.s32 1, %s15
    $region7: #{milnet_forward.1} parent=1 // loop_footer_branch
      %14 = sbr.rel target = $region3
    $region8: #{milnet_forward.1} parent=1 // loop_exit
      _
    %3759 = vsyncpa [#allocation3], 1
    %s3760 = scalar_lea.sflag [#allocation3], 1
    %3761 = vsyncpa %s3760, 1
    %3762 = vsyncpa [#allocation5], 1

</llo_original>
